<compile_context>
chip_gen: v5e
topology: v5e:2x2
jax: 0.10.0
libtpu: 0.0.40
codegen_flags: <defaults>
</compile_context>

<pallas_src>
import jax
import jax.numpy as jnp
from jax.experimental import pallas as pl
from jax.experimental.pallas import tpu as pltpu

# ----------------------------- problem sizes -------------------------------
D_MODEL = 32            # dim_in == d_model
NHEAD = 4
HEAD_DIM = D_MODEL // NHEAD
DIM_FF = 80
TOP_K = 8
DIM_OUT = 4
LN_EPS = 1e-5
ATTN_SCALE = 1.0 / float(HEAD_DIM) ** 0.5
MASK_NEG = -1e30        # diagonal always unmasked -> identical softmax to -inf

NUM_BATCHES = 2         # independent minibatches == grid steps ("parallel")
GRAPHS_PER_TILE = 4     # graphs packed per minibatch tile
NODES_PER_GRAPH = 32
N_TILE = GRAPHS_PER_TILE * NODES_PER_GRAPH   # 128 nodes per tile
G_PAD = 8               # pooled rows padded to a full sublane group
OUT_PAD = 128           # lane-dense output width (DIM_OUT padded to 128)

# static lane offsets inside the packed (32, 368) weight slab
_OFF_WQKV = 0
_OFF_WO = _OFF_WQKV + 3 * D_MODEL      # 96
_OFF_FFN_W1 = _OFF_WO + D_MODEL        # 128
_OFF_MLP_W1 = _OFF_FFN_W1 + DIM_FF     # 208
_OFF_MLP_W2 = _OFF_MLP_W1 + D_MODEL    # 240
_OFF_END = _OFF_MLP_W2 + OUT_PAD       # 368


def _layernorm(x, w, b):
    mu = jnp.mean(x, axis=-1, keepdims=True)
    xc = x - mu
    var = jnp.mean(xc * xc, axis=-1, keepdims=True)
    return xc * jax.lax.rsqrt(var + LN_EPS) * w + b


# ----------------- fused kernel: mask + encoder + pool + MLP ---------------
def san_head_kernel(x_ref, topk_ref, gid_ref, wslab_ref, ffnw2_ref, vec_ref,
                    out_ref):
    x = x_ref[...]                                        # (N, d) f32
    n = x.shape[0]

    # ---- additive sparse-attention mask from top-k indices (in-kernel) ----
    row = jax.lax.broadcasted_iota(jnp.int32, (n, n), 0)
    col = jax.lax.broadcasted_iota(jnp.int32, (n, n), 1)
    allow = row == col                                    # diagonal attends
    topk = topk_ref[...]                                  # (N, K) int32
    for k in range(TOP_K):                                # K cheap VPU compares
        allow = jnp.logical_or(allow, col == topk[:, k:k + 1])
    mask = jnp.where(allow, 0.0, MASK_NEG).astype(jnp.float32)

    # ---- unpack bias / LN slab (one DMA'd (10,128) array) ----
    vec = vec_ref[...]
    b_qkv = vec[0:1, 0:3 * D_MODEL]
    b_o = vec[1:2, 0:D_MODEL]
    ln1w, ln1b = vec[2:3, 0:D_MODEL], vec[3:4, 0:D_MODEL]
    ln2w, ln2b = vec[4:5, 0:D_MODEL], vec[5:6, 0:D_MODEL]
    ffn_b1 = vec[6:7, 0:DIM_FF]
    ffn_b2 = vec[7:8, 0:D_MODEL]
    mlp_b1 = vec[8:9, 0:D_MODEL]
    mlp_b2 = vec[9:10, :]                                 # (1, 128) padded

    # ---- fused QKV projection: one lane-dense MXU matmul ----
    qkv = jnp.dot(x, wslab_ref[:, _OFF_WQKV:_OFF_WO],
                  preferred_element_type=jnp.float32) + b_qkv   # (N, 96)

    # ---- per-head attention via static lane slices ----
    head_outs = []
    for h in range(NHEAD):
        q_h = qkv[:, h * HEAD_DIM:(h + 1) * HEAD_DIM]
        k_h = qkv[:, D_MODEL + h * HEAD_DIM:D_MODEL + (h + 1) * HEAD_DIM]
        v_h = qkv[:, 2 * D_MODEL + h * HEAD_DIM:2 * D_MODEL + (h + 1) * HEAD_DIM]
        s = jax.lax.dot_general(q_h, k_h, (((1,), (1,)), ((), ())),
                                preferred_element_type=jnp.float32) * ATTN_SCALE
        s = s + mask                                       # (N, N)
        s = s - jnp.max(s, axis=-1, keepdims=True)
        p = jnp.exp(s)
        p = p / jnp.sum(p, axis=-1, keepdims=True)         # exact divide (parity)
        head_outs.append(jnp.dot(p, v_h, preferred_element_type=jnp.float32))
    o = jnp.concatenate(head_outs, axis=-1)                # (N, d) lane-concat

    # out-projection: one contraction-32 matmul
    attn = jnp.dot(o, wslab_ref[:, _OFF_WO:_OFF_FFN_W1],
                   preferred_element_type=jnp.float32) + b_o

    # ---- residual + post-LN encoder layer (norm_first=False) ----
    h1 = _layernorm(x + attn, ln1w, ln1b)
    f = jnp.dot(h1, wslab_ref[:, _OFF_FFN_W1:_OFF_MLP_W1],
                preferred_element_type=jnp.float32) + ffn_b1
    f = jnp.maximum(f, 0.0)                                # relu
    f = jnp.dot(f, ffnw2_ref[...], preferred_element_type=jnp.float32) + ffn_b2
    h2 = _layernorm(h1 + f, ln2w, ln2b)                    # (N, d)

    # ---- mean pooling per graph (one-hot pool matrix built in-kernel) ----
    gid = gid_ref[...]                                     # (1, N) int32
    gids = jax.lax.broadcasted_iota(jnp.int32, (G_PAD, n), 0)
    onehot = (gid == gids).astype(jnp.float32)             # (G_PAD, N)
    counts = jnp.maximum(jnp.sum(onehot, axis=-1, keepdims=True), 1.0)
    pooled = jnp.dot(onehot, h2, preferred_element_type=jnp.float32) / counts

    # ---- post-pooling MLP (L=2: Linear+ReLU, Linear), lane-dense output ----
    m = jnp.dot(pooled, wslab_ref[:, _OFF_MLP_W1:_OFF_MLP_W2],
                preferred_element_type=jnp.float32) + mlp_b1
    m = jnp.maximum(m, 0.0)
    out_ref[...] = jnp.dot(m, wslab_ref[:, _OFF_MLP_W2:_OFF_END],
                           preferred_element_type=jnp.float32) + mlp_b2


# ------------------------------- glue / wrapper -----------------------------
def init_params(key):
    ks = jax.random.split(key, 8)
    s = 0.1
    return {
        "wqkv": jax.random.normal(ks[0], (D_MODEL, 3 * D_MODEL), jnp.float32) * s,
        "bqkv": jax.random.normal(ks[1], (1, 3 * D_MODEL), jnp.float32) * 0.01,
        "wo": jax.random.normal(ks[2], (D_MODEL, D_MODEL), jnp.float32) * s,
        "bo": jax.random.normal(ks[3], (1, D_MODEL), jnp.float32) * 0.01,
        "ln1w": jnp.ones((1, D_MODEL), jnp.float32),
        "ln1b": jnp.zeros((1, D_MODEL), jnp.float32),
        "ln2w": jnp.ones((1, D_MODEL), jnp.float32),
        "ln2b": jnp.zeros((1, D_MODEL), jnp.float32),
        "ffn_w1": jax.random.normal(ks[4], (D_MODEL, DIM_FF), jnp.float32) * s,
        "ffn_b1": jnp.zeros((1, DIM_FF), jnp.float32),
        "ffn_w2": jax.random.normal(ks[5], (DIM_FF, D_MODEL), jnp.float32) * s,
        "ffn_b2": jnp.zeros((1, D_MODEL), jnp.float32),
        "mlp_w1": jax.random.normal(ks[6], (D_MODEL, D_MODEL), jnp.float32) * s,
        "mlp_b1": jnp.zeros((1, D_MODEL), jnp.float32),
        "mlp_w2": jax.random.normal(ks[7], (D_MODEL, DIM_OUT), jnp.float32) * s,
        "mlp_b2": jnp.zeros((1, DIM_OUT), jnp.float32),
    }


def _pack_params(p):
    """Consolidate 23 small params into 3 contiguous slabs (fewer DMAs)."""
    mlp_w2_pad = jnp.zeros((D_MODEL, OUT_PAD), jnp.float32).at[:, :DIM_OUT].set(p["mlp_w2"])
    wslab = jnp.concatenate(
        [p["wqkv"], p["wo"], p["ffn_w1"], p["mlp_w1"], mlp_w2_pad], axis=1)  # (32, 368)

    def row(v):
        r = jnp.zeros((1, OUT_PAD), jnp.float32)
        return r.at[:, :v.shape[1]].set(v)

    vec_slab = jnp.concatenate([
        row(p["bqkv"]), row(p["bo"]),
        row(p["ln1w"]), row(p["ln1b"]), row(p["ln2w"]), row(p["ln2b"]),
        row(p["ffn_b1"]), row(p["ffn_b2"]),
        row(p["mlp_b1"]), row(p["mlp_b2"]),
    ], axis=0)                                                               # (10, 128)
    return wslab, p["ffn_w2"], vec_slab


def san_graph_head_forward(x, graph_ids, y, params):
    """x: (B, N, d) node features for B independent minibatches;
       graph_ids: (B, N) graph index of each node (0..GRAPHS_PER_TILE-1);
       y: (B*G,) labels."""
    B, n, d = x.shape

    # build_topk_indices (no-grad in the reference): tiny per-batch (N,N)
    # matmul + top_k left to XLA; fuses with surrounding ops.
    sim = jnp.einsum('bnd,bmd->bnm', x, x)
    sim = jnp.where(jnp.eye(n, dtype=bool)[None], -1e10, sim)
    _, topk_idx = jax.lax.top_k(sim, TOP_K)
    topk_idx = topk_idx.astype(jnp.int32)                                    # (B, N, K)

    wslab, ffn_w2, vec_slab = _pack_params(params)
    gid = graph_ids.reshape(B, 1, n).astype(jnp.int32)

    out_padded = pl.pallas_call(
        san_head_kernel,
        out_shape=jax.ShapeDtypeStruct((B, G_PAD, OUT_PAD), jnp.float32),
        grid=(B,),
        in_specs=[
            pl.BlockSpec((None, n, d), lambda b: (b, 0, 0)),
            pl.BlockSpec((None, n, TOP_K), lambda b: (b, 0, 0)),
            pl.BlockSpec((None, 1, n), lambda b: (b, 0, 0)),
            pl.BlockSpec(wslab.shape, lambda b: (0, 0)),
            pl.BlockSpec(ffn_w2.shape, lambda b: (0, 0)),
            pl.BlockSpec(vec_slab.shape, lambda b: (0, 0)),
        ],
        out_specs=pl.BlockSpec((None, G_PAD, OUT_PAD), lambda b: (b, 0, 0)),
        compiler_params=pltpu.CompilerParams(dimension_semantics=("parallel",)),
    )(x, topk_idx, gid, wslab, ffn_w2, vec_slab)

    # slice the real (per-graph) predictions out of the lane-dense output
    graph_feature = out_padded[:, :GRAPHS_PER_TILE, :DIM_OUT].reshape(
        B * GRAPHS_PER_TILE, DIM_OUT)

    # _apply_index: (pred, label)
    return graph_feature, y


# TODO(synk): dropout layers are identity here (eval-mode forward); training-time
# stochastic dropout has no deterministic PyTorch-equivalent to reproduce.

if __name__ == "__main__":
    key = jax.random.PRNGKey(0)
    kx, kp = jax.random.split(key)

    x = jax.random.normal(kx, (NUM_BATCHES, N_TILE, D_MODEL), jnp.float32)
    graph_ids = jnp.tile(
        jnp.repeat(jnp.arange(GRAPHS_PER_TILE, dtype=jnp.int32),
                   NODES_PER_GRAPH)[None, :],
        (NUM_BATCHES, 1))                                     # (B, N)
    y = (jnp.arange(NUM_BATCHES * GRAPHS_PER_TILE, dtype=jnp.int32) % 2)

    params = init_params(kp)

    pred, label = jax.jit(san_graph_head_forward)(x, graph_ids, y, params)
    jax.block_until_ready(pred)
    jax.block_until_ready(label)

    assert pred.shape == (NUM_BATCHES * GRAPHS_PER_TILE, DIM_OUT)
    assert label.shape == (NUM_BATCHES * GRAPHS_PER_TILE,)
    assert bool(jnp.all(jnp.isfinite(pred)))
    print("KERNEL_OK")
</pallas_src>

<mosaic_0001>
module attributes {stable_mosaic.version = 11 : i64} {
  func.func @san_head_kernel(%arg0: i32, %arg1: memref<1x128x32xf32, #tpu.memory_space<vmem>>, %arg2: memref<1x128x8xi32, #tpu.memory_space<vmem>>, %arg3: memref<1x1x128xi32, #tpu.memory_space<vmem>>, %arg4: memref<32x368xf32, #tpu.memory_space<vmem>>, %arg5: memref<80x32xf32, #tpu.memory_space<vmem>>, %arg6: memref<10x128xf32, #tpu.memory_space<vmem>>, %arg7: memref<1x8x128xf32, #tpu.memory_space<vmem>>) attributes {dimension_semantics = [#tpu.dimension_semantics<parallel>], iteration_bounds = array<i64: 2>, scalar_prefetch = 0 : i64, scratch_operands = 0 : i64, tpu.core_type = #tpu.core_type<tc>, window_params = [{transform_indices = @transform_0, window_bounds = array<i64: 1, 128, 32>}, {transform_indices = @transform_1, window_bounds = array<i64: 1, 128, 8>}, {transform_indices = @transform_2, window_bounds = array<i64: 1, 1, 128>}, {pipeline_mode = #tpu.pipeline_mode<synchronous>, transform_indices = @transform_3, window_bounds = array<i64: 32, 368>}, {pipeline_mode = #tpu.pipeline_mode<synchronous>, transform_indices = @transform_4, window_bounds = array<i64: 80, 32>}, {pipeline_mode = #tpu.pipeline_mode<synchronous>, transform_indices = @transform_5, window_bounds = array<i64: 10, 128>}, {transform_indices = @transform_6, window_bounds = array<i64: 1, 8, 128>}]} {
    %c0 = arith.constant 0 : index
    %c0_0 = arith.constant 0 : index
    %c0_1 = arith.constant 0 : index
    %0 = vector.load %arg1[%c0, %c0_0, %c0_1] : memref<1x128x32xf32, #tpu.memory_space<vmem>>, vector<1x128x32xf32>
    %1 = vector.shape_cast %0 : vector<1x128x32xf32> to vector<128x32xf32>
    %2 = tpu.iota {dimensions = array<i32: 0>} : vector<128x128xi32>
    %3 = tpu.iota {dimensions = array<i32: 1>} : vector<128x128xi32>
    %4 = arith.cmpi eq, %2, %3 : vector<128x128xi32>
    %c0_2 = arith.constant 0 : index
    %c0_3 = arith.constant 0 : index
    %c0_4 = arith.constant 0 : index
    %5 = vector.load %arg2[%c0_2, %c0_3, %c0_4] : memref<1x128x8xi32, #tpu.memory_space<vmem>>, vector<1x128x8xi32>
    %6 = vector.shape_cast %5 : vector<1x128x8xi32> to vector<128x8xi32>
    %7 = vector.extract_strided_slice %6 {offsets = [0, 0], sizes = [128, 1], strides = [1, 1]} : vector<128x8xi32> to vector<128x1xi32>
    %8 = vector.broadcast %7 : vector<128x1xi32> to vector<128x128xi32>
    %9 = arith.cmpi eq, %3, %8 : vector<128x128xi32>
    %10 = arith.ori %4, %9 : vector<128x128xi1>
    %11 = vector.extract_strided_slice %6 {offsets = [0, 1], sizes = [128, 1], strides = [1, 1]} : vector<128x8xi32> to vector<128x1xi32>
    %12 = vector.broadcast %11 : vector<128x1xi32> to vector<128x128xi32>
    %13 = arith.cmpi eq, %3, %12 : vector<128x128xi32>
    %14 = arith.ori %10, %13 : vector<128x128xi1>
    %15 = vector.extract_strided_slice %6 {offsets = [0, 2], sizes = [128, 1], strides = [1, 1]} : vector<128x8xi32> to vector<128x1xi32>
    %16 = vector.broadcast %15 : vector<128x1xi32> to vector<128x128xi32>
    %17 = arith.cmpi eq, %3, %16 : vector<128x128xi32>
    %18 = arith.ori %14, %17 : vector<128x128xi1>
    %19 = vector.extract_strided_slice %6 {offsets = [0, 3], sizes = [128, 1], strides = [1, 1]} : vector<128x8xi32> to vector<128x1xi32>
    %20 = vector.broadcast %19 : vector<128x1xi32> to vector<128x128xi32>
    %21 = arith.cmpi eq, %3, %20 : vector<128x128xi32>
    %22 = arith.ori %18, %21 : vector<128x128xi1>
    %23 = vector.extract_strided_slice %6 {offsets = [0, 4], sizes = [128, 1], strides = [1, 1]} : vector<128x8xi32> to vector<128x1xi32>
    %24 = vector.broadcast %23 : vector<128x1xi32> to vector<128x128xi32>
    %25 = arith.cmpi eq, %3, %24 : vector<128x128xi32>
    %26 = arith.ori %22, %25 : vector<128x128xi1>
    %27 = vector.extract_strided_slice %6 {offsets = [0, 5], sizes = [128, 1], strides = [1, 1]} : vector<128x8xi32> to vector<128x1xi32>
    %28 = vector.broadcast %27 : vector<128x1xi32> to vector<128x128xi32>
    %29 = arith.cmpi eq, %3, %28 : vector<128x128xi32>
    %30 = arith.ori %26, %29 : vector<128x128xi1>
    %31 = vector.extract_strided_slice %6 {offsets = [0, 6], sizes = [128, 1], strides = [1, 1]} : vector<128x8xi32> to vector<128x1xi32>
    %32 = vector.broadcast %31 : vector<128x1xi32> to vector<128x128xi32>
    %33 = arith.cmpi eq, %3, %32 : vector<128x128xi32>
    %34 = arith.ori %30, %33 : vector<128x128xi1>
    %35 = vector.extract_strided_slice %6 {offsets = [0, 7], sizes = [128, 1], strides = [1, 1]} : vector<128x8xi32> to vector<128x1xi32>
    %36 = vector.broadcast %35 : vector<128x1xi32> to vector<128x128xi32>
    %37 = arith.cmpi eq, %3, %36 : vector<128x128xi32>
    %38 = arith.ori %34, %37 : vector<128x128xi1>
    %cst = arith.constant 0.000000e+00 : f32
    %cst_5 = arith.constant -1.000000e+30 : f32
    %39 = vector.broadcast %cst : f32 to vector<128x128xf32>
    %40 = vector.broadcast %cst_5 : f32 to vector<128x128xf32>
    %41 = arith.select %38, %39, %40 : vector<128x128xi1>, vector<128x128xf32>
    %c0_6 = arith.constant 0 : index
    %c0_7 = arith.constant 0 : index
    %42 = vector.load %arg6[%c0_6, %c0_7] : memref<10x128xf32, #tpu.memory_space<vmem>>, vector<10x128xf32>
    %43 = vector.extract_strided_slice %42 {offsets = [0, 0], sizes = [1, 96], strides = [1, 1]} : vector<10x128xf32> to vector<1x96xf32>
    %44 = vector.extract_strided_slice %42 {offsets = [1, 0], sizes = [1, 32], strides = [1, 1]} : vector<10x128xf32> to vector<1x32xf32>
    %45 = vector.extract_strided_slice %42 {offsets = [2, 0], sizes = [1, 32], strides = [1, 1]} : vector<10x128xf32> to vector<1x32xf32>
    %46 = vector.extract_strided_slice %42 {offsets = [3, 0], sizes = [1, 32], strides = [1, 1]} : vector<10x128xf32> to vector<1x32xf32>
    %47 = vector.extract_strided_slice %42 {offsets = [4, 0], sizes = [1, 32], strides = [1, 1]} : vector<10x128xf32> to vector<1x32xf32>
    %48 = vector.extract_strided_slice %42 {offsets = [5, 0], sizes = [1, 32], strides = [1, 1]} : vector<10x128xf32> to vector<1x32xf32>
    %49 = vector.extract_strided_slice %42 {offsets = [6, 0], sizes = [1, 80], strides = [1, 1]} : vector<10x128xf32> to vector<1x80xf32>
    %50 = vector.extract_strided_slice %42 {offsets = [7, 0], sizes = [1, 32], strides = [1, 1]} : vector<10x128xf32> to vector<1x32xf32>
    %51 = vector.extract_strided_slice %42 {offsets = [8, 0], sizes = [1, 32], strides = [1, 1]} : vector<10x128xf32> to vector<1x32xf32>
    %52 = vector.extract_strided_slice %42 {offsets = [9, 0], sizes = [1, 128], strides = [1, 1]} : vector<10x128xf32> to vector<1x128xf32>
    %c0_8 = arith.constant 0 : index
    %c0_9 = arith.constant 0 : index
    %53 = vector.load %arg4[%c0_8, %c0_9] : memref<32x368xf32, #tpu.memory_space<vmem>>, vector<32x96xf32>
    %cst_10 = arith.constant dense<0.000000e+00> : vector<128x96xf32>
    %54 = tpu.matmul %1, %53, %cst_10 {dimension_numbers = #tpu.dot_dimension_numbers<[1], [0], [0], [1], [0, 0, 1, 1], [], []>} : vector<128x32xf32>, vector<32x96xf32>, vector<128x96xf32> -> vector<128x96xf32>
    %55 = vector.broadcast %43 : vector<1x96xf32> to vector<128x96xf32>
    %56 = arith.addf %54, %55 : vector<128x96xf32>
    %57 = vector.extract_strided_slice %56 {offsets = [0, 0], sizes = [128, 8], strides = [1, 1]} : vector<128x96xf32> to vector<128x8xf32>
    %58 = vector.extract_strided_slice %56 {offsets = [0, 32], sizes = [128, 8], strides = [1, 1]} : vector<128x96xf32> to vector<128x8xf32>
    %59 = vector.extract_strided_slice %56 {offsets = [0, 64], sizes = [128, 8], strides = [1, 1]} : vector<128x96xf32> to vector<128x8xf32>
    %cst_11 = arith.constant dense<0.000000e+00> : vector<128x128xf32>
    %60 = tpu.matmul %57, %58, %cst_11 {dimension_numbers = #tpu.dot_dimension_numbers<[1], [1], [0], [0], [0, 0, 1, 0], [], []>} : vector<128x8xf32>, vector<128x8xf32>, vector<128x128xf32> -> vector<128x128xf32>
    %cst_12 = arith.constant 0.353553385 : f32
    %61 = vector.broadcast %cst_12 : f32 to vector<128x128xf32>
    %62 = arith.mulf %60, %61 : vector<128x128xf32>
    %63 = arith.addf %62, %41 : vector<128x128xf32>
    %cst_13 = arith.constant dense<0xFF800000> : vector<128xf32>
    %64 = vector.multi_reduction <maximumf>, %63, %cst_13 [1] : vector<128x128xf32> to vector<128xf32>
    %65 = vector.shape_cast %64 : vector<128xf32> to vector<128x1xf32>
    %66 = vector.broadcast %65 : vector<128x1xf32> to vector<128x128xf32>
    %67 = arith.subf %63, %66 : vector<128x128xf32>
    %68 = math.exp %67 : vector<128x128xf32>
    %cst_14 = arith.constant dense<0.000000e+00> : vector<128xf32>
    %69 = vector.multi_reduction <add>, %68, %cst_14 [1] : vector<128x128xf32> to vector<128xf32>
    %70 = vector.shape_cast %69 : vector<128xf32> to vector<128x1xf32>
    %71 = vector.broadcast %70 : vector<128x1xf32> to vector<128x128xf32>
    %72 = arith.divf %68, %71 : vector<128x128xf32>
    %cst_15 = arith.constant dense<0.000000e+00> : vector<128x8xf32>
    %73 = tpu.matmul %72, %59, %cst_15 {dimension_numbers = #tpu.dot_dimension_numbers<[1], [0], [0], [1], [0, 0, 1, 1], [], []>} : vector<128x128xf32>, vector<128x8xf32>, vector<128x8xf32> -> vector<128x8xf32>
    %74 = vector.extract_strided_slice %56 {offsets = [0, 8], sizes = [128, 8], strides = [1, 1]} : vector<128x96xf32> to vector<128x8xf32>
    %75 = vector.extract_strided_slice %56 {offsets = [0, 40], sizes = [128, 8], strides = [1, 1]} : vector<128x96xf32> to vector<128x8xf32>
    %76 = vector.extract_strided_slice %56 {offsets = [0, 72], sizes = [128, 8], strides = [1, 1]} : vector<128x96xf32> to vector<128x8xf32>
    %cst_16 = arith.constant dense<0.000000e+00> : vector<128x128xf32>
    %77 = tpu.matmul %74, %75, %cst_16 {dimension_numbers = #tpu.dot_dimension_numbers<[1], [1], [0], [0], [0, 0, 1, 0], [], []>} : vector<128x8xf32>, vector<128x8xf32>, vector<128x128xf32> -> vector<128x128xf32>
    %cst_17 = arith.constant 0.353553385 : f32
    %78 = vector.broadcast %cst_17 : f32 to vector<128x128xf32>
    %79 = arith.mulf %77, %78 : vector<128x128xf32>
    %80 = arith.addf %79, %41 : vector<128x128xf32>
    %cst_18 = arith.constant dense<0xFF800000> : vector<128xf32>
    %81 = vector.multi_reduction <maximumf>, %80, %cst_18 [1] : vector<128x128xf32> to vector<128xf32>
    %82 = vector.shape_cast %81 : vector<128xf32> to vector<128x1xf32>
    %83 = vector.broadcast %82 : vector<128x1xf32> to vector<128x128xf32>
    %84 = arith.subf %80, %83 : vector<128x128xf32>
    %85 = math.exp %84 : vector<128x128xf32>
    %cst_19 = arith.constant dense<0.000000e+00> : vector<128xf32>
    %86 = vector.multi_reduction <add>, %85, %cst_19 [1] : vector<128x128xf32> to vector<128xf32>
    %87 = vector.shape_cast %86 : vector<128xf32> to vector<128x1xf32>
    %88 = vector.broadcast %87 : vector<128x1xf32> to vector<128x128xf32>
    %89 = arith.divf %85, %88 : vector<128x128xf32>
    %cst_20 = arith.constant dense<0.000000e+00> : vector<128x8xf32>
    %90 = tpu.matmul %89, %76, %cst_20 {dimension_numbers = #tpu.dot_dimension_numbers<[1], [0], [0], [1], [0, 0, 1, 1], [], []>} : vector<128x128xf32>, vector<128x8xf32>, vector<128x8xf32> -> vector<128x8xf32>
    %91 = vector.extract_strided_slice %56 {offsets = [0, 16], sizes = [128, 8], strides = [1, 1]} : vector<128x96xf32> to vector<128x8xf32>
    %92 = vector.extract_strided_slice %56 {offsets = [0, 48], sizes = [128, 8], strides = [1, 1]} : vector<128x96xf32> to vector<128x8xf32>
    %93 = vector.extract_strided_slice %56 {offsets = [0, 80], sizes = [128, 8], strides = [1, 1]} : vector<128x96xf32> to vector<128x8xf32>
    %cst_21 = arith.constant dense<0.000000e+00> : vector<128x128xf32>
    %94 = tpu.matmul %91, %92, %cst_21 {dimension_numbers = #tpu.dot_dimension_numbers<[1], [1], [0], [0], [0, 0, 1, 0], [], []>} : vector<128x8xf32>, vector<128x8xf32>, vector<128x128xf32> -> vector<128x128xf32>
    %cst_22 = arith.constant 0.353553385 : f32
    %95 = vector.broadcast %cst_22 : f32 to vector<128x128xf32>
    %96 = arith.mulf %94, %95 : vector<128x128xf32>
    %97 = arith.addf %96, %41 : vector<128x128xf32>
    %cst_23 = arith.constant dense<0xFF800000> : vector<128xf32>
    %98 = vector.multi_reduction <maximumf>, %97, %cst_23 [1] : vector<128x128xf32> to vector<128xf32>
    %99 = vector.shape_cast %98 : vector<128xf32> to vector<128x1xf32>
    %100 = vector.broadcast %99 : vector<128x1xf32> to vector<128x128xf32>
    %101 = arith.subf %97, %100 : vector<128x128xf32>
    %102 = math.exp %101 : vector<128x128xf32>
    %cst_24 = arith.constant dense<0.000000e+00> : vector<128xf32>
    %103 = vector.multi_reduction <add>, %102, %cst_24 [1] : vector<128x128xf32> to vector<128xf32>
    %104 = vector.shape_cast %103 : vector<128xf32> to vector<128x1xf32>
    %105 = vector.broadcast %104 : vector<128x1xf32> to vector<128x128xf32>
    %106 = arith.divf %102, %105 : vector<128x128xf32>
    %cst_25 = arith.constant dense<0.000000e+00> : vector<128x8xf32>
    %107 = tpu.matmul %106, %93, %cst_25 {dimension_numbers = #tpu.dot_dimension_numbers<[1], [0], [0], [1], [0, 0, 1, 1], [], []>} : vector<128x128xf32>, vector<128x8xf32>, vector<128x8xf32> -> vector<128x8xf32>
    %108 = vector.extract_strided_slice %56 {offsets = [0, 24], sizes = [128, 8], strides = [1, 1]} : vector<128x96xf32> to vector<128x8xf32>
    %109 = vector.extract_strided_slice %56 {offsets = [0, 56], sizes = [128, 8], strides = [1, 1]} : vector<128x96xf32> to vector<128x8xf32>
    %110 = vector.extract_strided_slice %56 {offsets = [0, 88], sizes = [128, 8], strides = [1, 1]} : vector<128x96xf32> to vector<128x8xf32>
    %cst_26 = arith.constant dense<0.000000e+00> : vector<128x128xf32>
    %111 = tpu.matmul %108, %109, %cst_26 {dimension_numbers = #tpu.dot_dimension_numbers<[1], [1], [0], [0], [0, 0, 1, 0], [], []>} : vector<128x8xf32>, vector<128x8xf32>, vector<128x128xf32> -> vector<128x128xf32>
    %cst_27 = arith.constant 0.353553385 : f32
    %112 = vector.broadcast %cst_27 : f32 to vector<128x128xf32>
    %113 = arith.mulf %111, %112 : vector<128x128xf32>
    %114 = arith.addf %113, %41 : vector<128x128xf32>
    %cst_28 = arith.constant dense<0xFF800000> : vector<128xf32>
    %115 = vector.multi_reduction <maximumf>, %114, %cst_28 [1] : vector<128x128xf32> to vector<128xf32>
    %116 = vector.shape_cast %115 : vector<128xf32> to vector<128x1xf32>
    %117 = vector.broadcast %116 : vector<128x1xf32> to vector<128x128xf32>
    %118 = arith.subf %114, %117 : vector<128x128xf32>
    %119 = math.exp %118 : vector<128x128xf32>
    %cst_29 = arith.constant dense<0.000000e+00> : vector<128xf32>
    %120 = vector.multi_reduction <add>, %119, %cst_29 [1] : vector<128x128xf32> to vector<128xf32>
    %121 = vector.shape_cast %120 : vector<128xf32> to vector<128x1xf32>
    %122 = vector.broadcast %121 : vector<128x1xf32> to vector<128x128xf32>
    %123 = arith.divf %119, %122 : vector<128x128xf32>
    %cst_30 = arith.constant dense<0.000000e+00> : vector<128x8xf32>
    %124 = tpu.matmul %123, %110, %cst_30 {dimension_numbers = #tpu.dot_dimension_numbers<[1], [0], [0], [1], [0, 0, 1, 1], [], []>} : vector<128x128xf32>, vector<128x8xf32>, vector<128x8xf32> -> vector<128x8xf32>
    %125 = tpu.concatenate %73, %90, %107, %124 in 1 : vector<128x8xf32>, vector<128x8xf32>, vector<128x8xf32>, vector<128x8xf32> -> vector<128x32xf32>
    %c0_31 = arith.constant 0 : index
    %c96 = arith.constant 96 : index
    %126 = vector.load %arg4[%c0_31, %c96] : memref<32x368xf32, #tpu.memory_space<vmem>>, vector<32x32xf32>
    %cst_32 = arith.constant dense<0.000000e+00> : vector<128x32xf32>
    %127 = tpu.matmul %125, %126, %cst_32 {dimension_numbers = #tpu.dot_dimension_numbers<[1], [0], [0], [1], [0, 0, 1, 1], [], []>} : vector<128x32xf32>, vector<32x32xf32>, vector<128x32xf32> -> vector<128x32xf32>
    %128 = vector.broadcast %44 : vector<1x32xf32> to vector<128x32xf32>
    %129 = arith.addf %127, %128 : vector<128x32xf32>
    %130 = arith.addf %1, %129 : vector<128x32xf32>
    %cst_33 = arith.constant dense<0.000000e+00> : vector<128xf32>
    %131 = vector.multi_reduction <add>, %130, %cst_33 [1] : vector<128x32xf32> to vector<128xf32>
    %132 = vector.shape_cast %131 : vector<128xf32> to vector<128x1xf32>
    %cst_34 = arith.constant 3.200000e+01 : f32
    %133 = vector.broadcast %cst_34 : f32 to vector<128x1xf32>
    %134 = arith.divf %132, %133 : vector<128x1xf32>
    %135 = vector.broadcast %134 : vector<128x1xf32> to vector<128x32xf32>
    %136 = arith.subf %130, %135 : vector<128x32xf32>
    %137 = arith.mulf %136, %136 : vector<128x32xf32>
    %cst_35 = arith.constant dense<0.000000e+00> : vector<128xf32>
    %138 = vector.multi_reduction <add>, %137, %cst_35 [1] : vector<128x32xf32> to vector<128xf32>
    %139 = vector.shape_cast %138 : vector<128xf32> to vector<128x1xf32>
    %cst_36 = arith.constant 3.200000e+01 : f32
    %140 = vector.broadcast %cst_36 : f32 to vector<128x1xf32>
    %141 = arith.divf %139, %140 : vector<128x1xf32>
    %cst_37 = arith.constant 9.99999974E-6 : f32
    %142 = vector.broadcast %cst_37 : f32 to vector<128x1xf32>
    %143 = arith.addf %141, %142 : vector<128x1xf32>
    %144 = math.rsqrt %143 : vector<128x1xf32>
    %145 = vector.broadcast %144 : vector<128x1xf32> to vector<128x32xf32>
    %146 = arith.mulf %136, %145 : vector<128x32xf32>
    %147 = vector.broadcast %45 : vector<1x32xf32> to vector<128x32xf32>
    %148 = arith.mulf %146, %147 : vector<128x32xf32>
    %149 = vector.broadcast %46 : vector<1x32xf32> to vector<128x32xf32>
    %150 = arith.addf %148, %149 : vector<128x32xf32>
    %c0_38 = arith.constant 0 : index
    %c128 = arith.constant 128 : index
    %151 = vector.load %arg4[%c0_38, %c128] : memref<32x368xf32, #tpu.memory_space<vmem>>, vector<32x80xf32>
    %cst_39 = arith.constant dense<0.000000e+00> : vector<128x80xf32>
    %152 = tpu.matmul %150, %151, %cst_39 {dimension_numbers = #tpu.dot_dimension_numbers<[1], [0], [0], [1], [0, 0, 1, 1], [], []>} : vector<128x32xf32>, vector<32x80xf32>, vector<128x80xf32> -> vector<128x80xf32>
    %153 = vector.broadcast %49 : vector<1x80xf32> to vector<128x80xf32>
    %154 = arith.addf %152, %153 : vector<128x80xf32>
    %cst_40 = arith.constant 0.000000e+00 : f32
    %155 = vector.broadcast %cst_40 : f32 to vector<128x80xf32>
    %156 = arith.maximumf %154, %155 : vector<128x80xf32>
    %c0_41 = arith.constant 0 : index
    %c0_42 = arith.constant 0 : index
    %157 = vector.load %arg5[%c0_41, %c0_42] : memref<80x32xf32, #tpu.memory_space<vmem>>, vector<80x32xf32>
    %cst_43 = arith.constant dense<0.000000e+00> : vector<128x32xf32>
    %158 = tpu.matmul %156, %157, %cst_43 {dimension_numbers = #tpu.dot_dimension_numbers<[1], [0], [0], [1], [0, 0, 1, 1], [], []>} : vector<128x80xf32>, vector<80x32xf32>, vector<128x32xf32> -> vector<128x32xf32>
    %159 = vector.broadcast %50 : vector<1x32xf32> to vector<128x32xf32>
    %160 = arith.addf %158, %159 : vector<128x32xf32>
    %161 = arith.addf %150, %160 : vector<128x32xf32>
    %cst_44 = arith.constant dense<0.000000e+00> : vector<128xf32>
    %162 = vector.multi_reduction <add>, %161, %cst_44 [1] : vector<128x32xf32> to vector<128xf32>
    %163 = vector.shape_cast %162 : vector<128xf32> to vector<128x1xf32>
    %cst_45 = arith.constant 3.200000e+01 : f32
    %164 = vector.broadcast %cst_45 : f32 to vector<128x1xf32>
    %165 = arith.divf %163, %164 : vector<128x1xf32>
    %166 = vector.broadcast %165 : vector<128x1xf32> to vector<128x32xf32>
    %167 = arith.subf %161, %166 : vector<128x32xf32>
    %168 = arith.mulf %167, %167 : vector<128x32xf32>
    %cst_46 = arith.constant dense<0.000000e+00> : vector<128xf32>
    %169 = vector.multi_reduction <add>, %168, %cst_46 [1] : vector<128x32xf32> to vector<128xf32>
    %170 = vector.shape_cast %169 : vector<128xf32> to vector<128x1xf32>
    %cst_47 = arith.constant 3.200000e+01 : f32
    %171 = vector.broadcast %cst_47 : f32 to vector<128x1xf32>
    %172 = arith.divf %170, %171 : vector<128x1xf32>
    %cst_48 = arith.constant 9.99999974E-6 : f32
    %173 = vector.broadcast %cst_48 : f32 to vector<128x1xf32>
    %174 = arith.addf %172, %173 : vector<128x1xf32>
    %175 = math.rsqrt %174 : vector<128x1xf32>
    %176 = vector.broadcast %175 : vector<128x1xf32> to vector<128x32xf32>
    %177 = arith.mulf %167, %176 : vector<128x32xf32>
    %178 = vector.broadcast %47 : vector<1x32xf32> to vector<128x32xf32>
    %179 = arith.mulf %177, %178 : vector<128x32xf32>
    %180 = vector.broadcast %48 : vector<1x32xf32> to vector<128x32xf32>
    %181 = arith.addf %179, %180 : vector<128x32xf32>
    %c0_49 = arith.constant 0 : index
    %c0_50 = arith.constant 0 : index
    %c0_51 = arith.constant 0 : index
    %182 = vector.load %arg3[%c0_49, %c0_50, %c0_51] : memref<1x1x128xi32, #tpu.memory_space<vmem>>, vector<1x1x128xi32>
    %183 = vector.shape_cast %182 : vector<1x1x128xi32> to vector<1x128xi32>
    %184 = tpu.iota {dimensions = array<i32: 0>} : vector<8x128xi32>
    %185 = vector.broadcast %183 : vector<1x128xi32> to vector<8x128xi32>
    %186 = arith.cmpi eq, %185, %184 : vector<8x128xi32>
    %187 = arith.extui %186 : vector<8x128xi1> to vector<8x128xi32>
    %188 = arith.sitofp %187 : vector<8x128xi32> to vector<8x128xf32>
    %cst_52 = arith.constant dense<0.000000e+00> : vector<8xf32>
    %189 = vector.multi_reduction <add>, %188, %cst_52 [1] : vector<8x128xf32> to vector<8xf32>
    %190 = vector.shape_cast %189 : vector<8xf32> to vector<8x1xf32>
    %cst_53 = arith.constant 1.000000e+00 : f32
    %191 = vector.broadcast %cst_53 : f32 to vector<8x1xf32>
    %192 = arith.maximumf %190, %191 : vector<8x1xf32>
    %cst_54 = arith.constant dense<0.000000e+00> : vector<8x32xf32>
    %193 = tpu.matmul %188, %181, %cst_54 {dimension_numbers = #tpu.dot_dimension_numbers<[1], [0], [0], [1], [0, 0, 1, 1], [], []>} : vector<8x128xf32>, vector<128x32xf32>, vector<8x32xf32> -> vector<8x32xf32>
    %194 = vector.broadcast %192 : vector<8x1xf32> to vector<8x32xf32>
    %195 = arith.divf %193, %194 : vector<8x32xf32>
    %c0_55 = arith.constant 0 : index
    %c208 = arith.constant 208 : index
    %196 = vector.load %arg4[%c0_55, %c208] : memref<32x368xf32, #tpu.memory_space<vmem>>, vector<32x32xf32>
    %cst_56 = arith.constant dense<0.000000e+00> : vector<8x32xf32>
    %197 = tpu.matmul %195, %196, %cst_56 {dimension_numbers = #tpu.dot_dimension_numbers<[1], [0], [0], [1], [0, 0, 1, 1], [], []>} : vector<8x32xf32>, vector<32x32xf32>, vector<8x32xf32> -> vector<8x32xf32>
    %198 = vector.broadcast %51 : vector<1x32xf32> to vector<8x32xf32>
    %199 = arith.addf %197, %198 : vector<8x32xf32>
    %cst_57 = arith.constant 0.000000e+00 : f32
    %200 = vector.broadcast %cst_57 : f32 to vector<8x32xf32>
    %201 = arith.maximumf %199, %200 : vector<8x32xf32>
    %c0_58 = arith.constant 0 : index
    %c240 = arith.constant 240 : index
    %202 = vector.load %arg4[%c0_58, %c240] : memref<32x368xf32, #tpu.memory_space<vmem>>, vector<32x128xf32>
    %cst_59 = arith.constant dense<0.000000e+00> : vector<8x128xf32>
    %203 = tpu.matmul %201, %202, %cst_59 {dimension_numbers = #tpu.dot_dimension_numbers<[1], [0], [0], [1], [0, 0, 1, 1], [], []>} : vector<8x32xf32>, vector<32x128xf32>, vector<8x128xf32> -> vector<8x128xf32>
    %204 = vector.broadcast %52 : vector<1x128xf32> to vector<8x128xf32>
    %205 = arith.addf %203, %204 : vector<8x128xf32>
    %c0_60 = arith.constant 0 : index
    %c0_61 = arith.constant 0 : index
    %c0_62 = arith.constant 0 : index
    %206 = vector.load %arg7[%c0_60, %c0_61, %c0_62] : memref<1x8x128xf32, #tpu.memory_space<vmem>>, vector<1x8x128xf32>
    %207 = vector.shape_cast %206 : vector<1x8x128xf32> to vector<8x128xf32>
    %208 = vector.shape_cast %205 : vector<8x128xf32> to vector<1x8x128xf32>
    tpu.vector_store %arg7[%c0_60, %c0_61, %c0_62], %208 {strides = array<i32>} : memref<1x8x128xf32, #tpu.memory_space<vmem>>, vector<1x8x128xf32>,
    return
  }
  func.func @transform_0(%arg0: i32) -> (i32, i32, i32) {
    %c0_i32 = arith.constant 0 : i32
    %c0_i32_0 = arith.constant 0 : i32
    %c0_i32_1 = arith.constant 0 : i32
    return %arg0, %c0_i32, %c0_i32_0 : i32, i32, i32
  }
  func.func @transform_1(%arg0: i32) -> (i32, i32, i32) {
    %c0_i32 = arith.constant 0 : i32
    %c0_i32_0 = arith.constant 0 : i32
    %c0_i32_1 = arith.constant 0 : i32
    return %arg0, %c0_i32, %c0_i32_0 : i32, i32, i32
  }
  func.func @transform_2(%arg0: i32) -> (i32, i32, i32) {
    %c0_i32 = arith.constant 0 : i32
    %c0_i32_0 = arith.constant 0 : i32
    %c0_i32_1 = arith.constant 0 : i32
    return %arg0, %c0_i32, %c0_i32_0 : i32, i32, i32
  }
  func.func @transform_3(%arg0: i32) -> (i32, i32) {
    %c0_i32 = arith.constant 0 : i32
    %c0_i32_0 = arith.constant 0 : i32
    %c0_i32_1 = arith.constant 0 : i32
    return %c0_i32, %c0_i32_0 : i32, i32
  }
  func.func @transform_4(%arg0: i32) -> (i32, i32) {
    %c0_i32 = arith.constant 0 : i32
    %c0_i32_0 = arith.constant 0 : i32
    %c0_i32_1 = arith.constant 0 : i32
    return %c0_i32, %c0_i32_0 : i32, i32
  }
  func.func @transform_5(%arg0: i32) -> (i32, i32) {
    %c0_i32 = arith.constant 0 : i32
    %c0_i32_0 = arith.constant 0 : i32
    %c0_i32_1 = arith.constant 0 : i32
    return %c0_i32, %c0_i32_0 : i32, i32
  }
  func.func @transform_6(%arg0: i32) -> (i32, i32, i32) {
    %c0_i32 = arith.constant 0 : i32
    %c0_i32_0 = arith.constant 0 : i32
    %c0_i32_1 = arith.constant 0 : i32
    return %arg0, %c0_i32, %c0_i32_0 : i32, i32, i32
  }
}

</mosaic_0001>

<llo_original>
// kernel: san_graph_head_forward.1
$region0: #{san_graph_head_forward.1}
  #allocation0 [shape = 'u32[]', space=smem, size = 0x4, offset = 0x4, fixed_abs, tag = 'smem constant byte address 0x4 - core index']
  #allocation1 [shape = 'u32[72,128]{1,0:T(1,128)}', space=vmem, size = 0x9000, scoped, tag = 'internal scratch']
  %s0 = inlined_call_operand.vmem [shape: f32[2,128,32], index: 0, kind: input, shape index: {}]
  %s1 = inlined_call_operand.vmem [shape: s32[2,128,8], index: 1, kind: input, shape index: {}]
  %s2 = inlined_call_operand.vmem [shape: s32[2,1,128], index: 2, kind: input, shape index: {}]
  %s3 = inlined_call_operand.vmem [shape: f32[32,368], index: 3, kind: input, shape index: {}]
  %s4 = inlined_call_operand.vmem [shape: f32[80,32], index: 4, kind: input, shape index: {}]
  %s5 = inlined_call_operand.vmem [shape: f32[10,128], index: 5, kind: input, shape index: {}]
  %s6 = inlined_call_operand.vmem [shape: f32[2,8,128], index: 6, kind: output, shape index: {}]
  %s7 = sld [smem:[#allocation0]]
  $region57: #{san_graph_head_forward.1} parent=0
    _
  %s9 = ssub.s32 1, %s7
  %s10 = scalar_select 0, %s9, %s7
  loop: start=0, step=1, limit=4
  $region2: #{san_graph_head_forward.1} parent=0 // loop_pre_header
    _
  $region3: #{san_graph_head_forward.1} parent=0 // loop_header
    %s12 = sphi 0, %s16
    %p13 = scmp.ge.s32.totalorder %s12, 4
    %s22 = sphi 0, %s24
    %s25 = sphi 0, %s22
    %s26 = sphi 0, %s25
    %s42 = sphi 0, %s26
    %s48 = sphi 0, %s50
    %s51 = sphi 0, %s48
    %s52 = sphi 0, %s51
    %s68 = sphi 0, %s52
    %s74 = sphi 0, %s76
    %s77 = sphi 0, %s74
    %s78 = sphi 0, %s77
    %s94 = sphi 0, %s78
    %s98 = sphi 0, %s98
    %s100 = sphi 0, %s98
    %s101 = sphi 0, %s100
    %s115 = sphi 0, %s101
    %s119 = sphi 0, %s119
    %s121 = sphi 0, %s119
    %s122 = sphi 0, %s121
    %s136 = sphi 0, %s122
    %s140 = sphi 0, %s140
    %s142 = sphi 0, %s140
    %s143 = sphi 0, %s142
    %s157 = sphi 0, %s143
    %s163 = sphi 0, %s165
    %s166 = sphi 0, %s163
    %s167 = sphi 0, %s166
    %s183 = sphi 0, %s167
  $region4: #{san_graph_head_forward.1} parent=0 // loop_header_branch
    %15 = sbr.rel (%p13) target = $region8
  $region5: #{san_graph_head_forward.1} parent=0 // loop_body
    %s17 = ssub.s32 %s12, 1
    %s18 = ssub.s32 %s12, 2
    %s19 = sadd.s32 %s12, 1
    %s20 = ssub.s32 %s12, %s19
    %p21 = scmp.eq.s32.totalorder %s20, 0
    %s23 = sadd.s32 %s22, 1
    %s24 = scalar_select %p21, %s22, %s23
    %p27 = pneg %p21
    %p28 = scmp.eq.s32.totalorder %s12, 1
    %p29 = por %p27, %p28
    %p30 = scmp.ne.s32.totalorder %s22, %s25
    %p31 = scmp.eq.s32.totalorder %s12, 0
    %p32 = por %p30, %p31
    %p33 = scmp.ne.s32.totalorder %s22, %s25
    %p34 = scmp.eq.s32.totalorder %s17, 1
    %p35 = por %p33, %p34
    %p36 = scmp.ne.s32.totalorder %s25, %s26
    %p37 = scmp.eq.s32.totalorder %s17, 0
    %p38 = por %p36, %p37
    %p39 = scmp.ne.s32.totalorder %s25, %s26
    %p40 = scmp.eq.s32.totalorder %s18, 1
    %p41 = por %p39, %p40
    %p43 = scmp.ne.s32.totalorder %s26, %s42
    %p44 = scmp.eq.s32.totalorder %s18, 0
    %p45 = por %p43, %p44
    %s46 = ssub.s32 %s12, %s19
    %p47 = scmp.eq.s32.totalorder %s46, 0
    %s49 = sadd.s32 %s48, 1
    %s50 = scalar_select %p47, %s48, %s49
    %p53 = pneg %p47
    %p54 = scmp.eq.s32.totalorder %s12, 1
    %p55 = por %p53, %p54
    %p56 = scmp.ne.s32.totalorder %s48, %s51
    %p57 = scmp.eq.s32.totalorder %s12, 0
    %p58 = por %p56, %p57
    %p59 = scmp.ne.s32.totalorder %s48, %s51
    %p60 = scmp.eq.s32.totalorder %s17, 1
    %p61 = por %p59, %p60
    %p62 = scmp.ne.s32.totalorder %s51, %s52
    %p63 = scmp.eq.s32.totalorder %s17, 0
    %p64 = por %p62, %p63
    %p65 = scmp.ne.s32.totalorder %s51, %s52
    %p66 = scmp.eq.s32.totalorder %s18, 1
    %p67 = por %p65, %p66
    %p69 = scmp.ne.s32.totalorder %s52, %s68
    %p70 = scmp.eq.s32.totalorder %s18, 0
    %p71 = por %p69, %p70
    %s72 = ssub.s32 %s12, %s19
    %p73 = scmp.eq.s32.totalorder %s72, 0
    %s75 = sadd.s32 %s74, 1
    %s76 = scalar_select %p73, %s74, %s75
    %p79 = pneg %p73
    %p80 = scmp.eq.s32.totalorder %s12, 1
    %p81 = por %p79, %p80
    %p82 = scmp.ne.s32.totalorder %s74, %s77
    %p83 = scmp.eq.s32.totalorder %s12, 0
    %p84 = por %p82, %p83
    %p85 = scmp.ne.s32.totalorder %s74, %s77
    %p86 = scmp.eq.s32.totalorder %s17, 1
    %p87 = por %p85, %p86
    %p88 = scmp.ne.s32.totalorder %s77, %s78
    %p89 = scmp.eq.s32.totalorder %s17, 0
    %p90 = por %p88, %p89
    %p91 = scmp.ne.s32.totalorder %s77, %s78
    %p92 = scmp.eq.s32.totalorder %s18, 1
    %p93 = por %p91, %p92
    %p95 = scmp.ne.s32.totalorder %s78, %s94
    %p96 = scmp.eq.s32.totalorder %s18, 0
    %p97 = por %p95, %p96
    %s99 = sadd.s32 %s98, 1
    %p102 = scmp.eq.s32.totalorder %s12, 1
    %p103 = scmp.ne.s32.totalorder %s98, %s100
    %p104 = scmp.eq.s32.totalorder %s12, 0
    %p105 = por %p103, %p104
    %p106 = scmp.ne.s32.totalorder %s98, %s100
    %p107 = scmp.eq.s32.totalorder %s17, 1
    %p108 = por %p106, %p107
    %p109 = scmp.ne.s32.totalorder %s100, %s101
    %p110 = scmp.eq.s32.totalorder %s17, 0
    %p111 = por %p109, %p110
    %p112 = scmp.ne.s32.totalorder %s100, %s101
    %p113 = scmp.eq.s32.totalorder %s18, 1
    %p114 = por %p112, %p113
    %p116 = scmp.ne.s32.totalorder %s101, %s115
    %p117 = scmp.eq.s32.totalorder %s18, 0
    %p118 = por %p116, %p117
    %s120 = sadd.s32 %s119, 1
    %p123 = scmp.eq.s32.totalorder %s12, 1
    %p124 = scmp.ne.s32.totalorder %s119, %s121
    %p125 = scmp.eq.s32.totalorder %s12, 0
    %p126 = por %p124, %p125
    %p127 = scmp.ne.s32.totalorder %s119, %s121
    %p128 = scmp.eq.s32.totalorder %s17, 1
    %p129 = por %p127, %p128
    %p130 = scmp.ne.s32.totalorder %s121, %s122
    %p131 = scmp.eq.s32.totalorder %s17, 0
    %p132 = por %p130, %p131
    %p133 = scmp.ne.s32.totalorder %s121, %s122
    %p134 = scmp.eq.s32.totalorder %s18, 1
    %p135 = por %p133, %p134
    %p137 = scmp.ne.s32.totalorder %s122, %s136
    %p138 = scmp.eq.s32.totalorder %s18, 0
    %p139 = por %p137, %p138
    %s141 = sadd.s32 %s140, 1
    %p144 = scmp.eq.s32.totalorder %s12, 1
    %p145 = scmp.ne.s32.totalorder %s140, %s142
    %p146 = scmp.eq.s32.totalorder %s12, 0
    %p147 = por %p145, %p146
    %p148 = scmp.ne.s32.totalorder %s140, %s142
    %p149 = scmp.eq.s32.totalorder %s17, 1
    %p150 = por %p148, %p149
    %p151 = scmp.ne.s32.totalorder %s142, %s143
    %p152 = scmp.eq.s32.totalorder %s17, 0
    %p153 = por %p151, %p152
    %p154 = scmp.ne.s32.totalorder %s142, %s143
    %p155 = scmp.eq.s32.totalorder %s18, 1
    %p156 = por %p154, %p155
    %p158 = scmp.ne.s32.totalorder %s143, %s157
    %p159 = scmp.eq.s32.totalorder %s18, 0
    %p160 = por %p158, %p159
    %s161 = ssub.s32 %s12, %s19
    %p162 = scmp.eq.s32.totalorder %s161, 0
    %s164 = sadd.s32 %s163, 1
    %s165 = scalar_select %p162, %s163, %s164
    %p168 = pneg %p162
    %p169 = scmp.eq.s32.totalorder %s12, 1
    %p170 = por %p168, %p169
    %p171 = scmp.ne.s32.totalorder %s163, %s166
    %p172 = scmp.eq.s32.totalorder %s12, 0
    %p173 = por %p171, %p172
    %p174 = scmp.ne.s32.totalorder %s163, %s166
    %p175 = scmp.eq.s32.totalorder %s17, 1
    %p176 = por %p174, %p175
    %p177 = scmp.ne.s32.totalorder %s166, %s167
    %p178 = scmp.eq.s32.totalorder %s17, 0
    %p179 = por %p177, %p178
    %p180 = scmp.ne.s32.totalorder %s166, %s167
    %p181 = scmp.eq.s32.totalorder %s18, 1
    %p182 = por %p180, %p181
    %p184 = scmp.ne.s32.totalorder %s167, %s183
    %p185 = scmp.eq.s32.totalorder %s18, 0
    %p186 = por %p184, %p185
    %p187 = scmp.le.s32.totalorder 1, %s12
    %p188 = scmp.lt.s32.totalorder %s12, 3
    %p189 = pnand %p187, %p188
    %p190 = pneg %p189
    // Predicated region
    $region9: #{san_graph_head_forward.1} parent=5 // pred_check
      _
    $region10: #{san_graph_head_forward.1} parent=5 // pred_check_branch
      %192 = sbr.rel (%p189) target = $region12
    $region11: #{san_graph_head_forward.1} parent=5 // pred_region
      %s193 = ssub.s32 %s12, 1
      // Predicated region
      $region13: #{san_graph_head_forward.1} parent=11 // pred_check
        %p194 = pneg %p111
      $region14: #{san_graph_head_forward.1} parent=11 // pred_check_branch
        %196 = sbr.rel (%p194) target = $region16
      $region15: #{san_graph_head_forward.1} parent=11 // pred_region
        _
      $region16: #{san_graph_head_forward.1} parent=11 // pred_fallthru
        _
      // Predicated region
      $region17: #{san_graph_head_forward.1} parent=11 // pred_check
        %p197 = pneg %p132
      $region18: #{san_graph_head_forward.1} parent=11 // pred_check_branch
        %199 = sbr.rel (%p197) target = $region20
      $region19: #{san_graph_head_forward.1} parent=11 // pred_region
        _
      $region20: #{san_graph_head_forward.1} parent=11 // pred_fallthru
        _
      // Predicated region
      $region21: #{san_graph_head_forward.1} parent=11 // pred_check
        %p200 = pneg %p153
      $region22: #{san_graph_head_forward.1} parent=11 // pred_check_branch
        %202 = sbr.rel (%p200) target = $region24
      $region23: #{san_graph_head_forward.1} parent=11 // pred_region
        _
      $region24: #{san_graph_head_forward.1} parent=11 // pred_fallthru
        _
    $region12: #{san_graph_head_forward.1} parent=5 // pred_fallthru
      _
    %p203 = scmp.lt.s32.totalorder %s12, 2
    // Predicated region
    $region25: #{san_graph_head_forward.1} parent=5 // pred_check
      %p204 = pneg %p203
    $region26: #{san_graph_head_forward.1} parent=5 // pred_check_branch
      %206 = sbr.rel (%p204) target = $region28
    $region27: #{san_graph_head_forward.1} parent=5 // pred_region
      // Predicated region
      $region29: #{san_graph_head_forward.1} parent=27 // pred_check
        %p207 = pneg %p32
      $region30: #{san_graph_head_forward.1} parent=27 // pred_check_branch
        %209 = sbr.rel (%p207) target = $region32
      $region31: #{san_graph_head_forward.1} parent=27 // pred_region
        %p210 = scmp.lt.s32.totalorder %s12, 1
        %s211 = scalar_select %p210, %s12, 1
        %s212 = smul.addr %s211, 16
        %s213 = smul.addr %s212, 8
        %s214 = scalar_lea.vmem %s0, %s213
      $region32: #{san_graph_head_forward.1} parent=27 // pred_fallthru
        _
      // Predicated region
      $region33: #{san_graph_head_forward.1} parent=27 // pred_check
        %p215 = pneg %p58
      $region34: #{san_graph_head_forward.1} parent=27 // pred_check_branch
        %217 = sbr.rel (%p215) target = $region36
      $region35: #{san_graph_head_forward.1} parent=27 // pred_region
        %p218 = scmp.lt.s32.totalorder %s12, 1
        %s219 = scalar_select %p218, %s12, 1
        %s220 = smul.addr %s219, 16
        %s221 = smul.addr %s220, 8
        %s222 = scalar_lea.vmem %s1, %s221
      $region36: #{san_graph_head_forward.1} parent=27 // pred_fallthru
        _
      // Predicated region
      $region37: #{san_graph_head_forward.1} parent=27 // pred_check
        %p223 = pneg %p84
      $region38: #{san_graph_head_forward.1} parent=27 // pred_check_branch
        %225 = sbr.rel (%p223) target = $region40
      $region39: #{san_graph_head_forward.1} parent=27 // pred_region
        %p226 = scmp.lt.s32.totalorder %s12, 1
        %s227 = scalar_select %p226, %s12, 1
        %s228 = scalar_lea.vmem %s2, %s227
      $region40: #{san_graph_head_forward.1} parent=27 // pred_fallthru
        _
    $region28: #{san_graph_head_forward.1} parent=5 // pred_fallthru
      _
    %p229 = scmp.le.s32.totalorder 1, %s12
    %p230 = scmp.lt.s32.totalorder %s12, 3
    %p231 = pnand %p229, %p230
    %p232 = pneg %p231
    // Predicated region
    $region41: #{san_graph_head_forward.1} parent=5 // pred_check
      _
    $region42: #{san_graph_head_forward.1} parent=5 // pred_check_branch
      %234 = sbr.rel (%p231) target = $region44
    $region43: #{san_graph_head_forward.1} parent=5 // pred_region
      %s235 = ssub.s32 %s12, 1
      %p236 = scmp.lt.s32.totalorder %s17, 1
      %s237 = scalar_select %p236, %s17, 1
      %s238 = smul.addr %s237, 16
      %s239 = smul.addr %s238, 8
      %s240 = scalar_lea.vmem %s0, %s239
      %p241 = pneg %p38
      %p242 = pneg %p35
      %p243 = scmp.lt.s32.totalorder %s17, 1
      %s244 = scalar_select %p243, %s17, 1
      %s245 = smul.addr %s244, 16
      %s246 = smul.addr %s245, 8
      %s247 = scalar_lea.vmem %s1, %s246
      %p248 = pneg %p64
      %p249 = pneg %p61
      %p250 = scmp.lt.s32.totalorder %s17, 1
      %s251 = scalar_select %p250, %s17, 1
      %s252 = scalar_lea.vmem %s2, %s251
      %p253 = pneg %p90
      %p254 = pneg %p87
      %p255 = pneg %p111
      %p256 = pneg %p108
      %p257 = pneg %p132
      %p258 = pneg %p129
      %p259 = pneg %p153
      %p260 = pneg %p150
      %p261 = pneg %p179
      %p262 = pneg %p176
      %p263 = scmp.lt.s32.totalorder %s17, 1
      %s264 = scalar_select %p263, %s17, 1
      %s265 = smul.addr %s264, 8
      %s266 = scalar_lea.vmem %s6, %s265
      %p267 = scmp.lt.s32.totalorder %s17, 1
      %s268 = scalar_select %p267, %s17, 1
      %s269 = smul.addr %s268, 16
      %s270 = smul.addr %s269, 8
      %s271 = scalar_lea.vmem %s0, %s270
      %p272 = scmp.lt.s32.totalorder %s17, 1
      %s273 = scalar_select %p272, %s17, 1
      %s274 = smul.addr %s273, 16
      %s275 = smul.addr %s274, 8
      %s276 = scalar_lea.vmem %s1, %s275
      %p277 = scmp.lt.s32.totalorder %s17, 1
      %s278 = scalar_select %p277, %s17, 1
      %s279 = scalar_lea.vmem %s2, %s278
      %p280 = scmp.lt.s32.totalorder %s17, 1
      %s281 = scalar_select %p280, %s17, 1
      %s282 = smul.addr %s281, 8
      %s283 = scalar_lea.vmem %s6, %s282
      %v284 = vld [vmem:[%s271] sm:$0xff]
      %v285 = vld [vmem:[%s271 + $0x8] sm:$0xff]
      %v286 = vld [vmem:[%s271 + $0x10] sm:$0xff]
      %v287 = vld [vmem:[%s271 + $0x18] sm:$0xff]
      %v288 = vld [vmem:[%s271 + $0x20] sm:$0xff]
      %v289 = vld [vmem:[%s271 + $0x28] sm:$0xff]
      %v290 = vld [vmem:[%s271 + $0x30] sm:$0xff]
      %v291 = vld [vmem:[%s271 + $0x38] sm:$0xff]
      %v292 = vld [vmem:[%s271 + $0x40] sm:$0xff]
      %v293 = vld [vmem:[%s271 + $0x48] sm:$0xff]
      %v294 = vld [vmem:[%s271 + $0x50] sm:$0xff]
      %v295 = vld [vmem:[%s271 + $0x58] sm:$0xff]
      %v296 = vld [vmem:[%s271 + $0x60] sm:$0xff]
      %v297 = vld [vmem:[%s271 + $0x68] sm:$0xff]
      %v298 = vld [vmem:[%s271 + $0x70] sm:$0xff]
      %v299 = vld [vmem:[%s271 + $0x78] sm:$0xff]
      %v300 = vlaneseq
      %v301 = vshrl.u32 %v300, 7
      %v302 = vadd.s32 %v301, 8
      %v303 = vadd.s32 %v301, 16
      %v304 = vadd.s32 %v301, 24
      %v305 = vadd.s32 %v301, 32
      %v306 = vadd.s32 %v301, 40
      %v307 = vadd.s32 %v301, 48
      %v308 = vadd.s32 %v301, 56
      %v309 = vadd.s32 %v301, 64
      %v310 = vadd.s32 %v301, 72
      %v311 = vadd.s32 %v301, 80
      %v312 = vadd.s32 %v301, 88
      %v313 = vadd.s32 %v301, 96
      %v314 = vadd.s32 %v301, 104
      %v315 = vadd.s32 %v301, 112
      %v316 = vadd.s32 %v301, 120
      %v317 = vlaneseq
      %v318 = vand.u32 %v317, 127
      %vm319 = vcmp.eq.s32.totalorder %v301, %v318
      %vm320 = vcmp.eq.s32.totalorder %v302, %v318
      %vm321 = vcmp.eq.s32.totalorder %v303, %v318
      %vm322 = vcmp.eq.s32.totalorder %v304, %v318
      %vm323 = vcmp.eq.s32.totalorder %v305, %v318
      %vm324 = vcmp.eq.s32.totalorder %v306, %v318
      %vm325 = vcmp.eq.s32.totalorder %v307, %v318
      %vm326 = vcmp.eq.s32.totalorder %v308, %v318
      %vm327 = vcmp.eq.s32.totalorder %v309, %v318
      %vm328 = vcmp.eq.s32.totalorder %v310, %v318
      %vm329 = vcmp.eq.s32.totalorder %v311, %v318
      %vm330 = vcmp.eq.s32.totalorder %v312, %v318
      %vm331 = vcmp.eq.s32.totalorder %v313, %v318
      %vm332 = vcmp.eq.s32.totalorder %v314, %v318
      %vm333 = vcmp.eq.s32.totalorder %v315, %v318
      %vm334 = vcmp.eq.s32.totalorder %v316, %v318
      %v335 = vld [vmem:[%s276] sm:$0xff]
      %v336 = vld [vmem:[%s276 + $0x8] sm:$0xff]
      %v337 = vld [vmem:[%s276 + $0x10] sm:$0xff]
      %v338 = vld [vmem:[%s276 + $0x18] sm:$0xff]
      %v339 = vld [vmem:[%s276 + $0x20] sm:$0xff]
      %v340 = vld [vmem:[%s276 + $0x28] sm:$0xff]
      %v341 = vld [vmem:[%s276 + $0x30] sm:$0xff]
      %v342 = vld [vmem:[%s276 + $0x38] sm:$0xff]
      %v343 = vld [vmem:[%s276 + $0x40] sm:$0xff]
      %v344 = vld [vmem:[%s276 + $0x48] sm:$0xff]
      %v345 = vld [vmem:[%s276 + $0x50] sm:$0xff]
      %v346 = vld [vmem:[%s276 + $0x58] sm:$0xff]
      %v347 = vld [vmem:[%s276 + $0x60] sm:$0xff]
      %v348 = vld [vmem:[%s276 + $0x68] sm:$0xff]
      %v349 = vld [vmem:[%s276 + $0x70] sm:$0xff]
      %v350 = vld [vmem:[%s276 + $0x78] sm:$0xff]
      %351 = vset.pattern.permute.xlu0 0
      %352 = vperm.xlu0 %351, %v335
      %v353 = vpop.permute.xlu0 %352
      %354 = vset.pattern.permute.xlu0 0
      %355 = vperm.xlu0 %354, %v336
      %v356 = vpop.permute.xlu0 %355
      %357 = vset.pattern.permute.xlu0 0
      %358 = vperm.xlu0 %357, %v337
      %v359 = vpop.permute.xlu0 %358
      %360 = vset.pattern.permute.xlu0 0
      %361 = vperm.xlu0 %360, %v338
      %v362 = vpop.permute.xlu0 %361
      %363 = vset.pattern.permute.xlu0 0
      %364 = vperm.xlu0 %363, %v339
      %v365 = vpop.permute.xlu0 %364
      %366 = vset.pattern.permute.xlu0 0
      %367 = vperm.xlu0 %366, %v340
      %v368 = vpop.permute.xlu0 %367
      %369 = vset.pattern.permute.xlu0 0
      %370 = vperm.xlu0 %369, %v341
      %v371 = vpop.permute.xlu0 %370
      %372 = vset.pattern.permute.xlu0 0
      %373 = vperm.xlu0 %372, %v342
      %v374 = vpop.permute.xlu0 %373
      %375 = vset.pattern.permute.xlu0 0
      %376 = vperm.xlu0 %375, %v343
      %v377 = vpop.permute.xlu0 %376
      %378 = vset.pattern.permute.xlu0 0
      %379 = vperm.xlu0 %378, %v344
      %v380 = vpop.permute.xlu0 %379
      %381 = vset.pattern.permute.xlu0 0
      %382 = vperm.xlu0 %381, %v345
      %v383 = vpop.permute.xlu0 %382
      %384 = vset.pattern.permute.xlu0 0
      %385 = vperm.xlu0 %384, %v346
      %v386 = vpop.permute.xlu0 %385
      %387 = vset.pattern.permute.xlu0 0
      %388 = vperm.xlu0 %387, %v347
      %v389 = vpop.permute.xlu0 %388
      %390 = vset.pattern.permute.xlu0 0
      %391 = vperm.xlu0 %390, %v348
      %v392 = vpop.permute.xlu0 %391
      %393 = vset.pattern.permute.xlu0 0
      %394 = vperm.xlu0 %393, %v349
      %v395 = vpop.permute.xlu0 %394
      %396 = vset.pattern.permute.xlu0 0
      %397 = vperm.xlu0 %396, %v350
      %v398 = vpop.permute.xlu0 %397
      %vm399 = vcmp.eq.s32.totalorder %v318, %v353
      %vm400 = vcmp.eq.s32.totalorder %v318, %v356
      %vm401 = vcmp.eq.s32.totalorder %v318, %v359
      %vm402 = vcmp.eq.s32.totalorder %v318, %v362
      %vm403 = vcmp.eq.s32.totalorder %v318, %v365
      %vm404 = vcmp.eq.s32.totalorder %v318, %v368
      %vm405 = vcmp.eq.s32.totalorder %v318, %v371
      %vm406 = vcmp.eq.s32.totalorder %v318, %v374
      %vm407 = vcmp.eq.s32.totalorder %v318, %v377
      %vm408 = vcmp.eq.s32.totalorder %v318, %v380
      %vm409 = vcmp.eq.s32.totalorder %v318, %v383
      %vm410 = vcmp.eq.s32.totalorder %v318, %v386
      %vm411 = vcmp.eq.s32.totalorder %v318, %v389
      %vm412 = vcmp.eq.s32.totalorder %v318, %v392
      %vm413 = vcmp.eq.s32.totalorder %v318, %v395
      %vm414 = vcmp.eq.s32.totalorder %v318, %v398
      %vm415 = vmor %vm319, %vm399
      %vm416 = vmor %vm320, %vm400
      %vm417 = vmor %vm321, %vm401
      %vm418 = vmor %vm322, %vm402
      %vm419 = vmor %vm323, %vm403
      %vm420 = vmor %vm324, %vm404
      %vm421 = vmor %vm325, %vm405
      %vm422 = vmor %vm326, %vm406
      %vm423 = vmor %vm327, %vm407
      %vm424 = vmor %vm328, %vm408
      %vm425 = vmor %vm329, %vm409
      %vm426 = vmor %vm330, %vm410
      %vm427 = vmor %vm331, %vm411
      %vm428 = vmor %vm332, %vm412
      %vm429 = vmor %vm333, %vm413
      %vm430 = vmor %vm334, %vm414
      %431 = vset.pattern.permute.xlu0 1
      %432 = vperm.xlu0 %431, %v335
      %v433 = vpop.permute.xlu0 %432
      %434 = vset.pattern.permute.xlu0 1
      %435 = vperm.xlu0 %434, %v336
      %v436 = vpop.permute.xlu0 %435
      %437 = vset.pattern.permute.xlu0 1
      %438 = vperm.xlu0 %437, %v337
      %v439 = vpop.permute.xlu0 %438
      %440 = vset.pattern.permute.xlu0 1
      %441 = vperm.xlu0 %440, %v338
      %v442 = vpop.permute.xlu0 %441
      %443 = vset.pattern.permute.xlu0 1
      %444 = vperm.xlu0 %443, %v339
      %v445 = vpop.permute.xlu0 %444
      %446 = vset.pattern.permute.xlu0 1
      %447 = vperm.xlu0 %446, %v340
      %v448 = vpop.permute.xlu0 %447
      %449 = vset.pattern.permute.xlu0 1
      %450 = vperm.xlu0 %449, %v341
      %v451 = vpop.permute.xlu0 %450
      %452 = vset.pattern.permute.xlu0 1
      %453 = vperm.xlu0 %452, %v342
      %v454 = vpop.permute.xlu0 %453
      %455 = vset.pattern.permute.xlu0 1
      %456 = vperm.xlu0 %455, %v343
      %v457 = vpop.permute.xlu0 %456
      %458 = vset.pattern.permute.xlu0 1
      %459 = vperm.xlu0 %458, %v344
      %v460 = vpop.permute.xlu0 %459
      %461 = vset.pattern.permute.xlu0 1
      %462 = vperm.xlu0 %461, %v345
      %v463 = vpop.permute.xlu0 %462
      %464 = vset.pattern.permute.xlu0 1
      %465 = vperm.xlu0 %464, %v346
      %v466 = vpop.permute.xlu0 %465
      %467 = vset.pattern.permute.xlu0 1
      %468 = vperm.xlu0 %467, %v347
      %v469 = vpop.permute.xlu0 %468
      %470 = vset.pattern.permute.xlu0 1
      %471 = vperm.xlu0 %470, %v348
      %v472 = vpop.permute.xlu0 %471
      %473 = vset.pattern.permute.xlu0 1
      %474 = vperm.xlu0 %473, %v349
      %v475 = vpop.permute.xlu0 %474
      %476 = vset.pattern.permute.xlu0 1
      %477 = vperm.xlu0 %476, %v350
      %v478 = vpop.permute.xlu0 %477
      %vm479 = vcmp.eq.s32.totalorder %v318, %v433
      %vm480 = vcmp.eq.s32.totalorder %v318, %v436
      %vm481 = vcmp.eq.s32.totalorder %v318, %v439
      %vm482 = vcmp.eq.s32.totalorder %v318, %v442
      %vm483 = vcmp.eq.s32.totalorder %v318, %v445
      %vm484 = vcmp.eq.s32.totalorder %v318, %v448
      %vm485 = vcmp.eq.s32.totalorder %v318, %v451
      %vm486 = vcmp.eq.s32.totalorder %v318, %v454
      %vm487 = vcmp.eq.s32.totalorder %v318, %v457
      %vm488 = vcmp.eq.s32.totalorder %v318, %v460
      %vm489 = vcmp.eq.s32.totalorder %v318, %v463
      %vm490 = vcmp.eq.s32.totalorder %v318, %v466
      %vm491 = vcmp.eq.s32.totalorder %v318, %v469
      %vm492 = vcmp.eq.s32.totalorder %v318, %v472
      %vm493 = vcmp.eq.s32.totalorder %v318, %v475
      %vm494 = vcmp.eq.s32.totalorder %v318, %v478
      %vm495 = vmor %vm415, %vm479
      %vm496 = vmor %vm416, %vm480
      %vm497 = vmor %vm417, %vm481
      %vm498 = vmor %vm418, %vm482
      %vm499 = vmor %vm419, %vm483
      %vm500 = vmor %vm420, %vm484
      %vm501 = vmor %vm421, %vm485
      %vm502 = vmor %vm422, %vm486
      %vm503 = vmor %vm423, %vm487
      %vm504 = vmor %vm424, %vm488
      %vm505 = vmor %vm425, %vm489
      %vm506 = vmor %vm426, %vm490
      %vm507 = vmor %vm427, %vm491
      %vm508 = vmor %vm428, %vm492
      %vm509 = vmor %vm429, %vm493
      %vm510 = vmor %vm430, %vm494
      %511 = vset.pattern.permute.xlu0 2
      %512 = vperm.xlu0 %511, %v335
      %v513 = vpop.permute.xlu0 %512
      %514 = vset.pattern.permute.xlu0 2
      %515 = vperm.xlu0 %514, %v336
      %v516 = vpop.permute.xlu0 %515
      %517 = vset.pattern.permute.xlu0 2
      %518 = vperm.xlu0 %517, %v337
      %v519 = vpop.permute.xlu0 %518
      %520 = vset.pattern.permute.xlu0 2
      %521 = vperm.xlu0 %520, %v338
      %v522 = vpop.permute.xlu0 %521
      %523 = vset.pattern.permute.xlu0 2
      %524 = vperm.xlu0 %523, %v339
      %v525 = vpop.permute.xlu0 %524
      %526 = vset.pattern.permute.xlu0 2
      %527 = vperm.xlu0 %526, %v340
      %v528 = vpop.permute.xlu0 %527
      %529 = vset.pattern.permute.xlu0 2
      %530 = vperm.xlu0 %529, %v341
      %v531 = vpop.permute.xlu0 %530
      %532 = vset.pattern.permute.xlu0 2
      %533 = vperm.xlu0 %532, %v342
      %v534 = vpop.permute.xlu0 %533
      %535 = vset.pattern.permute.xlu0 2
      %536 = vperm.xlu0 %535, %v343
      %v537 = vpop.permute.xlu0 %536
      %538 = vset.pattern.permute.xlu0 2
      %539 = vperm.xlu0 %538, %v344
      %v540 = vpop.permute.xlu0 %539
      %541 = vset.pattern.permute.xlu0 2
      %542 = vperm.xlu0 %541, %v345
      %v543 = vpop.permute.xlu0 %542
      %544 = vset.pattern.permute.xlu0 2
      %545 = vperm.xlu0 %544, %v346
      %v546 = vpop.permute.xlu0 %545
      %547 = vset.pattern.permute.xlu0 2
      %548 = vperm.xlu0 %547, %v347
      %v549 = vpop.permute.xlu0 %548
      %550 = vset.pattern.permute.xlu0 2
      %551 = vperm.xlu0 %550, %v348
      %v552 = vpop.permute.xlu0 %551
      %553 = vset.pattern.permute.xlu0 2
      %554 = vperm.xlu0 %553, %v349
      %v555 = vpop.permute.xlu0 %554
      %556 = vset.pattern.permute.xlu0 2
      %557 = vperm.xlu0 %556, %v350
      %v558 = vpop.permute.xlu0 %557
      %vm559 = vcmp.eq.s32.totalorder %v318, %v513
      %vm560 = vcmp.eq.s32.totalorder %v318, %v516
      %vm561 = vcmp.eq.s32.totalorder %v318, %v519
      %vm562 = vcmp.eq.s32.totalorder %v318, %v522
      %vm563 = vcmp.eq.s32.totalorder %v318, %v525
      %vm564 = vcmp.eq.s32.totalorder %v318, %v528
      %vm565 = vcmp.eq.s32.totalorder %v318, %v531
      %vm566 = vcmp.eq.s32.totalorder %v318, %v534
      %vm567 = vcmp.eq.s32.totalorder %v318, %v537
      %vm568 = vcmp.eq.s32.totalorder %v318, %v540
      %vm569 = vcmp.eq.s32.totalorder %v318, %v543
      %vm570 = vcmp.eq.s32.totalorder %v318, %v546
      %vm571 = vcmp.eq.s32.totalorder %v318, %v549
      %vm572 = vcmp.eq.s32.totalorder %v318, %v552
      %vm573 = vcmp.eq.s32.totalorder %v318, %v555
      %vm574 = vcmp.eq.s32.totalorder %v318, %v558
      %vm575 = vmor %vm495, %vm559
      %vm576 = vmor %vm496, %vm560
      %vm577 = vmor %vm497, %vm561
      %vm578 = vmor %vm498, %vm562
      %vm579 = vmor %vm499, %vm563
      %vm580 = vmor %vm500, %vm564
      %vm581 = vmor %vm501, %vm565
      %vm582 = vmor %vm502, %vm566
      %vm583 = vmor %vm503, %vm567
      %vm584 = vmor %vm504, %vm568
      %vm585 = vmor %vm505, %vm569
      %vm586 = vmor %vm506, %vm570
      %vm587 = vmor %vm507, %vm571
      %vm588 = vmor %vm508, %vm572
      %vm589 = vmor %vm509, %vm573
      %vm590 = vmor %vm510, %vm574
      %591 = vset.pattern.permute.xlu0 3
      %592 = vperm.xlu0 %591, %v335
      %v593 = vpop.permute.xlu0 %592
      %594 = vset.pattern.permute.xlu0 3
      %595 = vperm.xlu0 %594, %v336
      %v596 = vpop.permute.xlu0 %595
      %597 = vset.pattern.permute.xlu0 3
      %598 = vperm.xlu0 %597, %v337
      %v599 = vpop.permute.xlu0 %598
      %600 = vset.pattern.permute.xlu0 3
      %601 = vperm.xlu0 %600, %v338
      %v602 = vpop.permute.xlu0 %601
      %603 = vset.pattern.permute.xlu0 3
      %604 = vperm.xlu0 %603, %v339
      %v605 = vpop.permute.xlu0 %604
      %606 = vset.pattern.permute.xlu0 3
      %607 = vperm.xlu0 %606, %v340
      %v608 = vpop.permute.xlu0 %607
      %609 = vset.pattern.permute.xlu0 3
      %610 = vperm.xlu0 %609, %v341
      %v611 = vpop.permute.xlu0 %610
      %612 = vset.pattern.permute.xlu0 3
      %613 = vperm.xlu0 %612, %v342
      %v614 = vpop.permute.xlu0 %613
      %615 = vset.pattern.permute.xlu0 3
      %616 = vperm.xlu0 %615, %v343
      %v617 = vpop.permute.xlu0 %616
      %618 = vset.pattern.permute.xlu0 3
      %619 = vperm.xlu0 %618, %v344
      %v620 = vpop.permute.xlu0 %619
      %621 = vset.pattern.permute.xlu0 3
      %622 = vperm.xlu0 %621, %v345
      %v623 = vpop.permute.xlu0 %622
      %624 = vset.pattern.permute.xlu0 3
      %625 = vperm.xlu0 %624, %v346
      %v626 = vpop.permute.xlu0 %625
      %627 = vset.pattern.permute.xlu0 3
      %628 = vperm.xlu0 %627, %v347
      %v629 = vpop.permute.xlu0 %628
      %630 = vset.pattern.permute.xlu0 3
      %631 = vperm.xlu0 %630, %v348
      %v632 = vpop.permute.xlu0 %631
      %633 = vset.pattern.permute.xlu0 3
      %634 = vperm.xlu0 %633, %v349
      %v635 = vpop.permute.xlu0 %634
      %636 = vset.pattern.permute.xlu0 3
      %637 = vperm.xlu0 %636, %v350
      %v638 = vpop.permute.xlu0 %637
      %vm639 = vcmp.eq.s32.totalorder %v318, %v593
      %vm640 = vcmp.eq.s32.totalorder %v318, %v596
      %vm641 = vcmp.eq.s32.totalorder %v318, %v599
      %vm642 = vcmp.eq.s32.totalorder %v318, %v602
      %vm643 = vcmp.eq.s32.totalorder %v318, %v605
      %vm644 = vcmp.eq.s32.totalorder %v318, %v608
      %vm645 = vcmp.eq.s32.totalorder %v318, %v611
      %vm646 = vcmp.eq.s32.totalorder %v318, %v614
      %vm647 = vcmp.eq.s32.totalorder %v318, %v617
      %vm648 = vcmp.eq.s32.totalorder %v318, %v620
      %vm649 = vcmp.eq.s32.totalorder %v318, %v623
      %vm650 = vcmp.eq.s32.totalorder %v318, %v626
      %vm651 = vcmp.eq.s32.totalorder %v318, %v629
      %vm652 = vcmp.eq.s32.totalorder %v318, %v632
      %vm653 = vcmp.eq.s32.totalorder %v318, %v635
      %vm654 = vcmp.eq.s32.totalorder %v318, %v638
      %vm655 = vmor %vm575, %vm639
      %vm656 = vmor %vm576, %vm640
      %vm657 = vmor %vm577, %vm641
      %vm658 = vmor %vm578, %vm642
      %vm659 = vmor %vm579, %vm643
      %vm660 = vmor %vm580, %vm644
      %vm661 = vmor %vm581, %vm645
      %vm662 = vmor %vm582, %vm646
      %vm663 = vmor %vm583, %vm647
      %vm664 = vmor %vm584, %vm648
      %vm665 = vmor %vm585, %vm649
      %vm666 = vmor %vm586, %vm650
      %vm667 = vmor %vm587, %vm651
      %vm668 = vmor %vm588, %vm652
      %vm669 = vmor %vm589, %vm653
      %vm670 = vmor %vm590, %vm654
      %671 = vset.pattern.permute.xlu0 4
      %672 = vperm.xlu0 %671, %v335
      %v673 = vpop.permute.xlu0 %672
      %674 = vset.pattern.permute.xlu0 4
      %675 = vperm.xlu0 %674, %v336
      %v676 = vpop.permute.xlu0 %675
      %677 = vset.pattern.permute.xlu0 4
      %678 = vperm.xlu0 %677, %v337
      %v679 = vpop.permute.xlu0 %678
      %680 = vset.pattern.permute.xlu0 4
      %681 = vperm.xlu0 %680, %v338
      %v682 = vpop.permute.xlu0 %681
      %683 = vset.pattern.permute.xlu0 4
      %684 = vperm.xlu0 %683, %v339
      %v685 = vpop.permute.xlu0 %684
      %686 = vset.pattern.permute.xlu0 4
      %687 = vperm.xlu0 %686, %v340
      %v688 = vpop.permute.xlu0 %687
      %689 = vset.pattern.permute.xlu0 4
      %690 = vperm.xlu0 %689, %v341
      %v691 = vpop.permute.xlu0 %690
      %692 = vset.pattern.permute.xlu0 4
      %693 = vperm.xlu0 %692, %v342
      %v694 = vpop.permute.xlu0 %693
      %695 = vset.pattern.permute.xlu0 4
      %696 = vperm.xlu0 %695, %v343
      %v697 = vpop.permute.xlu0 %696
      %698 = vset.pattern.permute.xlu0 4
      %699 = vperm.xlu0 %698, %v344
      %v700 = vpop.permute.xlu0 %699
      %701 = vset.pattern.permute.xlu0 4
      %702 = vperm.xlu0 %701, %v345
      %v703 = vpop.permute.xlu0 %702
      %704 = vset.pattern.permute.xlu0 4
      %705 = vperm.xlu0 %704, %v346
      %v706 = vpop.permute.xlu0 %705
      %707 = vset.pattern.permute.xlu0 4
      %708 = vperm.xlu0 %707, %v347
      %v709 = vpop.permute.xlu0 %708
      %710 = vset.pattern.permute.xlu0 4
      %711 = vperm.xlu0 %710, %v348
      %v712 = vpop.permute.xlu0 %711
      %713 = vset.pattern.permute.xlu0 4
      %714 = vperm.xlu0 %713, %v349
      %v715 = vpop.permute.xlu0 %714
      %716 = vset.pattern.permute.xlu0 4
      %717 = vperm.xlu0 %716, %v350
      %v718 = vpop.permute.xlu0 %717
      %vm719 = vcmp.eq.s32.totalorder %v318, %v673
      %vm720 = vcmp.eq.s32.totalorder %v318, %v676
      %vm721 = vcmp.eq.s32.totalorder %v318, %v679
      %vm722 = vcmp.eq.s32.totalorder %v318, %v682
      %vm723 = vcmp.eq.s32.totalorder %v318, %v685
      %vm724 = vcmp.eq.s32.totalorder %v318, %v688
      %vm725 = vcmp.eq.s32.totalorder %v318, %v691
      %vm726 = vcmp.eq.s32.totalorder %v318, %v694
      %vm727 = vcmp.eq.s32.totalorder %v318, %v697
      %vm728 = vcmp.eq.s32.totalorder %v318, %v700
      %vm729 = vcmp.eq.s32.totalorder %v318, %v703
      %vm730 = vcmp.eq.s32.totalorder %v318, %v706
      %vm731 = vcmp.eq.s32.totalorder %v318, %v709
      %vm732 = vcmp.eq.s32.totalorder %v318, %v712
      %vm733 = vcmp.eq.s32.totalorder %v318, %v715
      %vm734 = vcmp.eq.s32.totalorder %v318, %v718
      %vm735 = vmor %vm655, %vm719
      %vm736 = vmor %vm656, %vm720
      %vm737 = vmor %vm657, %vm721
      %vm738 = vmor %vm658, %vm722
      %vm739 = vmor %vm659, %vm723
      %vm740 = vmor %vm660, %vm724
      %vm741 = vmor %vm661, %vm725
      %vm742 = vmor %vm662, %vm726
      %vm743 = vmor %vm663, %vm727
      %vm744 = vmor %vm664, %vm728
      %vm745 = vmor %vm665, %vm729
      %vm746 = vmor %vm666, %vm730
      %vm747 = vmor %vm667, %vm731
      %vm748 = vmor %vm668, %vm732
      %vm749 = vmor %vm669, %vm733
      %vm750 = vmor %vm670, %vm734
      %751 = vset.pattern.permute.xlu0 5
      %752 = vperm.xlu0 %751, %v335
      %v753 = vpop.permute.xlu0 %752
      %754 = vset.pattern.permute.xlu0 5
      %755 = vperm.xlu0 %754, %v336
      %v756 = vpop.permute.xlu0 %755
      %757 = vset.pattern.permute.xlu0 5
      %758 = vperm.xlu0 %757, %v337
      %v759 = vpop.permute.xlu0 %758
      %760 = vset.pattern.permute.xlu0 5
      %761 = vperm.xlu0 %760, %v338
      %v762 = vpop.permute.xlu0 %761
      %763 = vset.pattern.permute.xlu0 5
      %764 = vperm.xlu0 %763, %v339
      %v765 = vpop.permute.xlu0 %764
      %766 = vset.pattern.permute.xlu0 5
      %767 = vperm.xlu0 %766, %v340
      %v768 = vpop.permute.xlu0 %767
      %769 = vset.pattern.permute.xlu0 5
      %770 = vperm.xlu0 %769, %v341
      %v771 = vpop.permute.xlu0 %770
      %772 = vset.pattern.permute.xlu0 5
      %773 = vperm.xlu0 %772, %v342
      %v774 = vpop.permute.xlu0 %773
      %775 = vset.pattern.permute.xlu0 5
      %776 = vperm.xlu0 %775, %v343
      %v777 = vpop.permute.xlu0 %776
      %778 = vset.pattern.permute.xlu0 5
      %779 = vperm.xlu0 %778, %v344
      %v780 = vpop.permute.xlu0 %779
      %781 = vset.pattern.permute.xlu0 5
      %782 = vperm.xlu0 %781, %v345
      %v783 = vpop.permute.xlu0 %782
      %784 = vset.pattern.permute.xlu0 5
      %785 = vperm.xlu0 %784, %v346
      %v786 = vpop.permute.xlu0 %785
      %787 = vset.pattern.permute.xlu0 5
      %788 = vperm.xlu0 %787, %v347
      %v789 = vpop.permute.xlu0 %788
      %790 = vset.pattern.permute.xlu0 5
      %791 = vperm.xlu0 %790, %v348
      %v792 = vpop.permute.xlu0 %791
      %793 = vset.pattern.permute.xlu0 5
      %794 = vperm.xlu0 %793, %v349
      %v795 = vpop.permute.xlu0 %794
      %796 = vset.pattern.permute.xlu0 5
      %797 = vperm.xlu0 %796, %v350
      %v798 = vpop.permute.xlu0 %797
      %vm799 = vcmp.eq.s32.totalorder %v318, %v753
      %vm800 = vcmp.eq.s32.totalorder %v318, %v756
      %vm801 = vcmp.eq.s32.totalorder %v318, %v759
      %vm802 = vcmp.eq.s32.totalorder %v318, %v762
      %vm803 = vcmp.eq.s32.totalorder %v318, %v765
      %vm804 = vcmp.eq.s32.totalorder %v318, %v768
      %vm805 = vcmp.eq.s32.totalorder %v318, %v771
      %vm806 = vcmp.eq.s32.totalorder %v318, %v774
      %vm807 = vcmp.eq.s32.totalorder %v318, %v777
      %vm808 = vcmp.eq.s32.totalorder %v318, %v780
      %vm809 = vcmp.eq.s32.totalorder %v318, %v783
      %vm810 = vcmp.eq.s32.totalorder %v318, %v786
      %vm811 = vcmp.eq.s32.totalorder %v318, %v789
      %vm812 = vcmp.eq.s32.totalorder %v318, %v792
      %vm813 = vcmp.eq.s32.totalorder %v318, %v795
      %vm814 = vcmp.eq.s32.totalorder %v318, %v798
      %vm815 = vmor %vm735, %vm799
      %vm816 = vmor %vm736, %vm800
      %vm817 = vmor %vm737, %vm801
      %vm818 = vmor %vm738, %vm802
      %vm819 = vmor %vm739, %vm803
      %vm820 = vmor %vm740, %vm804
      %vm821 = vmor %vm741, %vm805
      %vm822 = vmor %vm742, %vm806
      %vm823 = vmor %vm743, %vm807
      %vm824 = vmor %vm744, %vm808
      %vm825 = vmor %vm745, %vm809
      %vm826 = vmor %vm746, %vm810
      %vm827 = vmor %vm747, %vm811
      %vm828 = vmor %vm748, %vm812
      %vm829 = vmor %vm749, %vm813
      %vm830 = vmor %vm750, %vm814
      %831 = vset.pattern.permute.xlu0 6
      %832 = vperm.xlu0 %831, %v335
      %v833 = vpop.permute.xlu0 %832
      %834 = vset.pattern.permute.xlu0 6
      %835 = vperm.xlu0 %834, %v336
      %v836 = vpop.permute.xlu0 %835
      %837 = vset.pattern.permute.xlu0 6
      %838 = vperm.xlu0 %837, %v337
      %v839 = vpop.permute.xlu0 %838
      %840 = vset.pattern.permute.xlu0 6
      %841 = vperm.xlu0 %840, %v338
      %v842 = vpop.permute.xlu0 %841
      %843 = vset.pattern.permute.xlu0 6
      %844 = vperm.xlu0 %843, %v339
      %v845 = vpop.permute.xlu0 %844
      %846 = vset.pattern.permute.xlu0 6
      %847 = vperm.xlu0 %846, %v340
      %v848 = vpop.permute.xlu0 %847
      %849 = vset.pattern.permute.xlu0 6
      %850 = vperm.xlu0 %849, %v341
      %v851 = vpop.permute.xlu0 %850
      %852 = vset.pattern.permute.xlu0 6
      %853 = vperm.xlu0 %852, %v342
      %v854 = vpop.permute.xlu0 %853
      %855 = vset.pattern.permute.xlu0 6
      %856 = vperm.xlu0 %855, %v343
      %v857 = vpop.permute.xlu0 %856
      %858 = vset.pattern.permute.xlu0 6
      %859 = vperm.xlu0 %858, %v344
      %v860 = vpop.permute.xlu0 %859
      %861 = vset.pattern.permute.xlu0 6
      %862 = vperm.xlu0 %861, %v345
      %v863 = vpop.permute.xlu0 %862
      %864 = vset.pattern.permute.xlu0 6
      %865 = vperm.xlu0 %864, %v346
      %v866 = vpop.permute.xlu0 %865
      %867 = vset.pattern.permute.xlu0 6
      %868 = vperm.xlu0 %867, %v347
      %v869 = vpop.permute.xlu0 %868
      %870 = vset.pattern.permute.xlu0 6
      %871 = vperm.xlu0 %870, %v348
      %v872 = vpop.permute.xlu0 %871
      %873 = vset.pattern.permute.xlu0 6
      %874 = vperm.xlu0 %873, %v349
      %v875 = vpop.permute.xlu0 %874
      %876 = vset.pattern.permute.xlu0 6
      %877 = vperm.xlu0 %876, %v350
      %v878 = vpop.permute.xlu0 %877
      %vm879 = vcmp.eq.s32.totalorder %v318, %v833
      %vm880 = vcmp.eq.s32.totalorder %v318, %v836
      %vm881 = vcmp.eq.s32.totalorder %v318, %v839
      %vm882 = vcmp.eq.s32.totalorder %v318, %v842
      %vm883 = vcmp.eq.s32.totalorder %v318, %v845
      %vm884 = vcmp.eq.s32.totalorder %v318, %v848
      %vm885 = vcmp.eq.s32.totalorder %v318, %v851
      %vm886 = vcmp.eq.s32.totalorder %v318, %v854
      %vm887 = vcmp.eq.s32.totalorder %v318, %v857
      %vm888 = vcmp.eq.s32.totalorder %v318, %v860
      %vm889 = vcmp.eq.s32.totalorder %v318, %v863
      %vm890 = vcmp.eq.s32.totalorder %v318, %v866
      %vm891 = vcmp.eq.s32.totalorder %v318, %v869
      %vm892 = vcmp.eq.s32.totalorder %v318, %v872
      %vm893 = vcmp.eq.s32.totalorder %v318, %v875
      %vm894 = vcmp.eq.s32.totalorder %v318, %v878
      %vm895 = vmor %vm815, %vm879
      %vm896 = vmor %vm816, %vm880
      %vm897 = vmor %vm817, %vm881
      %vm898 = vmor %vm818, %vm882
      %vm899 = vmor %vm819, %vm883
      %vm900 = vmor %vm820, %vm884
      %vm901 = vmor %vm821, %vm885
      %vm902 = vmor %vm822, %vm886
      %vm903 = vmor %vm823, %vm887
      %vm904 = vmor %vm824, %vm888
      %vm905 = vmor %vm825, %vm889
      %vm906 = vmor %vm826, %vm890
      %vm907 = vmor %vm827, %vm891
      %vm908 = vmor %vm828, %vm892
      %vm909 = vmor %vm829, %vm893
      %vm910 = vmor %vm830, %vm894
      %911 = vset.pattern.permute.xlu0 7
      %912 = vperm.xlu0 %911, %v335
      %v913 = vpop.permute.xlu0 %912
      %914 = vset.pattern.permute.xlu0 7
      %915 = vperm.xlu0 %914, %v336
      %v916 = vpop.permute.xlu0 %915
      %917 = vset.pattern.permute.xlu0 7
      %918 = vperm.xlu0 %917, %v337
      %v919 = vpop.permute.xlu0 %918
      %920 = vset.pattern.permute.xlu0 7
      %921 = vperm.xlu0 %920, %v338
      %v922 = vpop.permute.xlu0 %921
      %923 = vset.pattern.permute.xlu0 7
      %924 = vperm.xlu0 %923, %v339
      %v925 = vpop.permute.xlu0 %924
      %926 = vset.pattern.permute.xlu0 7
      %927 = vperm.xlu0 %926, %v340
      %v928 = vpop.permute.xlu0 %927
      %929 = vset.pattern.permute.xlu0 7
      %930 = vperm.xlu0 %929, %v341
      %v931 = vpop.permute.xlu0 %930
      %932 = vset.pattern.permute.xlu0 7
      %933 = vperm.xlu0 %932, %v342
      %v934 = vpop.permute.xlu0 %933
      %935 = vset.pattern.permute.xlu0 7
      %936 = vperm.xlu0 %935, %v343
      %v937 = vpop.permute.xlu0 %936
      %938 = vset.pattern.permute.xlu0 7
      %939 = vperm.xlu0 %938, %v344
      %v940 = vpop.permute.xlu0 %939
      %941 = vset.pattern.permute.xlu0 7
      %942 = vperm.xlu0 %941, %v345
      %v943 = vpop.permute.xlu0 %942
      %944 = vset.pattern.permute.xlu0 7
      %945 = vperm.xlu0 %944, %v346
      %v946 = vpop.permute.xlu0 %945
      %947 = vset.pattern.permute.xlu0 7
      %948 = vperm.xlu0 %947, %v347
      %v949 = vpop.permute.xlu0 %948
      %950 = vset.pattern.permute.xlu0 7
      %951 = vperm.xlu0 %950, %v348
      %v952 = vpop.permute.xlu0 %951
      %953 = vset.pattern.permute.xlu0 7
      %954 = vperm.xlu0 %953, %v349
      %v955 = vpop.permute.xlu0 %954
      %956 = vset.pattern.permute.xlu0 7
      %957 = vperm.xlu0 %956, %v350
      %v958 = vpop.permute.xlu0 %957
      %vm959 = vcmp.eq.s32.totalorder %v318, %v913
      %vm960 = vcmp.eq.s32.totalorder %v318, %v916
      %vm961 = vcmp.eq.s32.totalorder %v318, %v919
      %vm962 = vcmp.eq.s32.totalorder %v318, %v922
      %vm963 = vcmp.eq.s32.totalorder %v318, %v925
      %vm964 = vcmp.eq.s32.totalorder %v318, %v928
      %vm965 = vcmp.eq.s32.totalorder %v318, %v931
      %vm966 = vcmp.eq.s32.totalorder %v318, %v934
      %vm967 = vcmp.eq.s32.totalorder %v318, %v937
      %vm968 = vcmp.eq.s32.totalorder %v318, %v940
      %vm969 = vcmp.eq.s32.totalorder %v318, %v943
      %vm970 = vcmp.eq.s32.totalorder %v318, %v946
      %vm971 = vcmp.eq.s32.totalorder %v318, %v949
      %vm972 = vcmp.eq.s32.totalorder %v318, %v952
      %vm973 = vcmp.eq.s32.totalorder %v318, %v955
      %vm974 = vcmp.eq.s32.totalorder %v318, %v958
      %vm975 = vmor %vm895, %vm959
      %vm976 = vmor %vm896, %vm960
      %vm977 = vmor %vm897, %vm961
      %vm978 = vmor %vm898, %vm962
      %vm979 = vmor %vm899, %vm963
      %vm980 = vmor %vm900, %vm964
      %vm981 = vmor %vm901, %vm965
      %vm982 = vmor %vm902, %vm966
      %vm983 = vmor %vm903, %vm967
      %vm984 = vmor %vm904, %vm968
      %vm985 = vmor %vm905, %vm969
      %vm986 = vmor %vm906, %vm970
      %vm987 = vmor %vm907, %vm971
      %vm988 = vmor %vm908, %vm972
      %vm989 = vmor %vm909, %vm973
      %vm990 = vmor %vm910, %vm974
      %v991 = vsel %vm975, 0.0, -1e+30
      %v992 = vsel %vm976, 0.0, -1e+30
      %v993 = vsel %vm977, 0.0, -1e+30
      %v994 = vsel %vm978, 0.0, -1e+30
      %v995 = vsel %vm979, 0.0, -1e+30
      %v996 = vsel %vm980, 0.0, -1e+30
      %v997 = vsel %vm981, 0.0, -1e+30
      %v998 = vsel %vm982, 0.0, -1e+30
      %v999 = vsel %vm983, 0.0, -1e+30
      %v1000 = vsel %vm984, 0.0, -1e+30
      %v1001 = vsel %vm985, 0.0, -1e+30
      %v1002 = vsel %vm986, 0.0, -1e+30
      %v1003 = vsel %vm987, 0.0, -1e+30
      %v1004 = vsel %vm988, 0.0, -1e+30
      %v1005 = vsel %vm989, 0.0, -1e+30
      %v1006 = vsel %vm990, 0.0, -1e+30
      %v1007 = vld [vmem:[%s5] sm:$0xff]
      %v1008 = vld [vmem:[%s5 + $0x8] sm:$0x3]
      %v1009 = vld [vmem:[%s3] sm:$0xff]
      %v1010 = vld [vmem:[%s3 + $0x18] sm:$0xff]
      %v1011 = vld [vmem:[%s3 + $0x30] sm:$0xff]
      %v1012 = vld [vmem:[%s3 + $0x48] sm:$0xff]
      %v1013 = vperm.slane %v1007, 0
      %vm1014 = vcmask 261120
      %v1016 = vsel %vm1014, %v284, 0
      %v1019 = vsel %vm1014, %v285, 0
      %v1022 = vsel %vm1014, %v286, 0
      %v1025 = vsel %vm1014, %v287, 0
      %v1028 = vsel %vm1014, %v288, 0
      %v1031 = vsel %vm1014, %v289, 0
      %v1034 = vsel %vm1014, %v290, 0
      %v1037 = vsel %vm1014, %v291, 0
      %v1040 = vsel %vm1014, %v292, 0
      %v1043 = vsel %vm1014, %v293, 0
      %v1046 = vsel %vm1014, %v294, 0
      %v1049 = vsel %vm1014, %v295, 0
      %v1052 = vsel %vm1014, %v296, 0
      %v1055 = vsel %vm1014, %v297, 0
      %v1058 = vsel %vm1014, %v298, 0
      %v1061 = vsel %vm1014, %v299, 0
      %1063 = vmatpush.msra.mxu0 0.0
      %1064 = vmatpush.msra.mxu0 0.0
      %1065 = vmatpush.msra.mxu0 0.0
      %1066 = vmatpush.msra.mxu0 0.0
      %1067 = vmatpush.msra.mxu0 0.0
      %1068 = vmatpush.msra.mxu0 0.0
      %1069 = vmatpush.msra.mxu0 0.0
      %1070 = vmatpush.msra.mxu0 0.0
      %1071 = vmatpush.msra.mxu0 0.0
      %1072 = vmatpush.msra.mxu0 0.0
      %1073 = vmatpush.msra.mxu0 0.0
      %1074 = vmatpush.msra.mxu0 0.0
      %1075 = vmatpush.msra.mxu0 %v1012
      %1076 = vmatpush.msra.mxu0 %v1011
      %1077 = vmatpush.msra.mxu0 %v1010
      %1078 = vmatpush.msra.mxu0 %v1009
      %1079 = vmatmul.f32.gmra.mxu0 %v1016
      %v1080 = vpop.f32.mrf.mxu0
      %v1081 = vadd.f32 %v1013, %v1080
      %1082 = vmatmul.f32.gmra.mxu0 %v1019
      %v1083 = vpop.f32.mrf.mxu0
      %v1084 = vadd.f32 %v1013, %v1083
      %1085 = vmatmul.f32.gmra.mxu0 %v1022
      %v1086 = vpop.f32.mrf.mxu0
      %v1087 = vadd.f32 %v1013, %v1086
      %1088 = vmatmul.f32.gmra.mxu0 %v1025
      %v1089 = vpop.f32.mrf.mxu0
      %v1090 = vadd.f32 %v1013, %v1089
      %1091 = vmatmul.f32.gmra.mxu0 %v1028
      %v1092 = vpop.f32.mrf.mxu0
      %v1093 = vadd.f32 %v1013, %v1092
      %1094 = vmatmul.f32.gmra.mxu0 %v1031
      %v1095 = vpop.f32.mrf.mxu0
      %v1096 = vadd.f32 %v1013, %v1095
      %1097 = vmatmul.f32.gmra.mxu0 %v1034
      %v1098 = vpop.f32.mrf.mxu0
      %v1099 = vadd.f32 %v1013, %v1098
      %1100 = vmatmul.f32.gmra.mxu0 %v1037
      %v1101 = vpop.f32.mrf.mxu0
      %v1102 = vadd.f32 %v1013, %v1101
      %1103 = vmatmul.f32.gmra.mxu0 %v1040
      %v1104 = vpop.f32.mrf.mxu0
      %v1105 = vadd.f32 %v1013, %v1104
      %1106 = vmatmul.f32.gmra.mxu0 %v1043
      %v1107 = vpop.f32.mrf.mxu0
      %v1108 = vadd.f32 %v1013, %v1107
      %1109 = vmatmul.f32.gmra.mxu0 %v1046
      %v1110 = vpop.f32.mrf.mxu0
      %v1111 = vadd.f32 %v1013, %v1110
      %1112 = vmatmul.f32.gmra.mxu0 %v1049
      %v1113 = vpop.f32.mrf.mxu0
      %v1114 = vadd.f32 %v1013, %v1113
      %1115 = vmatmul.f32.gmra.mxu0 %v1052
      %v1116 = vpop.f32.mrf.mxu0
      %v1117 = vadd.f32 %v1013, %v1116
      %1118 = vmatmul.f32.gmra.mxu0 %v1055
      %v1119 = vpop.f32.mrf.mxu0
      %v1120 = vadd.f32 %v1013, %v1119
      %1121 = vmatmul.f32.gmra.mxu0 %v1058
      %v1122 = vpop.f32.mrf.mxu0
      %v1123 = vadd.f32 %v1013, %v1122
      %1124 = vmatmul.f32.gmra.mxu0 %v1061
      %v1125 = vpop.f32.mrf.mxu0
      %v1126 = vadd.f32 %v1013, %v1125
      %1127 = vdwg.mxu0
      %1144 = vrot.lane.b32.xlu0 %v1081, 96
      %v1145 = vpop.permute.xlu0 %1144
      %1146 = vrot.lane.b32.xlu0 %v1084, 96
      %v1147 = vpop.permute.xlu0 %1146
      %1148 = vrot.lane.b32.xlu0 %v1087, 96
      %v1149 = vpop.permute.xlu0 %1148
      %1150 = vrot.lane.b32.xlu0 %v1090, 96
      %v1151 = vpop.permute.xlu0 %1150
      %1152 = vrot.lane.b32.xlu0 %v1093, 96
      %v1153 = vpop.permute.xlu0 %1152
      %1154 = vrot.lane.b32.xlu0 %v1096, 96
      %v1155 = vpop.permute.xlu0 %1154
      %1156 = vrot.lane.b32.xlu0 %v1099, 96
      %v1157 = vpop.permute.xlu0 %1156
      %1158 = vrot.lane.b32.xlu0 %v1102, 96
      %v1159 = vpop.permute.xlu0 %1158
      %1160 = vrot.lane.b32.xlu0 %v1105, 96
      %v1161 = vpop.permute.xlu0 %1160
      %1162 = vrot.lane.b32.xlu0 %v1108, 96
      %v1163 = vpop.permute.xlu0 %1162
      %1164 = vrot.lane.b32.xlu0 %v1111, 96
      %v1165 = vpop.permute.xlu0 %1164
      %1166 = vrot.lane.b32.xlu0 %v1114, 96
      %v1167 = vpop.permute.xlu0 %1166
      %1168 = vrot.lane.b32.xlu0 %v1117, 96
      %v1169 = vpop.permute.xlu0 %1168
      %1170 = vrot.lane.b32.xlu0 %v1120, 96
      %v1171 = vpop.permute.xlu0 %1170
      %1172 = vrot.lane.b32.xlu0 %v1123, 96
      %v1173 = vpop.permute.xlu0 %1172
      %1174 = vrot.lane.b32.xlu0 %v1126, 96
      %v1175 = vpop.permute.xlu0 %1174
      %vm1176 = vcmask 64512
      %v1177 = vsel %vm1176, %v1081, 0
      %v1179 = vsel %vm1176, %v1084, 0
      %v1181 = vsel %vm1176, %v1087, 0
      %v1183 = vsel %vm1176, %v1090, 0
      %v1185 = vsel %vm1176, %v1093, 0
      %v1187 = vsel %vm1176, %v1096, 0
      %v1189 = vsel %vm1176, %v1099, 0
      %v1191 = vsel %vm1176, %v1102, 0
      %v1193 = vsel %vm1176, %v1105, 0
      %v1195 = vsel %vm1176, %v1108, 0
      %v1197 = vsel %vm1176, %v1111, 0
      %v1199 = vsel %vm1176, %v1114, 0
      %v1201 = vsel %vm1176, %v1117, 0
      %v1203 = vsel %vm1176, %v1120, 0
      %v1205 = vsel %vm1176, %v1123, 0
      %v1207 = vsel %vm1176, %v1126, 0
      %v1209 = vsel %vm1176, %v1145, 0
      %v1211 = vsel %vm1176, %v1147, 0
      %v1213 = vsel %vm1176, %v1149, 0
      %v1215 = vsel %vm1176, %v1151, 0
      %v1217 = vsel %vm1176, %v1153, 0
      %v1219 = vsel %vm1176, %v1155, 0
      %v1221 = vsel %vm1176, %v1157, 0
      %v1223 = vsel %vm1176, %v1159, 0
      %v1225 = vsel %vm1176, %v1161, 0
      %v1227 = vsel %vm1176, %v1163, 0
      %v1229 = vsel %vm1176, %v1165, 0
      %v1231 = vsel %vm1176, %v1167, 0
      %v1233 = vsel %vm1176, %v1169, 0
      %v1235 = vsel %vm1176, %v1171, 0
      %v1237 = vsel %vm1176, %v1173, 0
      %v1239 = vsel %vm1176, %v1175, 0
      %1241 = vmatpush.xpose.msra.mxu0 %v1239
      %1242 = vmatpush.xpose.msra.mxu0 %v1237
      %1243 = vmatpush.xpose.msra.mxu0 %v1235
      %1244 = vmatpush.xpose.msra.mxu0 %v1233
      %1245 = vmatpush.xpose.msra.mxu0 %v1231
      %1246 = vmatpush.xpose.msra.mxu0 %v1229
      %1247 = vmatpush.xpose.msra.mxu0 %v1227
      %1248 = vmatpush.xpose.msra.mxu0 %v1225
      %1249 = vmatpush.xpose.msra.mxu0 %v1223
      %1250 = vmatpush.xpose.msra.mxu0 %v1221
      %1251 = vmatpush.xpose.msra.mxu0 %v1219
      %1252 = vmatpush.xpose.msra.mxu0 %v1217
      %1253 = vmatpush.xpose.msra.mxu0 %v1215
      %1254 = vmatpush.xpose.msra.mxu0 %v1213
      %1255 = vmatpush.xpose.msra.mxu0 %v1211
      %1256 = vmatpush.xpose.msra.mxu0 %v1209
      %1257 = vmatmul.f32.gmra.mxu0 %v1177
      %v1258 = vpop.f32.mrf.mxu0
      %v1259 = vadd.f32 0.0, %v1258
      %1260 = vmatmul.f32.gmra.mxu0 %v1179
      %v1261 = vpop.f32.mrf.mxu0
      %v1262 = vadd.f32 0.0, %v1261
      %1263 = vmatmul.f32.gmra.mxu0 %v1181
      %v1264 = vpop.f32.mrf.mxu0
      %v1265 = vadd.f32 0.0, %v1264
      %1266 = vmatmul.f32.gmra.mxu0 %v1183
      %v1267 = vpop.f32.mrf.mxu0
      %v1268 = vadd.f32 0.0, %v1267
      %1269 = vmatmul.f32.gmra.mxu0 %v1185
      %v1270 = vpop.f32.mrf.mxu0
      %v1271 = vadd.f32 0.0, %v1270
      %1272 = vmatmul.f32.gmra.mxu0 %v1187
      %v1273 = vpop.f32.mrf.mxu0
      %v1274 = vadd.f32 0.0, %v1273
      %1275 = vmatmul.f32.gmra.mxu0 %v1189
      %v1276 = vpop.f32.mrf.mxu0
      %v1277 = vadd.f32 0.0, %v1276
      %1278 = vmatmul.f32.gmra.mxu0 %v1191
      %v1279 = vpop.f32.mrf.mxu0
      %v1280 = vadd.f32 0.0, %v1279
      %1281 = vmatmul.f32.gmra.mxu0 %v1193
      %v1282 = vpop.f32.mrf.mxu0
      %v1283 = vadd.f32 0.0, %v1282
      %1284 = vmatmul.f32.gmra.mxu0 %v1195
      %v1285 = vpop.f32.mrf.mxu0
      %v1286 = vadd.f32 0.0, %v1285
      %1287 = vmatmul.f32.gmra.mxu0 %v1197
      %v1288 = vpop.f32.mrf.mxu0
      %v1289 = vadd.f32 0.0, %v1288
      %1290 = vmatmul.f32.gmra.mxu0 %v1199
      %v1291 = vpop.f32.mrf.mxu0
      %v1292 = vadd.f32 0.0, %v1291
      %1293 = vmatmul.f32.gmra.mxu0 %v1201
      %v1294 = vpop.f32.mrf.mxu0
      %v1295 = vadd.f32 0.0, %v1294
      %1296 = vmatmul.f32.gmra.mxu0 %v1203
      %v1297 = vpop.f32.mrf.mxu0
      %v1298 = vadd.f32 0.0, %v1297
      %1299 = vmatmul.f32.gmra.mxu0 %v1205
      %v1300 = vpop.f32.mrf.mxu0
      %v1301 = vadd.f32 0.0, %v1300
      %1302 = vmatmul.f32.gmra.mxu0 %v1207
      %v1303 = vpop.f32.mrf.mxu0
      %v1304 = vadd.f32 0.0, %v1303
      %1305 = vdwg.mxu0
      %v1306 = vmul.f32 %v1259, 0.35355338
      %v1307 = vmul.f32 %v1262, 0.35355338
      %v1308 = vmul.f32 %v1265, 0.35355338
      %v1309 = vmul.f32 %v1268, 0.35355338
      %v1310 = vmul.f32 %v1271, 0.35355338
      %v1311 = vmul.f32 %v1274, 0.35355338
      %v1312 = vmul.f32 %v1277, 0.35355338
      %v1313 = vmul.f32 %v1280, 0.35355338
      %v1314 = vmul.f32 %v1283, 0.35355338
      %v1315 = vmul.f32 %v1286, 0.35355338
      %v1316 = vmul.f32 %v1289, 0.35355338
      %v1317 = vmul.f32 %v1292, 0.35355338
      %v1318 = vmul.f32 %v1295, 0.35355338
      %v1319 = vmul.f32 %v1298, 0.35355338
      %v1320 = vmul.f32 %v1301, 0.35355338
      %v1321 = vmul.f32 %v1304, 0.35355338
      %v1322 = vadd.f32 %v1306, %v991
      %v1323 = vadd.f32 %v1307, %v992
      %v1324 = vadd.f32 %v1308, %v993
      %v1325 = vadd.f32 %v1309, %v994
      %v1326 = vadd.f32 %v1310, %v995
      %v1327 = vadd.f32 %v1311, %v996
      %v1328 = vadd.f32 %v1312, %v997
      %v1329 = vadd.f32 %v1313, %v998
      %v1330 = vadd.f32 %v1314, %v999
      %v1331 = vadd.f32 %v1315, %v1000
      %v1332 = vadd.f32 %v1316, %v1001
      %v1333 = vadd.f32 %v1317, %v1002
      %v1334 = vadd.f32 %v1318, %v1003
      %v1335 = vadd.f32 %v1319, %v1004
      %v1336 = vadd.f32 %v1320, %v1005
      %v1337 = vadd.f32 %v1321, %v1006
      %1338 = vmax.xlane.f32.xlu0 %v1322
      %v1339 = vpop.xlane.xlu0 %1338
      %1340 = vmax.xlane.f32.xlu0 %v1323
      %v1341 = vpop.xlane.xlu0 %1340
      %1342 = vmax.xlane.f32.xlu0 %v1324
      %v1343 = vpop.xlane.xlu0 %1342
      %1344 = vmax.xlane.f32.xlu0 %v1325
      %v1345 = vpop.xlane.xlu0 %1344
      %1346 = vmax.xlane.f32.xlu0 %v1326
      %v1347 = vpop.xlane.xlu0 %1346
      %1348 = vmax.xlane.f32.xlu0 %v1327
      %v1349 = vpop.xlane.xlu0 %1348
      %1350 = vmax.xlane.f32.xlu0 %v1328
      %v1351 = vpop.xlane.xlu0 %1350
      %1352 = vmax.xlane.f32.xlu0 %v1329
      %v1353 = vpop.xlane.xlu0 %1352
      %1354 = vmax.xlane.f32.xlu0 %v1330
      %v1355 = vpop.xlane.xlu0 %1354
      %1356 = vmax.xlane.f32.xlu0 %v1331
      %v1357 = vpop.xlane.xlu0 %1356
      %1358 = vmax.xlane.f32.xlu0 %v1332
      %v1359 = vpop.xlane.xlu0 %1358
      %1360 = vmax.xlane.f32.xlu0 %v1333
      %v1361 = vpop.xlane.xlu0 %1360
      %1362 = vmax.xlane.f32.xlu0 %v1334
      %v1363 = vpop.xlane.xlu0 %1362
      %1364 = vmax.xlane.f32.xlu0 %v1335
      %v1365 = vpop.xlane.xlu0 %1364
      %1366 = vmax.xlane.f32.xlu0 %v1336
      %v1367 = vpop.xlane.xlu0 %1366
      %1368 = vmax.xlane.f32.xlu0 %v1337
      %v1369 = vpop.xlane.xlu0 %1368
      %v1370 = vsub.f32 %v1322, %v1339
      %v1371 = vsub.f32 %v1323, %v1341
      %v1372 = vsub.f32 %v1324, %v1343
      %v1373 = vsub.f32 %v1325, %v1345
      %v1374 = vsub.f32 %v1326, %v1347
      %v1375 = vsub.f32 %v1327, %v1349
      %v1376 = vsub.f32 %v1328, %v1351
      %v1377 = vsub.f32 %v1329, %v1353
      %v1378 = vsub.f32 %v1330, %v1355
      %v1379 = vsub.f32 %v1331, %v1357
      %v1380 = vsub.f32 %v1332, %v1359
      %v1381 = vsub.f32 %v1333, %v1361
      %v1382 = vsub.f32 %v1334, %v1363
      %v1383 = vsub.f32 %v1335, %v1365
      %v1384 = vsub.f32 %v1336, %v1367
      %v1385 = vsub.f32 %v1337, %v1369
      %v1386 = vmul.f32 %v1370, 1.442695
      %v1387 = vpow.pop %v1386
      %v1388 = vmul.f32 %v1371, 1.442695
      %v1389 = vpow.pop %v1388
      %v1390 = vmul.f32 %v1372, 1.442695
      %v1391 = vpow.pop %v1390
      %v1392 = vmul.f32 %v1373, 1.442695
      %v1393 = vpow.pop %v1392
      %v1394 = vmul.f32 %v1374, 1.442695
      %v1395 = vpow.pop %v1394
      %v1396 = vmul.f32 %v1375, 1.442695
      %v1397 = vpow.pop %v1396
      %v1398 = vmul.f32 %v1376, 1.442695
      %v1399 = vpow.pop %v1398
      %v1400 = vmul.f32 %v1377, 1.442695
      %v1401 = vpow.pop %v1400
      %v1402 = vmul.f32 %v1378, 1.442695
      %v1403 = vpow.pop %v1402
      %v1404 = vmul.f32 %v1379, 1.442695
      %v1405 = vpow.pop %v1404
      %v1406 = vmul.f32 %v1380, 1.442695
      %v1407 = vpow.pop %v1406
      %v1408 = vmul.f32 %v1381, 1.442695
      %v1409 = vpow.pop %v1408
      %v1410 = vmul.f32 %v1382, 1.442695
      %v1411 = vpow.pop %v1410
      %v1412 = vmul.f32 %v1383, 1.442695
      %v1413 = vpow.pop %v1412
      %v1414 = vmul.f32 %v1384, 1.442695
      %v1415 = vpow.pop %v1414
      %v1416 = vmul.f32 %v1385, 1.442695
      %v1417 = vpow.pop %v1416
      %1418 = vadd.xlane.f32.xlu0 %v1387
      %v1419 = vpop.xlane.xlu0 %1418
      %1420 = vadd.xlane.f32.xlu0 %v1389
      %v1421 = vpop.xlane.xlu0 %1420
      %1422 = vadd.xlane.f32.xlu0 %v1391
      %v1423 = vpop.xlane.xlu0 %1422
      %1424 = vadd.xlane.f32.xlu0 %v1393
      %v1425 = vpop.xlane.xlu0 %1424
      %1426 = vadd.xlane.f32.xlu0 %v1395
      %v1427 = vpop.xlane.xlu0 %1426
      %1428 = vadd.xlane.f32.xlu0 %v1397
      %v1429 = vpop.xlane.xlu0 %1428
      %1430 = vadd.xlane.f32.xlu0 %v1399
      %v1431 = vpop.xlane.xlu0 %1430
      %1432 = vadd.xlane.f32.xlu0 %v1401
      %v1433 = vpop.xlane.xlu0 %1432
      %1434 = vadd.xlane.f32.xlu0 %v1403
      %v1435 = vpop.xlane.xlu0 %1434
      %1436 = vadd.xlane.f32.xlu0 %v1405
      %v1437 = vpop.xlane.xlu0 %1436
      %1438 = vadd.xlane.f32.xlu0 %v1407
      %v1439 = vpop.xlane.xlu0 %1438
      %1440 = vadd.xlane.f32.xlu0 %v1409
      %v1441 = vpop.xlane.xlu0 %1440
      %1442 = vadd.xlane.f32.xlu0 %v1411
      %v1443 = vpop.xlane.xlu0 %1442
      %1444 = vadd.xlane.f32.xlu0 %v1413
      %v1445 = vpop.xlane.xlu0 %1444
      %1446 = vadd.xlane.f32.xlu0 %v1415
      %v1447 = vpop.xlane.xlu0 %1446
      %1448 = vadd.xlane.f32.xlu0 %v1417
      %v1449 = vpop.xlane.xlu0 %1448
      %v1450 = vrcp.pop %v1419
      %v1451 = vmul.f32 %v1419, %v1450
      %v1452 = vsub.f32 1.0, %v1451
      %v1453 = vmul.f32 %v1450, %v1452
      %v1454 = vadd.f32 %v1450, %v1453
      %vm1455 = vweird.f32 %v1419
      %vm1456 = vweird.f32 %v1450
      %vm1457 = vmor %vm1455, %vm1456
      %v1458 = vsel %vm1457, %v1450, %v1454
      %v1459 = vand.u32 2147483647, %v1419
      %vm1460 = vcmp.eq.f32.partialorder %v1459, 8.507059e+37
      %v1461 = vand.u32 %v1419, 2147483648
      %v1462 = vor.u32 1.1754944e-38, %v1461
      %v1463 = vsel %vm1460, %v1462, %v1458
      %v1464 = vmul.f32 %v1387, %v1463
      %v1465 = vrcp.pop %v1421
      %v1466 = vmul.f32 %v1421, %v1465
      %v1467 = vsub.f32 1.0, %v1466
      %v1468 = vmul.f32 %v1465, %v1467
      %v1469 = vadd.f32 %v1465, %v1468
      %vm1470 = vweird.f32 %v1421
      %vm1471 = vweird.f32 %v1465
      %vm1472 = vmor %vm1470, %vm1471
      %v1473 = vsel %vm1472, %v1465, %v1469
      %v1474 = vand.u32 2147483647, %v1421
      %vm1475 = vcmp.eq.f32.partialorder %v1474, 8.507059e+37
      %v1476 = vand.u32 %v1421, 2147483648
      %v1477 = vor.u32 1.1754944e-38, %v1476
      %v1478 = vsel %vm1475, %v1477, %v1473
      %v1479 = vmul.f32 %v1389, %v1478
      %v1480 = vrcp.pop %v1423
      %v1481 = vmul.f32 %v1423, %v1480
      %v1482 = vsub.f32 1.0, %v1481
      %v1483 = vmul.f32 %v1480, %v1482
      %v1484 = vadd.f32 %v1480, %v1483
      %vm1485 = vweird.f32 %v1423
      %vm1486 = vweird.f32 %v1480
      %vm1487 = vmor %vm1485, %vm1486
      %v1488 = vsel %vm1487, %v1480, %v1484
      %v1489 = vand.u32 2147483647, %v1423
      %vm1490 = vcmp.eq.f32.partialorder %v1489, 8.507059e+37
      %v1491 = vand.u32 %v1423, 2147483648
      %v1492 = vor.u32 1.1754944e-38, %v1491
      %v1493 = vsel %vm1490, %v1492, %v1488
      %v1494 = vmul.f32 %v1391, %v1493
      %v1495 = vrcp.pop %v1425
      %v1496 = vmul.f32 %v1425, %v1495
      %v1497 = vsub.f32 1.0, %v1496
      %v1498 = vmul.f32 %v1495, %v1497
      %v1499 = vadd.f32 %v1495, %v1498
      %vm1500 = vweird.f32 %v1425
      %vm1501 = vweird.f32 %v1495
      %vm1502 = vmor %vm1500, %vm1501
      %v1503 = vsel %vm1502, %v1495, %v1499
      %v1504 = vand.u32 2147483647, %v1425
      %vm1505 = vcmp.eq.f32.partialorder %v1504, 8.507059e+37
      %v1506 = vand.u32 %v1425, 2147483648
      %v1507 = vor.u32 1.1754944e-38, %v1506
      %v1508 = vsel %vm1505, %v1507, %v1503
      %v1509 = vmul.f32 %v1393, %v1508
      %v1510 = vrcp.pop %v1427
      %v1511 = vmul.f32 %v1427, %v1510
      %v1512 = vsub.f32 1.0, %v1511
      %v1513 = vmul.f32 %v1510, %v1512
      %v1514 = vadd.f32 %v1510, %v1513
      %vm1515 = vweird.f32 %v1427
      %vm1516 = vweird.f32 %v1510
      %vm1517 = vmor %vm1515, %vm1516
      %v1518 = vsel %vm1517, %v1510, %v1514
      %v1519 = vand.u32 2147483647, %v1427
      %vm1520 = vcmp.eq.f32.partialorder %v1519, 8.507059e+37
      %v1521 = vand.u32 %v1427, 2147483648
      %v1522 = vor.u32 1.1754944e-38, %v1521
      %v1523 = vsel %vm1520, %v1522, %v1518
      %v1524 = vmul.f32 %v1395, %v1523
      %v1525 = vrcp.pop %v1429
      %v1526 = vmul.f32 %v1429, %v1525
      %v1527 = vsub.f32 1.0, %v1526
      %v1528 = vmul.f32 %v1525, %v1527
      %v1529 = vadd.f32 %v1525, %v1528
      %vm1530 = vweird.f32 %v1429
      %vm1531 = vweird.f32 %v1525
      %vm1532 = vmor %vm1530, %vm1531
      %v1533 = vsel %vm1532, %v1525, %v1529
      %v1534 = vand.u32 2147483647, %v1429
      %vm1535 = vcmp.eq.f32.partialorder %v1534, 8.507059e+37
      %v1536 = vand.u32 %v1429, 2147483648
      %v1537 = vor.u32 1.1754944e-38, %v1536
      %v1538 = vsel %vm1535, %v1537, %v1533
      %v1539 = vmul.f32 %v1397, %v1538
      %v1540 = vrcp.pop %v1431
      %v1541 = vmul.f32 %v1431, %v1540
      %v1542 = vsub.f32 1.0, %v1541
      %v1543 = vmul.f32 %v1540, %v1542
      %v1544 = vadd.f32 %v1540, %v1543
      %vm1545 = vweird.f32 %v1431
      %vm1546 = vweird.f32 %v1540
      %vm1547 = vmor %vm1545, %vm1546
      %v1548 = vsel %vm1547, %v1540, %v1544
      %v1549 = vand.u32 2147483647, %v1431
      %vm1550 = vcmp.eq.f32.partialorder %v1549, 8.507059e+37
      %v1551 = vand.u32 %v1431, 2147483648
      %v1552 = vor.u32 1.1754944e-38, %v1551
      %v1553 = vsel %vm1550, %v1552, %v1548
      %v1554 = vmul.f32 %v1399, %v1553
      %v1555 = vrcp.pop %v1433
      %v1556 = vmul.f32 %v1433, %v1555
      %v1557 = vsub.f32 1.0, %v1556
      %v1558 = vmul.f32 %v1555, %v1557
      %v1559 = vadd.f32 %v1555, %v1558
      %vm1560 = vweird.f32 %v1433
      %vm1561 = vweird.f32 %v1555
      %vm1562 = vmor %vm1560, %vm1561
      %v1563 = vsel %vm1562, %v1555, %v1559
      %v1564 = vand.u32 2147483647, %v1433
      %vm1565 = vcmp.eq.f32.partialorder %v1564, 8.507059e+37
      %v1566 = vand.u32 %v1433, 2147483648
      %v1567 = vor.u32 1.1754944e-38, %v1566
      %v1568 = vsel %vm1565, %v1567, %v1563
      %v1569 = vmul.f32 %v1401, %v1568
      %v1570 = vrcp.pop %v1435
      %v1571 = vmul.f32 %v1435, %v1570
      %v1572 = vsub.f32 1.0, %v1571
      %v1573 = vmul.f32 %v1570, %v1572
      %v1574 = vadd.f32 %v1570, %v1573
      %vm1575 = vweird.f32 %v1435
      %vm1576 = vweird.f32 %v1570
      %vm1577 = vmor %vm1575, %vm1576
      %v1578 = vsel %vm1577, %v1570, %v1574
      %v1579 = vand.u32 2147483647, %v1435
      %vm1580 = vcmp.eq.f32.partialorder %v1579, 8.507059e+37
      %v1581 = vand.u32 %v1435, 2147483648
      %v1582 = vor.u32 1.1754944e-38, %v1581
      %v1583 = vsel %vm1580, %v1582, %v1578
      %v1584 = vmul.f32 %v1403, %v1583
      %v1585 = vrcp.pop %v1437
      %v1586 = vmul.f32 %v1437, %v1585
      %v1587 = vsub.f32 1.0, %v1586
      %v1588 = vmul.f32 %v1585, %v1587
      %v1589 = vadd.f32 %v1585, %v1588
      %vm1590 = vweird.f32 %v1437
      %vm1591 = vweird.f32 %v1585
      %vm1592 = vmor %vm1590, %vm1591
      %v1593 = vsel %vm1592, %v1585, %v1589
      %v1594 = vand.u32 2147483647, %v1437
      %vm1595 = vcmp.eq.f32.partialorder %v1594, 8.507059e+37
      %v1596 = vand.u32 %v1437, 2147483648
      %v1597 = vor.u32 1.1754944e-38, %v1596
      %v1598 = vsel %vm1595, %v1597, %v1593
      %v1599 = vmul.f32 %v1405, %v1598
      %v1600 = vrcp.pop %v1439
      %v1601 = vmul.f32 %v1439, %v1600
      %v1602 = vsub.f32 1.0, %v1601
      %v1603 = vmul.f32 %v1600, %v1602
      %v1604 = vadd.f32 %v1600, %v1603
      %vm1605 = vweird.f32 %v1439
      %vm1606 = vweird.f32 %v1600
      %vm1607 = vmor %vm1605, %vm1606
      %v1608 = vsel %vm1607, %v1600, %v1604
      %v1609 = vand.u32 2147483647, %v1439
      %vm1610 = vcmp.eq.f32.partialorder %v1609, 8.507059e+37
      %v1611 = vand.u32 %v1439, 2147483648
      %v1612 = vor.u32 1.1754944e-38, %v1611
      %v1613 = vsel %vm1610, %v1612, %v1608
      %v1614 = vmul.f32 %v1407, %v1613
      %v1615 = vrcp.pop %v1441
      %v1616 = vmul.f32 %v1441, %v1615
      %v1617 = vsub.f32 1.0, %v1616
      %v1618 = vmul.f32 %v1615, %v1617
      %v1619 = vadd.f32 %v1615, %v1618
      %vm1620 = vweird.f32 %v1441
      %vm1621 = vweird.f32 %v1615
      %vm1622 = vmor %vm1620, %vm1621
      %v1623 = vsel %vm1622, %v1615, %v1619
      %v1624 = vand.u32 2147483647, %v1441
      %vm1625 = vcmp.eq.f32.partialorder %v1624, 8.507059e+37
      %v1626 = vand.u32 %v1441, 2147483648
      %v1627 = vor.u32 1.1754944e-38, %v1626
      %v1628 = vsel %vm1625, %v1627, %v1623
      %v1629 = vmul.f32 %v1409, %v1628
      %v1630 = vrcp.pop %v1443
      %v1631 = vmul.f32 %v1443, %v1630
      %v1632 = vsub.f32 1.0, %v1631
      %v1633 = vmul.f32 %v1630, %v1632
      %v1634 = vadd.f32 %v1630, %v1633
      %vm1635 = vweird.f32 %v1443
      %vm1636 = vweird.f32 %v1630
      %vm1637 = vmor %vm1635, %vm1636
      %v1638 = vsel %vm1637, %v1630, %v1634
      %v1639 = vand.u32 2147483647, %v1443
      %vm1640 = vcmp.eq.f32.partialorder %v1639, 8.507059e+37
      %v1641 = vand.u32 %v1443, 2147483648
      %v1642 = vor.u32 1.1754944e-38, %v1641
      %v1643 = vsel %vm1640, %v1642, %v1638
      %v1644 = vmul.f32 %v1411, %v1643
      %v1645 = vrcp.pop %v1445
      %v1646 = vmul.f32 %v1445, %v1645
      %v1647 = vsub.f32 1.0, %v1646
      %v1648 = vmul.f32 %v1645, %v1647
      %v1649 = vadd.f32 %v1645, %v1648
      %vm1650 = vweird.f32 %v1445
      %vm1651 = vweird.f32 %v1645
      %vm1652 = vmor %vm1650, %vm1651
      %v1653 = vsel %vm1652, %v1645, %v1649
      %v1654 = vand.u32 2147483647, %v1445
      %vm1655 = vcmp.eq.f32.partialorder %v1654, 8.507059e+37
      %v1656 = vand.u32 %v1445, 2147483648
      %v1657 = vor.u32 1.1754944e-38, %v1656
      %v1658 = vsel %vm1655, %v1657, %v1653
      %v1659 = vmul.f32 %v1413, %v1658
      %v1660 = vrcp.pop %v1447
      %v1661 = vmul.f32 %v1447, %v1660
      %v1662 = vsub.f32 1.0, %v1661
      %v1663 = vmul.f32 %v1660, %v1662
      %v1664 = vadd.f32 %v1660, %v1663
      %vm1665 = vweird.f32 %v1447
      %vm1666 = vweird.f32 %v1660
      %vm1667 = vmor %vm1665, %vm1666
      %v1668 = vsel %vm1667, %v1660, %v1664
      %v1669 = vand.u32 2147483647, %v1447
      %vm1670 = vcmp.eq.f32.partialorder %v1669, 8.507059e+37
      %v1671 = vand.u32 %v1447, 2147483648
      %v1672 = vor.u32 1.1754944e-38, %v1671
      %v1673 = vsel %vm1670, %v1672, %v1668
      %v1674 = vmul.f32 %v1415, %v1673
      %v1675 = vrcp.pop %v1449
      %v1676 = vmul.f32 %v1449, %v1675
      %v1677 = vsub.f32 1.0, %v1676
      %v1678 = vmul.f32 %v1675, %v1677
      %v1679 = vadd.f32 %v1675, %v1678
      %vm1680 = vweird.f32 %v1449
      %vm1681 = vweird.f32 %v1675
      %vm1682 = vmor %vm1680, %vm1681
      %v1683 = vsel %vm1682, %v1675, %v1679
      %v1684 = vand.u32 2147483647, %v1449
      %vm1685 = vcmp.eq.f32.partialorder %v1684, 8.507059e+37
      %v1686 = vand.u32 %v1449, 2147483648
      %v1687 = vor.u32 1.1754944e-38, %v1686
      %v1688 = vsel %vm1685, %v1687, %v1683
      %v1689 = vmul.f32 %v1417, %v1688
      %1690 = vrot.lane.b32.xlu0 %v1081, 64
      %v1691 = vpop.permute.xlu0 %1690
      %1692 = vrot.lane.b32.xlu0 %v1084, 64
      %v1693 = vpop.permute.xlu0 %1692
      %1694 = vrot.lane.b32.xlu0 %v1087, 64
      %v1695 = vpop.permute.xlu0 %1694
      %1696 = vrot.lane.b32.xlu0 %v1090, 64
      %v1697 = vpop.permute.xlu0 %1696
      %1698 = vrot.lane.b32.xlu0 %v1093, 64
      %v1699 = vpop.permute.xlu0 %1698
      %1700 = vrot.lane.b32.xlu0 %v1096, 64
      %v1701 = vpop.permute.xlu0 %1700
      %1702 = vrot.lane.b32.xlu0 %v1099, 64
      %v1703 = vpop.permute.xlu0 %1702
      %1704 = vrot.lane.b32.xlu0 %v1102, 64
      %v1705 = vpop.permute.xlu0 %1704
      %1706 = vrot.lane.b32.xlu0 %v1105, 64
      %v1707 = vpop.permute.xlu0 %1706
      %1708 = vrot.lane.b32.xlu0 %v1108, 64
      %v1709 = vpop.permute.xlu0 %1708
      %1710 = vrot.lane.b32.xlu0 %v1111, 64
      %v1711 = vpop.permute.xlu0 %1710
      %1712 = vrot.lane.b32.xlu0 %v1114, 64
      %v1713 = vpop.permute.xlu0 %1712
      %1714 = vrot.lane.b32.xlu0 %v1117, 64
      %v1715 = vpop.permute.xlu0 %1714
      %1716 = vrot.lane.b32.xlu0 %v1120, 64
      %v1717 = vpop.permute.xlu0 %1716
      %1718 = vrot.lane.b32.xlu0 %v1123, 64
      %v1719 = vpop.permute.xlu0 %1718
      %1720 = vrot.lane.b32.xlu0 %v1126, 64
      %v1721 = vpop.permute.xlu0 %1720
      %1738 = vmatpush.msra.mxu0 %v1721
      %1739 = vmatpush.msra.mxu0 %v1719
      %1740 = vmatpush.msra.mxu0 %v1717
      %1741 = vmatpush.msra.mxu0 %v1715
      %1742 = vmatpush.msra.mxu0 %v1713
      %1743 = vmatpush.msra.mxu0 %v1711
      %1744 = vmatpush.msra.mxu0 %v1709
      %1745 = vmatpush.msra.mxu0 %v1707
      %1746 = vmatpush.msra.mxu0 %v1705
      %1747 = vmatpush.msra.mxu0 %v1703
      %1748 = vmatpush.msra.mxu0 %v1701
      %1749 = vmatpush.msra.mxu0 %v1699
      %1750 = vmatpush.msra.mxu0 %v1697
      %1751 = vmatpush.msra.mxu0 %v1695
      %1752 = vmatpush.msra.mxu0 %v1693
      %1753 = vmatpush.msra.mxu0 %v1691
      %1754 = vmatmul.f32.gmra.mxu0 %v1464
      %v1755 = vpop.f32.mrf.mxu0
      %v1756 = vadd.f32 0.0, %v1755
      %1757 = vmatmul.f32.gmra.mxu0 %v1479
      %v1758 = vpop.f32.mrf.mxu0
      %v1759 = vadd.f32 0.0, %v1758
      %1760 = vmatmul.f32.gmra.mxu0 %v1494
      %v1761 = vpop.f32.mrf.mxu0
      %v1762 = vadd.f32 0.0, %v1761
      %1763 = vmatmul.f32.gmra.mxu0 %v1509
      %v1764 = vpop.f32.mrf.mxu0
      %v1765 = vadd.f32 0.0, %v1764
      %1766 = vmatmul.f32.gmra.mxu0 %v1524
      %v1767 = vpop.f32.mrf.mxu0
      %v1768 = vadd.f32 0.0, %v1767
      %1769 = vmatmul.f32.gmra.mxu0 %v1539
      %v1770 = vpop.f32.mrf.mxu0
      %v1771 = vadd.f32 0.0, %v1770
      %1772 = vmatmul.f32.gmra.mxu0 %v1554
      %v1773 = vpop.f32.mrf.mxu0
      %v1774 = vadd.f32 0.0, %v1773
      %1775 = vmatmul.f32.gmra.mxu0 %v1569
      %v1776 = vpop.f32.mrf.mxu0
      %v1777 = vadd.f32 0.0, %v1776
      %1778 = vmatmul.f32.gmra.mxu0 %v1584
      %v1779 = vpop.f32.mrf.mxu0
      %v1780 = vadd.f32 0.0, %v1779
      %1781 = vmatmul.f32.gmra.mxu0 %v1599
      %v1782 = vpop.f32.mrf.mxu0
      %v1783 = vadd.f32 0.0, %v1782
      %1784 = vmatmul.f32.gmra.mxu0 %v1614
      %v1785 = vpop.f32.mrf.mxu0
      %v1786 = vadd.f32 0.0, %v1785
      %1787 = vmatmul.f32.gmra.mxu0 %v1629
      %v1788 = vpop.f32.mrf.mxu0
      %v1789 = vadd.f32 0.0, %v1788
      %1790 = vmatmul.f32.gmra.mxu0 %v1644
      %v1791 = vpop.f32.mrf.mxu0
      %v1792 = vadd.f32 0.0, %v1791
      %1793 = vmatmul.f32.gmra.mxu0 %v1659
      %v1794 = vpop.f32.mrf.mxu0
      %v1795 = vadd.f32 0.0, %v1794
      %1796 = vmatmul.f32.gmra.mxu0 %v1674
      %v1797 = vpop.f32.mrf.mxu0
      %v1798 = vadd.f32 0.0, %v1797
      %1799 = vmatmul.f32.gmra.mxu0 %v1689
      %v1800 = vpop.f32.mrf.mxu0
      %v1801 = vadd.f32 0.0, %v1800
      %1802 = vdwg.mxu0
      %1803 = vrot.lane.b32.xlu0 %v1081, 120
      %v1804 = vpop.permute.xlu0 %1803
      %1805 = vrot.lane.b32.xlu0 %v1084, 120
      %v1806 = vpop.permute.xlu0 %1805
      %1807 = vrot.lane.b32.xlu0 %v1087, 120
      %v1808 = vpop.permute.xlu0 %1807
      %1809 = vrot.lane.b32.xlu0 %v1090, 120
      %v1810 = vpop.permute.xlu0 %1809
      %1811 = vrot.lane.b32.xlu0 %v1093, 120
      %v1812 = vpop.permute.xlu0 %1811
      %1813 = vrot.lane.b32.xlu0 %v1096, 120
      %v1814 = vpop.permute.xlu0 %1813
      %1815 = vrot.lane.b32.xlu0 %v1099, 120
      %v1816 = vpop.permute.xlu0 %1815
      %1817 = vrot.lane.b32.xlu0 %v1102, 120
      %v1818 = vpop.permute.xlu0 %1817
      %1819 = vrot.lane.b32.xlu0 %v1105, 120
      %v1820 = vpop.permute.xlu0 %1819
      %1821 = vrot.lane.b32.xlu0 %v1108, 120
      %v1822 = vpop.permute.xlu0 %1821
      %1823 = vrot.lane.b32.xlu0 %v1111, 120
      %v1824 = vpop.permute.xlu0 %1823
      %1825 = vrot.lane.b32.xlu0 %v1114, 120
      %v1826 = vpop.permute.xlu0 %1825
      %1827 = vrot.lane.b32.xlu0 %v1117, 120
      %v1828 = vpop.permute.xlu0 %1827
      %1829 = vrot.lane.b32.xlu0 %v1120, 120
      %v1830 = vpop.permute.xlu0 %1829
      %1831 = vrot.lane.b32.xlu0 %v1123, 120
      %v1832 = vpop.permute.xlu0 %1831
      %1833 = vrot.lane.b32.xlu0 %v1126, 120
      %v1834 = vpop.permute.xlu0 %1833
      %1835 = vrot.lane.b32.xlu0 %v1081, 88
      %v1836 = vpop.permute.xlu0 %1835
      %1837 = vrot.lane.b32.xlu0 %v1084, 88
      %v1838 = vpop.permute.xlu0 %1837
      %1839 = vrot.lane.b32.xlu0 %v1087, 88
      %v1840 = vpop.permute.xlu0 %1839
      %1841 = vrot.lane.b32.xlu0 %v1090, 88
      %v1842 = vpop.permute.xlu0 %1841
      %1843 = vrot.lane.b32.xlu0 %v1093, 88
      %v1844 = vpop.permute.xlu0 %1843
      %1845 = vrot.lane.b32.xlu0 %v1096, 88
      %v1846 = vpop.permute.xlu0 %1845
      %1847 = vrot.lane.b32.xlu0 %v1099, 88
      %v1848 = vpop.permute.xlu0 %1847
      %1849 = vrot.lane.b32.xlu0 %v1102, 88
      %v1850 = vpop.permute.xlu0 %1849
      %1851 = vrot.lane.b32.xlu0 %v1105, 88
      %v1852 = vpop.permute.xlu0 %1851
      %1853 = vrot.lane.b32.xlu0 %v1108, 88
      %v1854 = vpop.permute.xlu0 %1853
      %1855 = vrot.lane.b32.xlu0 %v1111, 88
      %v1856 = vpop.permute.xlu0 %1855
      %1857 = vrot.lane.b32.xlu0 %v1114, 88
      %v1858 = vpop.permute.xlu0 %1857
      %1859 = vrot.lane.b32.xlu0 %v1117, 88
      %v1860 = vpop.permute.xlu0 %1859
      %1861 = vrot.lane.b32.xlu0 %v1120, 88
      %v1862 = vpop.permute.xlu0 %1861
      %1863 = vrot.lane.b32.xlu0 %v1123, 88
      %v1864 = vpop.permute.xlu0 %1863
      %1865 = vrot.lane.b32.xlu0 %v1126, 88
      %v1866 = vpop.permute.xlu0 %1865
      %v1867 = vsel %vm1176, %v1804, 0
      %v1869 = vsel %vm1176, %v1806, 0
      %v1871 = vsel %vm1176, %v1808, 0
      %v1873 = vsel %vm1176, %v1810, 0
      %v1875 = vsel %vm1176, %v1812, 0
      %v1877 = vsel %vm1176, %v1814, 0
      %v1879 = vsel %vm1176, %v1816, 0
      %v1881 = vsel %vm1176, %v1818, 0
      %v1883 = vsel %vm1176, %v1820, 0
      %v1885 = vsel %vm1176, %v1822, 0
      %v1887 = vsel %vm1176, %v1824, 0
      %v1889 = vsel %vm1176, %v1826, 0
      %v1891 = vsel %vm1176, %v1828, 0
      %v1893 = vsel %vm1176, %v1830, 0
      %v1895 = vsel %vm1176, %v1832, 0
      %v1897 = vsel %vm1176, %v1834, 0
      %v1899 = vsel %vm1176, %v1836, 0
      %v1901 = vsel %vm1176, %v1838, 0
      %v1903 = vsel %vm1176, %v1840, 0
      %v1905 = vsel %vm1176, %v1842, 0
      %v1907 = vsel %vm1176, %v1844, 0
      %v1909 = vsel %vm1176, %v1846, 0
      %v1911 = vsel %vm1176, %v1848, 0
      %v1913 = vsel %vm1176, %v1850, 0
      %v1915 = vsel %vm1176, %v1852, 0
      %v1917 = vsel %vm1176, %v1854, 0
      %v1919 = vsel %vm1176, %v1856, 0
      %v1921 = vsel %vm1176, %v1858, 0
      %v1923 = vsel %vm1176, %v1860, 0
      %v1925 = vsel %vm1176, %v1862, 0
      %v1927 = vsel %vm1176, %v1864, 0
      %v1929 = vsel %vm1176, %v1866, 0
      %1931 = vmatpush.xpose.msra.mxu0 %v1929
      %1932 = vmatpush.xpose.msra.mxu0 %v1927
      %1933 = vmatpush.xpose.msra.mxu0 %v1925
      %1934 = vmatpush.xpose.msra.mxu0 %v1923
      %1935 = vmatpush.xpose.msra.mxu0 %v1921
      %1936 = vmatpush.xpose.msra.mxu0 %v1919
      %1937 = vmatpush.xpose.msra.mxu0 %v1917
      %1938 = vmatpush.xpose.msra.mxu0 %v1915
      %1939 = vmatpush.xpose.msra.mxu0 %v1913
      %1940 = vmatpush.xpose.msra.mxu0 %v1911
      %1941 = vmatpush.xpose.msra.mxu0 %v1909
      %1942 = vmatpush.xpose.msra.mxu0 %v1907
      %1943 = vmatpush.xpose.msra.mxu0 %v1905
      %1944 = vmatpush.xpose.msra.mxu0 %v1903
      %1945 = vmatpush.xpose.msra.mxu0 %v1901
      %1946 = vmatpush.xpose.msra.mxu0 %v1899
      %1947 = vmatmul.f32.gmra.mxu0 %v1867
      %v1948 = vpop.f32.mrf.mxu0
      %v1949 = vadd.f32 0.0, %v1948
      %1950 = vmatmul.f32.gmra.mxu0 %v1869
      %v1951 = vpop.f32.mrf.mxu0
      %v1952 = vadd.f32 0.0, %v1951
      %1953 = vmatmul.f32.gmra.mxu0 %v1871
      %v1954 = vpop.f32.mrf.mxu0
      %v1955 = vadd.f32 0.0, %v1954
      %1956 = vmatmul.f32.gmra.mxu0 %v1873
      %v1957 = vpop.f32.mrf.mxu0
      %v1958 = vadd.f32 0.0, %v1957
      %1959 = vmatmul.f32.gmra.mxu0 %v1875
      %v1960 = vpop.f32.mrf.mxu0
      %v1961 = vadd.f32 0.0, %v1960
      %1962 = vmatmul.f32.gmra.mxu0 %v1877
      %v1963 = vpop.f32.mrf.mxu0
      %v1964 = vadd.f32 0.0, %v1963
      %1965 = vmatmul.f32.gmra.mxu0 %v1879
      %v1966 = vpop.f32.mrf.mxu0
      %v1967 = vadd.f32 0.0, %v1966
      %1968 = vmatmul.f32.gmra.mxu0 %v1881
      %v1969 = vpop.f32.mrf.mxu0
      %v1970 = vadd.f32 0.0, %v1969
      %1971 = vmatmul.f32.gmra.mxu0 %v1883
      %v1972 = vpop.f32.mrf.mxu0
      %v1973 = vadd.f32 0.0, %v1972
      %1974 = vmatmul.f32.gmra.mxu0 %v1885
      %v1975 = vpop.f32.mrf.mxu0
      %v1976 = vadd.f32 0.0, %v1975
      %1977 = vmatmul.f32.gmra.mxu0 %v1887
      %v1978 = vpop.f32.mrf.mxu0
      %v1979 = vadd.f32 0.0, %v1978
      %1980 = vmatmul.f32.gmra.mxu0 %v1889
      %v1981 = vpop.f32.mrf.mxu0
      %v1982 = vadd.f32 0.0, %v1981
      %1983 = vmatmul.f32.gmra.mxu0 %v1891
      %v1984 = vpop.f32.mrf.mxu0
      %v1985 = vadd.f32 0.0, %v1984
      %1986 = vmatmul.f32.gmra.mxu0 %v1893
      %v1987 = vpop.f32.mrf.mxu0
      %v1988 = vadd.f32 0.0, %v1987
      %1989 = vmatmul.f32.gmra.mxu0 %v1895
      %v1990 = vpop.f32.mrf.mxu0
      %v1991 = vadd.f32 0.0, %v1990
      %1992 = vmatmul.f32.gmra.mxu0 %v1897
      %v1993 = vpop.f32.mrf.mxu0
      %v1994 = vadd.f32 0.0, %v1993
      %1995 = vdwg.mxu0
      %v1996 = vmul.f32 %v1949, 0.35355338
      %v1997 = vmul.f32 %v1952, 0.35355338
      %v1998 = vmul.f32 %v1955, 0.35355338
      %v1999 = vmul.f32 %v1958, 0.35355338
      %v2000 = vmul.f32 %v1961, 0.35355338
      %v2001 = vmul.f32 %v1964, 0.35355338
      %v2002 = vmul.f32 %v1967, 0.35355338
      %v2003 = vmul.f32 %v1970, 0.35355338
      %v2004 = vmul.f32 %v1973, 0.35355338
      %v2005 = vmul.f32 %v1976, 0.35355338
      %v2006 = vmul.f32 %v1979, 0.35355338
      %v2007 = vmul.f32 %v1982, 0.35355338
      %v2008 = vmul.f32 %v1985, 0.35355338
      %v2009 = vmul.f32 %v1988, 0.35355338
      %v2010 = vmul.f32 %v1991, 0.35355338
      %v2011 = vmul.f32 %v1994, 0.35355338
      %v2012 = vadd.f32 %v1996, %v991
      %v2013 = vadd.f32 %v1997, %v992
      %v2014 = vadd.f32 %v1998, %v993
      %v2015 = vadd.f32 %v1999, %v994
      %v2016 = vadd.f32 %v2000, %v995
      %v2017 = vadd.f32 %v2001, %v996
      %v2018 = vadd.f32 %v2002, %v997
      %v2019 = vadd.f32 %v2003, %v998
      %v2020 = vadd.f32 %v2004, %v999
      %v2021 = vadd.f32 %v2005, %v1000
      %v2022 = vadd.f32 %v2006, %v1001
      %v2023 = vadd.f32 %v2007, %v1002
      %v2024 = vadd.f32 %v2008, %v1003
      %v2025 = vadd.f32 %v2009, %v1004
      %v2026 = vadd.f32 %v2010, %v1005
      %v2027 = vadd.f32 %v2011, %v1006
      %2028 = vmax.xlane.f32.xlu0 %v2012
      %v2029 = vpop.xlane.xlu0 %2028
      %2030 = vmax.xlane.f32.xlu0 %v2013
      %v2031 = vpop.xlane.xlu0 %2030
      %2032 = vmax.xlane.f32.xlu0 %v2014
      %v2033 = vpop.xlane.xlu0 %2032
      %2034 = vmax.xlane.f32.xlu0 %v2015
      %v2035 = vpop.xlane.xlu0 %2034
      %2036 = vmax.xlane.f32.xlu0 %v2016
      %v2037 = vpop.xlane.xlu0 %2036
      %2038 = vmax.xlane.f32.xlu0 %v2017
      %v2039 = vpop.xlane.xlu0 %2038
      %2040 = vmax.xlane.f32.xlu0 %v2018
      %v2041 = vpop.xlane.xlu0 %2040
      %2042 = vmax.xlane.f32.xlu0 %v2019
      %v2043 = vpop.xlane.xlu0 %2042
      %2044 = vmax.xlane.f32.xlu0 %v2020
      %v2045 = vpop.xlane.xlu0 %2044
      %2046 = vmax.xlane.f32.xlu0 %v2021
      %v2047 = vpop.xlane.xlu0 %2046
      %2048 = vmax.xlane.f32.xlu0 %v2022
      %v2049 = vpop.xlane.xlu0 %2048
      %2050 = vmax.xlane.f32.xlu0 %v2023
      %v2051 = vpop.xlane.xlu0 %2050
      %2052 = vmax.xlane.f32.xlu0 %v2024
      %v2053 = vpop.xlane.xlu0 %2052
      %2054 = vmax.xlane.f32.xlu0 %v2025
      %v2055 = vpop.xlane.xlu0 %2054
      %2056 = vmax.xlane.f32.xlu0 %v2026
      %v2057 = vpop.xlane.xlu0 %2056
      %2058 = vmax.xlane.f32.xlu0 %v2027
      %v2059 = vpop.xlane.xlu0 %2058
      %v2060 = vsub.f32 %v2012, %v2029
      %v2061 = vsub.f32 %v2013, %v2031
      %v2062 = vsub.f32 %v2014, %v2033
      %v2063 = vsub.f32 %v2015, %v2035
      %v2064 = vsub.f32 %v2016, %v2037
      %v2065 = vsub.f32 %v2017, %v2039
      %v2066 = vsub.f32 %v2018, %v2041
      %v2067 = vsub.f32 %v2019, %v2043
      %v2068 = vsub.f32 %v2020, %v2045
      %v2069 = vsub.f32 %v2021, %v2047
      %v2070 = vsub.f32 %v2022, %v2049
      %v2071 = vsub.f32 %v2023, %v2051
      %v2072 = vsub.f32 %v2024, %v2053
      %v2073 = vsub.f32 %v2025, %v2055
      %v2074 = vsub.f32 %v2026, %v2057
      %v2075 = vsub.f32 %v2027, %v2059
      %v2076 = vmul.f32 %v2060, 1.442695
      %v2077 = vpow.pop %v2076
      %v2078 = vmul.f32 %v2061, 1.442695
      %v2079 = vpow.pop %v2078
      %v2080 = vmul.f32 %v2062, 1.442695
      %v2081 = vpow.pop %v2080
      %v2082 = vmul.f32 %v2063, 1.442695
      %v2083 = vpow.pop %v2082
      %v2084 = vmul.f32 %v2064, 1.442695
      %v2085 = vpow.pop %v2084
      %v2086 = vmul.f32 %v2065, 1.442695
      %v2087 = vpow.pop %v2086
      %v2088 = vmul.f32 %v2066, 1.442695
      %v2089 = vpow.pop %v2088
      %v2090 = vmul.f32 %v2067, 1.442695
      %v2091 = vpow.pop %v2090
      %v2092 = vmul.f32 %v2068, 1.442695
      %v2093 = vpow.pop %v2092
      %v2094 = vmul.f32 %v2069, 1.442695
      %v2095 = vpow.pop %v2094
      %v2096 = vmul.f32 %v2070, 1.442695
      %v2097 = vpow.pop %v2096
      %v2098 = vmul.f32 %v2071, 1.442695
      %v2099 = vpow.pop %v2098
      %v2100 = vmul.f32 %v2072, 1.442695
      %v2101 = vpow.pop %v2100
      %v2102 = vmul.f32 %v2073, 1.442695
      %v2103 = vpow.pop %v2102
      %v2104 = vmul.f32 %v2074, 1.442695
      %v2105 = vpow.pop %v2104
      %v2106 = vmul.f32 %v2075, 1.442695
      %v2107 = vpow.pop %v2106
      %2108 = vadd.xlane.f32.xlu0 %v2077
      %v2109 = vpop.xlane.xlu0 %2108
      %2110 = vadd.xlane.f32.xlu0 %v2079
      %v2111 = vpop.xlane.xlu0 %2110
      %2112 = vadd.xlane.f32.xlu0 %v2081
      %v2113 = vpop.xlane.xlu0 %2112
      %2114 = vadd.xlane.f32.xlu0 %v2083
      %v2115 = vpop.xlane.xlu0 %2114
      %2116 = vadd.xlane.f32.xlu0 %v2085
      %v2117 = vpop.xlane.xlu0 %2116
      %2118 = vadd.xlane.f32.xlu0 %v2087
      %v2119 = vpop.xlane.xlu0 %2118
      %2120 = vadd.xlane.f32.xlu0 %v2089
      %v2121 = vpop.xlane.xlu0 %2120
      %2122 = vadd.xlane.f32.xlu0 %v2091
      %v2123 = vpop.xlane.xlu0 %2122
      %2124 = vadd.xlane.f32.xlu0 %v2093
      %v2125 = vpop.xlane.xlu0 %2124
      %2126 = vadd.xlane.f32.xlu0 %v2095
      %v2127 = vpop.xlane.xlu0 %2126
      %2128 = vadd.xlane.f32.xlu0 %v2097
      %v2129 = vpop.xlane.xlu0 %2128
      %2130 = vadd.xlane.f32.xlu0 %v2099
      %v2131 = vpop.xlane.xlu0 %2130
      %2132 = vadd.xlane.f32.xlu0 %v2101
      %v2133 = vpop.xlane.xlu0 %2132
      %2134 = vadd.xlane.f32.xlu0 %v2103
      %v2135 = vpop.xlane.xlu0 %2134
      %2136 = vadd.xlane.f32.xlu0 %v2105
      %v2137 = vpop.xlane.xlu0 %2136
      %2138 = vadd.xlane.f32.xlu0 %v2107
      %v2139 = vpop.xlane.xlu0 %2138
      %v2140 = vrcp.pop %v2109
      %v2141 = vmul.f32 %v2109, %v2140
      %v2142 = vsub.f32 1.0, %v2141
      %v2143 = vmul.f32 %v2140, %v2142
      %v2144 = vadd.f32 %v2140, %v2143
      %vm2145 = vweird.f32 %v2109
      %vm2146 = vweird.f32 %v2140
      %vm2147 = vmor %vm2145, %vm2146
      %v2148 = vsel %vm2147, %v2140, %v2144
      %v2149 = vand.u32 2147483647, %v2109
      %vm2150 = vcmp.eq.f32.partialorder %v2149, 8.507059e+37
      %v2151 = vand.u32 %v2109, 2147483648
      %v2152 = vor.u32 1.1754944e-38, %v2151
      %v2153 = vsel %vm2150, %v2152, %v2148
      %v2154 = vmul.f32 %v2077, %v2153
      %v2155 = vrcp.pop %v2111
      %v2156 = vmul.f32 %v2111, %v2155
      %v2157 = vsub.f32 1.0, %v2156
      %v2158 = vmul.f32 %v2155, %v2157
      %v2159 = vadd.f32 %v2155, %v2158
      %vm2160 = vweird.f32 %v2111
      %vm2161 = vweird.f32 %v2155
      %vm2162 = vmor %vm2160, %vm2161
      %v2163 = vsel %vm2162, %v2155, %v2159
      %v2164 = vand.u32 2147483647, %v2111
      %vm2165 = vcmp.eq.f32.partialorder %v2164, 8.507059e+37
      %v2166 = vand.u32 %v2111, 2147483648
      %v2167 = vor.u32 1.1754944e-38, %v2166
      %v2168 = vsel %vm2165, %v2167, %v2163
      %v2169 = vmul.f32 %v2079, %v2168
      %v2170 = vrcp.pop %v2113
      %v2171 = vmul.f32 %v2113, %v2170
      %v2172 = vsub.f32 1.0, %v2171
      %v2173 = vmul.f32 %v2170, %v2172
      %v2174 = vadd.f32 %v2170, %v2173
      %vm2175 = vweird.f32 %v2113
      %vm2176 = vweird.f32 %v2170
      %vm2177 = vmor %vm2175, %vm2176
      %v2178 = vsel %vm2177, %v2170, %v2174
      %v2179 = vand.u32 2147483647, %v2113
      %vm2180 = vcmp.eq.f32.partialorder %v2179, 8.507059e+37
      %v2181 = vand.u32 %v2113, 2147483648
      %v2182 = vor.u32 1.1754944e-38, %v2181
      %v2183 = vsel %vm2180, %v2182, %v2178
      %v2184 = vmul.f32 %v2081, %v2183
      %v2185 = vrcp.pop %v2115
      %v2186 = vmul.f32 %v2115, %v2185
      %v2187 = vsub.f32 1.0, %v2186
      %v2188 = vmul.f32 %v2185, %v2187
      %v2189 = vadd.f32 %v2185, %v2188
      %vm2190 = vweird.f32 %v2115
      %vm2191 = vweird.f32 %v2185
      %vm2192 = vmor %vm2190, %vm2191
      %v2193 = vsel %vm2192, %v2185, %v2189
      %v2194 = vand.u32 2147483647, %v2115
      %vm2195 = vcmp.eq.f32.partialorder %v2194, 8.507059e+37
      %v2196 = vand.u32 %v2115, 2147483648
      %v2197 = vor.u32 1.1754944e-38, %v2196
      %v2198 = vsel %vm2195, %v2197, %v2193
      %v2199 = vmul.f32 %v2083, %v2198
      %v2200 = vrcp.pop %v2117
      %v2201 = vmul.f32 %v2117, %v2200
      %v2202 = vsub.f32 1.0, %v2201
      %v2203 = vmul.f32 %v2200, %v2202
      %v2204 = vadd.f32 %v2200, %v2203
      %vm2205 = vweird.f32 %v2117
      %vm2206 = vweird.f32 %v2200
      %vm2207 = vmor %vm2205, %vm2206
      %v2208 = vsel %vm2207, %v2200, %v2204
      %v2209 = vand.u32 2147483647, %v2117
      %vm2210 = vcmp.eq.f32.partialorder %v2209, 8.507059e+37
      %v2211 = vand.u32 %v2117, 2147483648
      %v2212 = vor.u32 1.1754944e-38, %v2211
      %v2213 = vsel %vm2210, %v2212, %v2208
      %v2214 = vmul.f32 %v2085, %v2213
      %v2215 = vrcp.pop %v2119
      %v2216 = vmul.f32 %v2119, %v2215
      %v2217 = vsub.f32 1.0, %v2216
      %v2218 = vmul.f32 %v2215, %v2217
      %v2219 = vadd.f32 %v2215, %v2218
      %vm2220 = vweird.f32 %v2119
      %vm2221 = vweird.f32 %v2215
      %vm2222 = vmor %vm2220, %vm2221
      %v2223 = vsel %vm2222, %v2215, %v2219
      %v2224 = vand.u32 2147483647, %v2119
      %vm2225 = vcmp.eq.f32.partialorder %v2224, 8.507059e+37
      %v2226 = vand.u32 %v2119, 2147483648
      %v2227 = vor.u32 1.1754944e-38, %v2226
      %v2228 = vsel %vm2225, %v2227, %v2223
      %v2229 = vmul.f32 %v2087, %v2228
      %v2230 = vrcp.pop %v2121
      %v2231 = vmul.f32 %v2121, %v2230
      %v2232 = vsub.f32 1.0, %v2231
      %v2233 = vmul.f32 %v2230, %v2232
      %v2234 = vadd.f32 %v2230, %v2233
      %vm2235 = vweird.f32 %v2121
      %vm2236 = vweird.f32 %v2230
      %vm2237 = vmor %vm2235, %vm2236
      %v2238 = vsel %vm2237, %v2230, %v2234
      %v2239 = vand.u32 2147483647, %v2121
      %vm2240 = vcmp.eq.f32.partialorder %v2239, 8.507059e+37
      %v2241 = vand.u32 %v2121, 2147483648
      %v2242 = vor.u32 1.1754944e-38, %v2241
      %v2243 = vsel %vm2240, %v2242, %v2238
      %v2244 = vmul.f32 %v2089, %v2243
      %v2245 = vrcp.pop %v2123
      %v2246 = vmul.f32 %v2123, %v2245
      %v2247 = vsub.f32 1.0, %v2246
      %v2248 = vmul.f32 %v2245, %v2247
      %v2249 = vadd.f32 %v2245, %v2248
      %vm2250 = vweird.f32 %v2123
      %vm2251 = vweird.f32 %v2245
      %vm2252 = vmor %vm2250, %vm2251
      %v2253 = vsel %vm2252, %v2245, %v2249
      %v2254 = vand.u32 2147483647, %v2123
      %vm2255 = vcmp.eq.f32.partialorder %v2254, 8.507059e+37
      %v2256 = vand.u32 %v2123, 2147483648
      %v2257 = vor.u32 1.1754944e-38, %v2256
      %v2258 = vsel %vm2255, %v2257, %v2253
      %v2259 = vmul.f32 %v2091, %v2258
      %v2260 = vrcp.pop %v2125
      %v2261 = vmul.f32 %v2125, %v2260
      %v2262 = vsub.f32 1.0, %v2261
      %v2263 = vmul.f32 %v2260, %v2262
      %v2264 = vadd.f32 %v2260, %v2263
      %vm2265 = vweird.f32 %v2125
      %vm2266 = vweird.f32 %v2260
      %vm2267 = vmor %vm2265, %vm2266
      %v2268 = vsel %vm2267, %v2260, %v2264
      %v2269 = vand.u32 2147483647, %v2125
      %vm2270 = vcmp.eq.f32.partialorder %v2269, 8.507059e+37
      %v2271 = vand.u32 %v2125, 2147483648
      %v2272 = vor.u32 1.1754944e-38, %v2271
      %v2273 = vsel %vm2270, %v2272, %v2268
      %v2274 = vmul.f32 %v2093, %v2273
      %v2275 = vrcp.pop %v2127
      %v2276 = vmul.f32 %v2127, %v2275
      %v2277 = vsub.f32 1.0, %v2276
      %v2278 = vmul.f32 %v2275, %v2277
      %v2279 = vadd.f32 %v2275, %v2278
      %vm2280 = vweird.f32 %v2127
      %vm2281 = vweird.f32 %v2275
      %vm2282 = vmor %vm2280, %vm2281
      %v2283 = vsel %vm2282, %v2275, %v2279
      %v2284 = vand.u32 2147483647, %v2127
      %vm2285 = vcmp.eq.f32.partialorder %v2284, 8.507059e+37
      %v2286 = vand.u32 %v2127, 2147483648
      %v2287 = vor.u32 1.1754944e-38, %v2286
      %v2288 = vsel %vm2285, %v2287, %v2283
      %v2289 = vmul.f32 %v2095, %v2288
      %v2290 = vrcp.pop %v2129
      %v2291 = vmul.f32 %v2129, %v2290
      %v2292 = vsub.f32 1.0, %v2291
      %v2293 = vmul.f32 %v2290, %v2292
      %v2294 = vadd.f32 %v2290, %v2293
      %vm2295 = vweird.f32 %v2129
      %vm2296 = vweird.f32 %v2290
      %vm2297 = vmor %vm2295, %vm2296
      %v2298 = vsel %vm2297, %v2290, %v2294
      %v2299 = vand.u32 2147483647, %v2129
      %vm2300 = vcmp.eq.f32.partialorder %v2299, 8.507059e+37
      %v2301 = vand.u32 %v2129, 2147483648
      %v2302 = vor.u32 1.1754944e-38, %v2301
      %v2303 = vsel %vm2300, %v2302, %v2298
      %v2304 = vmul.f32 %v2097, %v2303
      %v2305 = vrcp.pop %v2131
      %v2306 = vmul.f32 %v2131, %v2305
      %v2307 = vsub.f32 1.0, %v2306
      %v2308 = vmul.f32 %v2305, %v2307
      %v2309 = vadd.f32 %v2305, %v2308
      %vm2310 = vweird.f32 %v2131
      %vm2311 = vweird.f32 %v2305
      %vm2312 = vmor %vm2310, %vm2311
      %v2313 = vsel %vm2312, %v2305, %v2309
      %v2314 = vand.u32 2147483647, %v2131
      %vm2315 = vcmp.eq.f32.partialorder %v2314, 8.507059e+37
      %v2316 = vand.u32 %v2131, 2147483648
      %v2317 = vor.u32 1.1754944e-38, %v2316
      %v2318 = vsel %vm2315, %v2317, %v2313
      %v2319 = vmul.f32 %v2099, %v2318
      %v2320 = vrcp.pop %v2133
      %v2321 = vmul.f32 %v2133, %v2320
      %v2322 = vsub.f32 1.0, %v2321
      %v2323 = vmul.f32 %v2320, %v2322
      %v2324 = vadd.f32 %v2320, %v2323
      %vm2325 = vweird.f32 %v2133
      %vm2326 = vweird.f32 %v2320
      %vm2327 = vmor %vm2325, %vm2326
      %v2328 = vsel %vm2327, %v2320, %v2324
      %v2329 = vand.u32 2147483647, %v2133
      %vm2330 = vcmp.eq.f32.partialorder %v2329, 8.507059e+37
      %v2331 = vand.u32 %v2133, 2147483648
      %v2332 = vor.u32 1.1754944e-38, %v2331
      %v2333 = vsel %vm2330, %v2332, %v2328
      %v2334 = vmul.f32 %v2101, %v2333
      %v2335 = vrcp.pop %v2135
      %v2336 = vmul.f32 %v2135, %v2335
      %v2337 = vsub.f32 1.0, %v2336
      %v2338 = vmul.f32 %v2335, %v2337
      %v2339 = vadd.f32 %v2335, %v2338
      %vm2340 = vweird.f32 %v2135
      %vm2341 = vweird.f32 %v2335
      %vm2342 = vmor %vm2340, %vm2341
      %v2343 = vsel %vm2342, %v2335, %v2339
      %v2344 = vand.u32 2147483647, %v2135
      %vm2345 = vcmp.eq.f32.partialorder %v2344, 8.507059e+37
      %v2346 = vand.u32 %v2135, 2147483648
      %v2347 = vor.u32 1.1754944e-38, %v2346
      %v2348 = vsel %vm2345, %v2347, %v2343
      %v2349 = vmul.f32 %v2103, %v2348
      %v2350 = vrcp.pop %v2137
      %v2351 = vmul.f32 %v2137, %v2350
      %v2352 = vsub.f32 1.0, %v2351
      %v2353 = vmul.f32 %v2350, %v2352
      %v2354 = vadd.f32 %v2350, %v2353
      %vm2355 = vweird.f32 %v2137
      %vm2356 = vweird.f32 %v2350
      %vm2357 = vmor %vm2355, %vm2356
      %v2358 = vsel %vm2357, %v2350, %v2354
      %v2359 = vand.u32 2147483647, %v2137
      %vm2360 = vcmp.eq.f32.partialorder %v2359, 8.507059e+37
      %v2361 = vand.u32 %v2137, 2147483648
      %v2362 = vor.u32 1.1754944e-38, %v2361
      %v2363 = vsel %vm2360, %v2362, %v2358
      %v2364 = vmul.f32 %v2105, %v2363
      %v2365 = vrcp.pop %v2139
      %v2366 = vmul.f32 %v2139, %v2365
      %v2367 = vsub.f32 1.0, %v2366
      %v2368 = vmul.f32 %v2365, %v2367
      %v2369 = vadd.f32 %v2365, %v2368
      %vm2370 = vweird.f32 %v2139
      %vm2371 = vweird.f32 %v2365
      %vm2372 = vmor %vm2370, %vm2371
      %v2373 = vsel %vm2372, %v2365, %v2369
      %v2374 = vand.u32 2147483647, %v2139
      %vm2375 = vcmp.eq.f32.partialorder %v2374, 8.507059e+37
      %v2376 = vand.u32 %v2139, 2147483648
      %v2377 = vor.u32 1.1754944e-38, %v2376
      %v2378 = vsel %vm2375, %v2377, %v2373
      %v2379 = vmul.f32 %v2107, %v2378
      %2380 = vrot.lane.b32.xlu0 %v1081, 56
      %v2381 = vpop.permute.xlu0 %2380
      %2382 = vrot.lane.b32.xlu0 %v1084, 56
      %v2383 = vpop.permute.xlu0 %2382
      %2384 = vrot.lane.b32.xlu0 %v1087, 56
      %v2385 = vpop.permute.xlu0 %2384
      %2386 = vrot.lane.b32.xlu0 %v1090, 56
      %v2387 = vpop.permute.xlu0 %2386
      %2388 = vrot.lane.b32.xlu0 %v1093, 56
      %v2389 = vpop.permute.xlu0 %2388
      %2390 = vrot.lane.b32.xlu0 %v1096, 56
      %v2391 = vpop.permute.xlu0 %2390
      %2392 = vrot.lane.b32.xlu0 %v1099, 56
      %v2393 = vpop.permute.xlu0 %2392
      %2394 = vrot.lane.b32.xlu0 %v1102, 56
      %v2395 = vpop.permute.xlu0 %2394
      %2396 = vrot.lane.b32.xlu0 %v1105, 56
      %v2397 = vpop.permute.xlu0 %2396
      %2398 = vrot.lane.b32.xlu0 %v1108, 56
      %v2399 = vpop.permute.xlu0 %2398
      %2400 = vrot.lane.b32.xlu0 %v1111, 56
      %v2401 = vpop.permute.xlu0 %2400
      %2402 = vrot.lane.b32.xlu0 %v1114, 56
      %v2403 = vpop.permute.xlu0 %2402
      %2404 = vrot.lane.b32.xlu0 %v1117, 56
      %v2405 = vpop.permute.xlu0 %2404
      %2406 = vrot.lane.b32.xlu0 %v1120, 56
      %v2407 = vpop.permute.xlu0 %2406
      %2408 = vrot.lane.b32.xlu0 %v1123, 56
      %v2409 = vpop.permute.xlu0 %2408
      %2410 = vrot.lane.b32.xlu0 %v1126, 56
      %v2411 = vpop.permute.xlu0 %2410
      %2428 = vmatpush.msra.mxu0 %v2411
      %2429 = vmatpush.msra.mxu0 %v2409
      %2430 = vmatpush.msra.mxu0 %v2407
      %2431 = vmatpush.msra.mxu0 %v2405
      %2432 = vmatpush.msra.mxu0 %v2403
      %2433 = vmatpush.msra.mxu0 %v2401
      %2434 = vmatpush.msra.mxu0 %v2399
      %2435 = vmatpush.msra.mxu0 %v2397
      %2436 = vmatpush.msra.mxu0 %v2395
      %2437 = vmatpush.msra.mxu0 %v2393
      %2438 = vmatpush.msra.mxu0 %v2391
      %2439 = vmatpush.msra.mxu0 %v2389
      %2440 = vmatpush.msra.mxu0 %v2387
      %2441 = vmatpush.msra.mxu0 %v2385
      %2442 = vmatpush.msra.mxu0 %v2383
      %2443 = vmatpush.msra.mxu0 %v2381
      %2444 = vmatmul.f32.gmra.mxu0 %v2154
      %v2445 = vpop.f32.mrf.mxu0
      %v2446 = vadd.f32 0.0, %v2445
      %2447 = vmatmul.f32.gmra.mxu0 %v2169
      %v2448 = vpop.f32.mrf.mxu0
      %v2449 = vadd.f32 0.0, %v2448
      %2450 = vmatmul.f32.gmra.mxu0 %v2184
      %v2451 = vpop.f32.mrf.mxu0
      %v2452 = vadd.f32 0.0, %v2451
      %2453 = vmatmul.f32.gmra.mxu0 %v2199
      %v2454 = vpop.f32.mrf.mxu0
      %v2455 = vadd.f32 0.0, %v2454
      %2456 = vmatmul.f32.gmra.mxu0 %v2214
      %v2457 = vpop.f32.mrf.mxu0
      %v2458 = vadd.f32 0.0, %v2457
      %2459 = vmatmul.f32.gmra.mxu0 %v2229
      %v2460 = vpop.f32.mrf.mxu0
      %v2461 = vadd.f32 0.0, %v2460
      %2462 = vmatmul.f32.gmra.mxu0 %v2244
      %v2463 = vpop.f32.mrf.mxu0
      %v2464 = vadd.f32 0.0, %v2463
      %2465 = vmatmul.f32.gmra.mxu0 %v2259
      %v2466 = vpop.f32.mrf.mxu0
      %v2467 = vadd.f32 0.0, %v2466
      %2468 = vmatmul.f32.gmra.mxu0 %v2274
      %v2469 = vpop.f32.mrf.mxu0
      %v2470 = vadd.f32 0.0, %v2469
      %2471 = vmatmul.f32.gmra.mxu0 %v2289
      %v2472 = vpop.f32.mrf.mxu0
      %v2473 = vadd.f32 0.0, %v2472
      %2474 = vmatmul.f32.gmra.mxu0 %v2304
      %v2475 = vpop.f32.mrf.mxu0
      %v2476 = vadd.f32 0.0, %v2475
      %2477 = vmatmul.f32.gmra.mxu0 %v2319
      %v2478 = vpop.f32.mrf.mxu0
      %v2479 = vadd.f32 0.0, %v2478
      %2480 = vmatmul.f32.gmra.mxu0 %v2334
      %v2481 = vpop.f32.mrf.mxu0
      %v2482 = vadd.f32 0.0, %v2481
      %2483 = vmatmul.f32.gmra.mxu0 %v2349
      %v2484 = vpop.f32.mrf.mxu0
      %v2485 = vadd.f32 0.0, %v2484
      %2486 = vmatmul.f32.gmra.mxu0 %v2364
      %v2487 = vpop.f32.mrf.mxu0
      %v2488 = vadd.f32 0.0, %v2487
      %2489 = vmatmul.f32.gmra.mxu0 %v2379
      %v2490 = vpop.f32.mrf.mxu0
      %v2491 = vadd.f32 0.0, %v2490
      %2492 = vdwg.mxu0
      %2493 = vrot.lane.b32.xlu0 %v1081, 112
      %v2494 = vpop.permute.xlu0 %2493
      %2495 = vrot.lane.b32.xlu0 %v1084, 112
      %v2496 = vpop.permute.xlu0 %2495
      %2497 = vrot.lane.b32.xlu0 %v1087, 112
      %v2498 = vpop.permute.xlu0 %2497
      %2499 = vrot.lane.b32.xlu0 %v1090, 112
      %v2500 = vpop.permute.xlu0 %2499
      %2501 = vrot.lane.b32.xlu0 %v1093, 112
      %v2502 = vpop.permute.xlu0 %2501
      %2503 = vrot.lane.b32.xlu0 %v1096, 112
      %v2504 = vpop.permute.xlu0 %2503
      %2505 = vrot.lane.b32.xlu0 %v1099, 112
      %v2506 = vpop.permute.xlu0 %2505
      %2507 = vrot.lane.b32.xlu0 %v1102, 112
      %v2508 = vpop.permute.xlu0 %2507
      %2509 = vrot.lane.b32.xlu0 %v1105, 112
      %v2510 = vpop.permute.xlu0 %2509
      %2511 = vrot.lane.b32.xlu0 %v1108, 112
      %v2512 = vpop.permute.xlu0 %2511
      %2513 = vrot.lane.b32.xlu0 %v1111, 112
      %v2514 = vpop.permute.xlu0 %2513
      %2515 = vrot.lane.b32.xlu0 %v1114, 112
      %v2516 = vpop.permute.xlu0 %2515
      %2517 = vrot.lane.b32.xlu0 %v1117, 112
      %v2518 = vpop.permute.xlu0 %2517
      %2519 = vrot.lane.b32.xlu0 %v1120, 112
      %v2520 = vpop.permute.xlu0 %2519
      %2521 = vrot.lane.b32.xlu0 %v1123, 112
      %v2522 = vpop.permute.xlu0 %2521
      %2523 = vrot.lane.b32.xlu0 %v1126, 112
      %v2524 = vpop.permute.xlu0 %2523
      %2525 = vrot.lane.b32.xlu0 %v1081, 80
      %v2526 = vpop.permute.xlu0 %2525
      %2527 = vrot.lane.b32.xlu0 %v1084, 80
      %v2528 = vpop.permute.xlu0 %2527
      %2529 = vrot.lane.b32.xlu0 %v1087, 80
      %v2530 = vpop.permute.xlu0 %2529
      %2531 = vrot.lane.b32.xlu0 %v1090, 80
      %v2532 = vpop.permute.xlu0 %2531
      %2533 = vrot.lane.b32.xlu0 %v1093, 80
      %v2534 = vpop.permute.xlu0 %2533
      %2535 = vrot.lane.b32.xlu0 %v1096, 80
      %v2536 = vpop.permute.xlu0 %2535
      %2537 = vrot.lane.b32.xlu0 %v1099, 80
      %v2538 = vpop.permute.xlu0 %2537
      %2539 = vrot.lane.b32.xlu0 %v1102, 80
      %v2540 = vpop.permute.xlu0 %2539
      %2541 = vrot.lane.b32.xlu0 %v1105, 80
      %v2542 = vpop.permute.xlu0 %2541
      %2543 = vrot.lane.b32.xlu0 %v1108, 80
      %v2544 = vpop.permute.xlu0 %2543
      %2545 = vrot.lane.b32.xlu0 %v1111, 80
      %v2546 = vpop.permute.xlu0 %2545
      %2547 = vrot.lane.b32.xlu0 %v1114, 80
      %v2548 = vpop.permute.xlu0 %2547
      %2549 = vrot.lane.b32.xlu0 %v1117, 80
      %v2550 = vpop.permute.xlu0 %2549
      %2551 = vrot.lane.b32.xlu0 %v1120, 80
      %v2552 = vpop.permute.xlu0 %2551
      %2553 = vrot.lane.b32.xlu0 %v1123, 80
      %v2554 = vpop.permute.xlu0 %2553
      %2555 = vrot.lane.b32.xlu0 %v1126, 80
      %v2556 = vpop.permute.xlu0 %2555
      %v2557 = vsel %vm1176, %v2494, 0
      %v2559 = vsel %vm1176, %v2496, 0
      %v2561 = vsel %vm1176, %v2498, 0
      %v2563 = vsel %vm1176, %v2500, 0
      %v2565 = vsel %vm1176, %v2502, 0
      %v2567 = vsel %vm1176, %v2504, 0
      %v2569 = vsel %vm1176, %v2506, 0
      %v2571 = vsel %vm1176, %v2508, 0
      %v2573 = vsel %vm1176, %v2510, 0
      %v2575 = vsel %vm1176, %v2512, 0
      %v2577 = vsel %vm1176, %v2514, 0
      %v2579 = vsel %vm1176, %v2516, 0
      %v2581 = vsel %vm1176, %v2518, 0
      %v2583 = vsel %vm1176, %v2520, 0
      %v2585 = vsel %vm1176, %v2522, 0
      %v2587 = vsel %vm1176, %v2524, 0
      %v2589 = vsel %vm1176, %v2526, 0
      %v2591 = vsel %vm1176, %v2528, 0
      %v2593 = vsel %vm1176, %v2530, 0
      %v2595 = vsel %vm1176, %v2532, 0
      %v2597 = vsel %vm1176, %v2534, 0
      %v2599 = vsel %vm1176, %v2536, 0
      %v2601 = vsel %vm1176, %v2538, 0
      %v2603 = vsel %vm1176, %v2540, 0
      %v2605 = vsel %vm1176, %v2542, 0
      %v2607 = vsel %vm1176, %v2544, 0
      %v2609 = vsel %vm1176, %v2546, 0
      %v2611 = vsel %vm1176, %v2548, 0
      %v2613 = vsel %vm1176, %v2550, 0
      %v2615 = vsel %vm1176, %v2552, 0
      %v2617 = vsel %vm1176, %v2554, 0
      %v2619 = vsel %vm1176, %v2556, 0
      %2621 = vmatpush.xpose.msra.mxu0 %v2619
      %2622 = vmatpush.xpose.msra.mxu0 %v2617
      %2623 = vmatpush.xpose.msra.mxu0 %v2615
      %2624 = vmatpush.xpose.msra.mxu0 %v2613
      %2625 = vmatpush.xpose.msra.mxu0 %v2611
      %2626 = vmatpush.xpose.msra.mxu0 %v2609
      %2627 = vmatpush.xpose.msra.mxu0 %v2607
      %2628 = vmatpush.xpose.msra.mxu0 %v2605
      %2629 = vmatpush.xpose.msra.mxu0 %v2603
      %2630 = vmatpush.xpose.msra.mxu0 %v2601
      %2631 = vmatpush.xpose.msra.mxu0 %v2599
      %2632 = vmatpush.xpose.msra.mxu0 %v2597
      %2633 = vmatpush.xpose.msra.mxu0 %v2595
      %2634 = vmatpush.xpose.msra.mxu0 %v2593
      %2635 = vmatpush.xpose.msra.mxu0 %v2591
      %2636 = vmatpush.xpose.msra.mxu0 %v2589
      %2637 = vmatmul.f32.gmra.mxu0 %v2557
      %v2638 = vpop.f32.mrf.mxu0
      %v2639 = vadd.f32 0.0, %v2638
      %2640 = vmatmul.f32.gmra.mxu0 %v2559
      %v2641 = vpop.f32.mrf.mxu0
      %v2642 = vadd.f32 0.0, %v2641
      %2643 = vmatmul.f32.gmra.mxu0 %v2561
      %v2644 = vpop.f32.mrf.mxu0
      %v2645 = vadd.f32 0.0, %v2644
      %2646 = vmatmul.f32.gmra.mxu0 %v2563
      %v2647 = vpop.f32.mrf.mxu0
      %v2648 = vadd.f32 0.0, %v2647
      %2649 = vmatmul.f32.gmra.mxu0 %v2565
      %v2650 = vpop.f32.mrf.mxu0
      %v2651 = vadd.f32 0.0, %v2650
      %2652 = vmatmul.f32.gmra.mxu0 %v2567
      %v2653 = vpop.f32.mrf.mxu0
      %v2654 = vadd.f32 0.0, %v2653
      %2655 = vmatmul.f32.gmra.mxu0 %v2569
      %v2656 = vpop.f32.mrf.mxu0
      %v2657 = vadd.f32 0.0, %v2656
      %2658 = vmatmul.f32.gmra.mxu0 %v2571
      %v2659 = vpop.f32.mrf.mxu0
      %v2660 = vadd.f32 0.0, %v2659
      %2661 = vmatmul.f32.gmra.mxu0 %v2573
      %v2662 = vpop.f32.mrf.mxu0
      %v2663 = vadd.f32 0.0, %v2662
      %2664 = vmatmul.f32.gmra.mxu0 %v2575
      %v2665 = vpop.f32.mrf.mxu0
      %v2666 = vadd.f32 0.0, %v2665
      %2667 = vmatmul.f32.gmra.mxu0 %v2577
      %v2668 = vpop.f32.mrf.mxu0
      %v2669 = vadd.f32 0.0, %v2668
      %2670 = vmatmul.f32.gmra.mxu0 %v2579
      %v2671 = vpop.f32.mrf.mxu0
      %v2672 = vadd.f32 0.0, %v2671
      %2673 = vmatmul.f32.gmra.mxu0 %v2581
      %v2674 = vpop.f32.mrf.mxu0
      %v2675 = vadd.f32 0.0, %v2674
      %2676 = vmatmul.f32.gmra.mxu0 %v2583
      %v2677 = vpop.f32.mrf.mxu0
      %v2678 = vadd.f32 0.0, %v2677
      %2679 = vmatmul.f32.gmra.mxu0 %v2585
      %v2680 = vpop.f32.mrf.mxu0
      %v2681 = vadd.f32 0.0, %v2680
      %2682 = vmatmul.f32.gmra.mxu0 %v2587
      %v2683 = vpop.f32.mrf.mxu0
      %v2684 = vadd.f32 0.0, %v2683
      %2685 = vdwg.mxu0
      %v2686 = vmul.f32 %v2639, 0.35355338
      %v2687 = vmul.f32 %v2642, 0.35355338
      %v2688 = vmul.f32 %v2645, 0.35355338
      %v2689 = vmul.f32 %v2648, 0.35355338
      %v2690 = vmul.f32 %v2651, 0.35355338
      %v2691 = vmul.f32 %v2654, 0.35355338
      %v2692 = vmul.f32 %v2657, 0.35355338
      %v2693 = vmul.f32 %v2660, 0.35355338
      %v2694 = vmul.f32 %v2663, 0.35355338
      %v2695 = vmul.f32 %v2666, 0.35355338
      %v2696 = vmul.f32 %v2669, 0.35355338
      %v2697 = vmul.f32 %v2672, 0.35355338
      %v2698 = vmul.f32 %v2675, 0.35355338
      %v2699 = vmul.f32 %v2678, 0.35355338
      %v2700 = vmul.f32 %v2681, 0.35355338
      %v2701 = vmul.f32 %v2684, 0.35355338
      %v2702 = vadd.f32 %v2686, %v991
      %v2703 = vadd.f32 %v2687, %v992
      %v2704 = vadd.f32 %v2688, %v993
      %v2705 = vadd.f32 %v2689, %v994
      %v2706 = vadd.f32 %v2690, %v995
      %v2707 = vadd.f32 %v2691, %v996
      %v2708 = vadd.f32 %v2692, %v997
      %v2709 = vadd.f32 %v2693, %v998
      %v2710 = vadd.f32 %v2694, %v999
      %v2711 = vadd.f32 %v2695, %v1000
      %v2712 = vadd.f32 %v2696, %v1001
      %v2713 = vadd.f32 %v2697, %v1002
      %v2714 = vadd.f32 %v2698, %v1003
      %v2715 = vadd.f32 %v2699, %v1004
      %v2716 = vadd.f32 %v2700, %v1005
      %v2717 = vadd.f32 %v2701, %v1006
      %2718 = vmax.xlane.f32.xlu0 %v2702
      %v2719 = vpop.xlane.xlu0 %2718
      %2720 = vmax.xlane.f32.xlu0 %v2703
      %v2721 = vpop.xlane.xlu0 %2720
      %2722 = vmax.xlane.f32.xlu0 %v2704
      %v2723 = vpop.xlane.xlu0 %2722
      %2724 = vmax.xlane.f32.xlu0 %v2705
      %v2725 = vpop.xlane.xlu0 %2724
      %2726 = vmax.xlane.f32.xlu0 %v2706
      %v2727 = vpop.xlane.xlu0 %2726
      %2728 = vmax.xlane.f32.xlu0 %v2707
      %v2729 = vpop.xlane.xlu0 %2728
      %2730 = vmax.xlane.f32.xlu0 %v2708
      %v2731 = vpop.xlane.xlu0 %2730
      %2732 = vmax.xlane.f32.xlu0 %v2709
      %v2733 = vpop.xlane.xlu0 %2732
      %2734 = vmax.xlane.f32.xlu0 %v2710
      %v2735 = vpop.xlane.xlu0 %2734
      %2736 = vmax.xlane.f32.xlu0 %v2711
      %v2737 = vpop.xlane.xlu0 %2736
      %2738 = vmax.xlane.f32.xlu0 %v2712
      %v2739 = vpop.xlane.xlu0 %2738
      %2740 = vmax.xlane.f32.xlu0 %v2713
      %v2741 = vpop.xlane.xlu0 %2740
      %2742 = vmax.xlane.f32.xlu0 %v2714
      %v2743 = vpop.xlane.xlu0 %2742
      %2744 = vmax.xlane.f32.xlu0 %v2715
      %v2745 = vpop.xlane.xlu0 %2744
      %2746 = vmax.xlane.f32.xlu0 %v2716
      %v2747 = vpop.xlane.xlu0 %2746
      %2748 = vmax.xlane.f32.xlu0 %v2717
      %v2749 = vpop.xlane.xlu0 %2748
      %v2750 = vsub.f32 %v2702, %v2719
      %v2751 = vsub.f32 %v2703, %v2721
      %v2752 = vsub.f32 %v2704, %v2723
      %v2753 = vsub.f32 %v2705, %v2725
      %v2754 = vsub.f32 %v2706, %v2727
      %v2755 = vsub.f32 %v2707, %v2729
      %v2756 = vsub.f32 %v2708, %v2731
      %v2757 = vsub.f32 %v2709, %v2733
      %v2758 = vsub.f32 %v2710, %v2735
      %v2759 = vsub.f32 %v2711, %v2737
      %v2760 = vsub.f32 %v2712, %v2739
      %v2761 = vsub.f32 %v2713, %v2741
      %v2762 = vsub.f32 %v2714, %v2743
      %v2763 = vsub.f32 %v2715, %v2745
      %v2764 = vsub.f32 %v2716, %v2747
      %v2765 = vsub.f32 %v2717, %v2749
      %v2766 = vmul.f32 %v2750, 1.442695
      %v2767 = vpow.pop %v2766
      %v2768 = vmul.f32 %v2751, 1.442695
      %v2769 = vpow.pop %v2768
      %v2770 = vmul.f32 %v2752, 1.442695
      %v2771 = vpow.pop %v2770
      %v2772 = vmul.f32 %v2753, 1.442695
      %v2773 = vpow.pop %v2772
      %v2774 = vmul.f32 %v2754, 1.442695
      %v2775 = vpow.pop %v2774
      %v2776 = vmul.f32 %v2755, 1.442695
      %v2777 = vpow.pop %v2776
      %v2778 = vmul.f32 %v2756, 1.442695
      %v2779 = vpow.pop %v2778
      %v2780 = vmul.f32 %v2757, 1.442695
      %v2781 = vpow.pop %v2780
      %v2782 = vmul.f32 %v2758, 1.442695
      %v2783 = vpow.pop %v2782
      %v2784 = vmul.f32 %v2759, 1.442695
      %v2785 = vpow.pop %v2784
      %v2786 = vmul.f32 %v2760, 1.442695
      %v2787 = vpow.pop %v2786
      %v2788 = vmul.f32 %v2761, 1.442695
      %v2789 = vpow.pop %v2788
      %v2790 = vmul.f32 %v2762, 1.442695
      %v2791 = vpow.pop %v2790
      %v2792 = vmul.f32 %v2763, 1.442695
      %v2793 = vpow.pop %v2792
      %v2794 = vmul.f32 %v2764, 1.442695
      %v2795 = vpow.pop %v2794
      %v2796 = vmul.f32 %v2765, 1.442695
      %v2797 = vpow.pop %v2796
      %2798 = vadd.xlane.f32.xlu0 %v2767
      %v2799 = vpop.xlane.xlu0 %2798
      %2800 = vadd.xlane.f32.xlu0 %v2769
      %v2801 = vpop.xlane.xlu0 %2800
      %2802 = vadd.xlane.f32.xlu0 %v2771
      %v2803 = vpop.xlane.xlu0 %2802
      %2804 = vadd.xlane.f32.xlu0 %v2773
      %v2805 = vpop.xlane.xlu0 %2804
      %2806 = vadd.xlane.f32.xlu0 %v2775
      %v2807 = vpop.xlane.xlu0 %2806
      %2808 = vadd.xlane.f32.xlu0 %v2777
      %v2809 = vpop.xlane.xlu0 %2808
      %2810 = vadd.xlane.f32.xlu0 %v2779
      %v2811 = vpop.xlane.xlu0 %2810
      %2812 = vadd.xlane.f32.xlu0 %v2781
      %v2813 = vpop.xlane.xlu0 %2812
      %2814 = vadd.xlane.f32.xlu0 %v2783
      %v2815 = vpop.xlane.xlu0 %2814
      %2816 = vadd.xlane.f32.xlu0 %v2785
      %v2817 = vpop.xlane.xlu0 %2816
      %2818 = vadd.xlane.f32.xlu0 %v2787
      %v2819 = vpop.xlane.xlu0 %2818
      %2820 = vadd.xlane.f32.xlu0 %v2789
      %v2821 = vpop.xlane.xlu0 %2820
      %2822 = vadd.xlane.f32.xlu0 %v2791
      %v2823 = vpop.xlane.xlu0 %2822
      %2824 = vadd.xlane.f32.xlu0 %v2793
      %v2825 = vpop.xlane.xlu0 %2824
      %2826 = vadd.xlane.f32.xlu0 %v2795
      %v2827 = vpop.xlane.xlu0 %2826
      %2828 = vadd.xlane.f32.xlu0 %v2797
      %v2829 = vpop.xlane.xlu0 %2828
      %v2830 = vrcp.pop %v2799
      %v2831 = vmul.f32 %v2799, %v2830
      %v2832 = vsub.f32 1.0, %v2831
      %v2833 = vmul.f32 %v2830, %v2832
      %v2834 = vadd.f32 %v2830, %v2833
      %vm2835 = vweird.f32 %v2799
      %vm2836 = vweird.f32 %v2830
      %vm2837 = vmor %vm2835, %vm2836
      %v2838 = vsel %vm2837, %v2830, %v2834
      %v2839 = vand.u32 2147483647, %v2799
      %vm2840 = vcmp.eq.f32.partialorder %v2839, 8.507059e+37
      %v2841 = vand.u32 %v2799, 2147483648
      %v2842 = vor.u32 1.1754944e-38, %v2841
      %v2843 = vsel %vm2840, %v2842, %v2838
      %v2844 = vmul.f32 %v2767, %v2843
      %v2845 = vrcp.pop %v2801
      %v2846 = vmul.f32 %v2801, %v2845
      %v2847 = vsub.f32 1.0, %v2846
      %v2848 = vmul.f32 %v2845, %v2847
      %v2849 = vadd.f32 %v2845, %v2848
      %vm2850 = vweird.f32 %v2801
      %vm2851 = vweird.f32 %v2845
      %vm2852 = vmor %vm2850, %vm2851
      %v2853 = vsel %vm2852, %v2845, %v2849
      %v2854 = vand.u32 2147483647, %v2801
      %vm2855 = vcmp.eq.f32.partialorder %v2854, 8.507059e+37
      %v2856 = vand.u32 %v2801, 2147483648
      %v2857 = vor.u32 1.1754944e-38, %v2856
      %v2858 = vsel %vm2855, %v2857, %v2853
      %v2859 = vmul.f32 %v2769, %v2858
      %v2860 = vrcp.pop %v2803
      %v2861 = vmul.f32 %v2803, %v2860
      %v2862 = vsub.f32 1.0, %v2861
      %v2863 = vmul.f32 %v2860, %v2862
      %v2864 = vadd.f32 %v2860, %v2863
      %vm2865 = vweird.f32 %v2803
      %vm2866 = vweird.f32 %v2860
      %vm2867 = vmor %vm2865, %vm2866
      %v2868 = vsel %vm2867, %v2860, %v2864
      %v2869 = vand.u32 2147483647, %v2803
      %vm2870 = vcmp.eq.f32.partialorder %v2869, 8.507059e+37
      %v2871 = vand.u32 %v2803, 2147483648
      %v2872 = vor.u32 1.1754944e-38, %v2871
      %v2873 = vsel %vm2870, %v2872, %v2868
      %v2874 = vmul.f32 %v2771, %v2873
      %v2875 = vrcp.pop %v2805
      %v2876 = vmul.f32 %v2805, %v2875
      %v2877 = vsub.f32 1.0, %v2876
      %v2878 = vmul.f32 %v2875, %v2877
      %v2879 = vadd.f32 %v2875, %v2878
      %vm2880 = vweird.f32 %v2805
      %vm2881 = vweird.f32 %v2875
      %vm2882 = vmor %vm2880, %vm2881
      %v2883 = vsel %vm2882, %v2875, %v2879
      %v2884 = vand.u32 2147483647, %v2805
      %vm2885 = vcmp.eq.f32.partialorder %v2884, 8.507059e+37
      %v2886 = vand.u32 %v2805, 2147483648
      %v2887 = vor.u32 1.1754944e-38, %v2886
      %v2888 = vsel %vm2885, %v2887, %v2883
      %v2889 = vmul.f32 %v2773, %v2888
      %v2890 = vrcp.pop %v2807
      %v2891 = vmul.f32 %v2807, %v2890
      %v2892 = vsub.f32 1.0, %v2891
      %v2893 = vmul.f32 %v2890, %v2892
      %v2894 = vadd.f32 %v2890, %v2893
      %vm2895 = vweird.f32 %v2807
      %vm2896 = vweird.f32 %v2890
      %vm2897 = vmor %vm2895, %vm2896
      %v2898 = vsel %vm2897, %v2890, %v2894
      %v2899 = vand.u32 2147483647, %v2807
      %vm2900 = vcmp.eq.f32.partialorder %v2899, 8.507059e+37
      %v2901 = vand.u32 %v2807, 2147483648
      %v2902 = vor.u32 1.1754944e-38, %v2901
      %v2903 = vsel %vm2900, %v2902, %v2898
      %v2904 = vmul.f32 %v2775, %v2903
      %v2905 = vrcp.pop %v2809
      %v2906 = vmul.f32 %v2809, %v2905
      %v2907 = vsub.f32 1.0, %v2906
      %v2908 = vmul.f32 %v2905, %v2907
      %v2909 = vadd.f32 %v2905, %v2908
      %vm2910 = vweird.f32 %v2809
      %vm2911 = vweird.f32 %v2905
      %vm2912 = vmor %vm2910, %vm2911
      %v2913 = vsel %vm2912, %v2905, %v2909
      %v2914 = vand.u32 2147483647, %v2809
      %vm2915 = vcmp.eq.f32.partialorder %v2914, 8.507059e+37
      %v2916 = vand.u32 %v2809, 2147483648
      %v2917 = vor.u32 1.1754944e-38, %v2916
      %v2918 = vsel %vm2915, %v2917, %v2913
      %v2919 = vmul.f32 %v2777, %v2918
      %v2920 = vrcp.pop %v2811
      %v2921 = vmul.f32 %v2811, %v2920
      %v2922 = vsub.f32 1.0, %v2921
      %v2923 = vmul.f32 %v2920, %v2922
      %v2924 = vadd.f32 %v2920, %v2923
      %vm2925 = vweird.f32 %v2811
      %vm2926 = vweird.f32 %v2920
      %vm2927 = vmor %vm2925, %vm2926
      %v2928 = vsel %vm2927, %v2920, %v2924
      %v2929 = vand.u32 2147483647, %v2811
      %vm2930 = vcmp.eq.f32.partialorder %v2929, 8.507059e+37
      %v2931 = vand.u32 %v2811, 2147483648
      %v2932 = vor.u32 1.1754944e-38, %v2931
      %v2933 = vsel %vm2930, %v2932, %v2928
      %v2934 = vmul.f32 %v2779, %v2933
      %v2935 = vrcp.pop %v2813
      %v2936 = vmul.f32 %v2813, %v2935
      %v2937 = vsub.f32 1.0, %v2936
      %v2938 = vmul.f32 %v2935, %v2937
      %v2939 = vadd.f32 %v2935, %v2938
      %vm2940 = vweird.f32 %v2813
      %vm2941 = vweird.f32 %v2935
      %vm2942 = vmor %vm2940, %vm2941
      %v2943 = vsel %vm2942, %v2935, %v2939
      %v2944 = vand.u32 2147483647, %v2813
      %vm2945 = vcmp.eq.f32.partialorder %v2944, 8.507059e+37
      %v2946 = vand.u32 %v2813, 2147483648
      %v2947 = vor.u32 1.1754944e-38, %v2946
      %v2948 = vsel %vm2945, %v2947, %v2943
      %v2949 = vmul.f32 %v2781, %v2948
      %v2950 = vrcp.pop %v2815
      %v2951 = vmul.f32 %v2815, %v2950
      %v2952 = vsub.f32 1.0, %v2951
      %v2953 = vmul.f32 %v2950, %v2952
      %v2954 = vadd.f32 %v2950, %v2953
      %vm2955 = vweird.f32 %v2815
      %vm2956 = vweird.f32 %v2950
      %vm2957 = vmor %vm2955, %vm2956
      %v2958 = vsel %vm2957, %v2950, %v2954
      %v2959 = vand.u32 2147483647, %v2815
      %vm2960 = vcmp.eq.f32.partialorder %v2959, 8.507059e+37
      %v2961 = vand.u32 %v2815, 2147483648
      %v2962 = vor.u32 1.1754944e-38, %v2961
      %v2963 = vsel %vm2960, %v2962, %v2958
      %v2964 = vmul.f32 %v2783, %v2963
      %v2965 = vrcp.pop %v2817
      %v2966 = vmul.f32 %v2817, %v2965
      %v2967 = vsub.f32 1.0, %v2966
      %v2968 = vmul.f32 %v2965, %v2967
      %v2969 = vadd.f32 %v2965, %v2968
      %vm2970 = vweird.f32 %v2817
      %vm2971 = vweird.f32 %v2965
      %vm2972 = vmor %vm2970, %vm2971
      %v2973 = vsel %vm2972, %v2965, %v2969
      %v2974 = vand.u32 2147483647, %v2817
      %vm2975 = vcmp.eq.f32.partialorder %v2974, 8.507059e+37
      %v2976 = vand.u32 %v2817, 2147483648
      %v2977 = vor.u32 1.1754944e-38, %v2976
      %v2978 = vsel %vm2975, %v2977, %v2973
      %v2979 = vmul.f32 %v2785, %v2978
      %v2980 = vrcp.pop %v2819
      %v2981 = vmul.f32 %v2819, %v2980
      %v2982 = vsub.f32 1.0, %v2981
      %v2983 = vmul.f32 %v2980, %v2982
      %v2984 = vadd.f32 %v2980, %v2983
      %vm2985 = vweird.f32 %v2819
      %vm2986 = vweird.f32 %v2980
      %vm2987 = vmor %vm2985, %vm2986
      %v2988 = vsel %vm2987, %v2980, %v2984
      %v2989 = vand.u32 2147483647, %v2819
      %vm2990 = vcmp.eq.f32.partialorder %v2989, 8.507059e+37
      %v2991 = vand.u32 %v2819, 2147483648
      %v2992 = vor.u32 1.1754944e-38, %v2991
      %v2993 = vsel %vm2990, %v2992, %v2988
      %v2994 = vmul.f32 %v2787, %v2993
      %v2995 = vrcp.pop %v2821
      %v2996 = vmul.f32 %v2821, %v2995
      %v2997 = vsub.f32 1.0, %v2996
      %v2998 = vmul.f32 %v2995, %v2997
      %v2999 = vadd.f32 %v2995, %v2998
      %vm3000 = vweird.f32 %v2821
      %vm3001 = vweird.f32 %v2995
      %vm3002 = vmor %vm3000, %vm3001
      %v3003 = vsel %vm3002, %v2995, %v2999
      %v3004 = vand.u32 2147483647, %v2821
      %vm3005 = vcmp.eq.f32.partialorder %v3004, 8.507059e+37
      %v3006 = vand.u32 %v2821, 2147483648
      %v3007 = vor.u32 1.1754944e-38, %v3006
      %v3008 = vsel %vm3005, %v3007, %v3003
      %v3009 = vmul.f32 %v2789, %v3008
      %v3010 = vrcp.pop %v2823
      %v3011 = vmul.f32 %v2823, %v3010
      %v3012 = vsub.f32 1.0, %v3011
      %v3013 = vmul.f32 %v3010, %v3012
      %v3014 = vadd.f32 %v3010, %v3013
      %vm3015 = vweird.f32 %v2823
      %vm3016 = vweird.f32 %v3010
      %vm3017 = vmor %vm3015, %vm3016
      %v3018 = vsel %vm3017, %v3010, %v3014
      %v3019 = vand.u32 2147483647, %v2823
      %vm3020 = vcmp.eq.f32.partialorder %v3019, 8.507059e+37
      %v3021 = vand.u32 %v2823, 2147483648
      %v3022 = vor.u32 1.1754944e-38, %v3021
      %v3023 = vsel %vm3020, %v3022, %v3018
      %v3024 = vmul.f32 %v2791, %v3023
      %v3025 = vrcp.pop %v2825
      %v3026 = vmul.f32 %v2825, %v3025
      %v3027 = vsub.f32 1.0, %v3026
      %v3028 = vmul.f32 %v3025, %v3027
      %v3029 = vadd.f32 %v3025, %v3028
      %vm3030 = vweird.f32 %v2825
      %vm3031 = vweird.f32 %v3025
      %vm3032 = vmor %vm3030, %vm3031
      %v3033 = vsel %vm3032, %v3025, %v3029
      %v3034 = vand.u32 2147483647, %v2825
      %vm3035 = vcmp.eq.f32.partialorder %v3034, 8.507059e+37
      %v3036 = vand.u32 %v2825, 2147483648
      %v3037 = vor.u32 1.1754944e-38, %v3036
      %v3038 = vsel %vm3035, %v3037, %v3033
      %v3039 = vmul.f32 %v2793, %v3038
      %v3040 = vrcp.pop %v2827
      %v3041 = vmul.f32 %v2827, %v3040
      %v3042 = vsub.f32 1.0, %v3041
      %v3043 = vmul.f32 %v3040, %v3042
      %v3044 = vadd.f32 %v3040, %v3043
      %vm3045 = vweird.f32 %v2827
      %vm3046 = vweird.f32 %v3040
      %vm3047 = vmor %vm3045, %vm3046
      %v3048 = vsel %vm3047, %v3040, %v3044
      %v3049 = vand.u32 2147483647, %v2827
      %vm3050 = vcmp.eq.f32.partialorder %v3049, 8.507059e+37
      %v3051 = vand.u32 %v2827, 2147483648
      %v3052 = vor.u32 1.1754944e-38, %v3051
      %v3053 = vsel %vm3050, %v3052, %v3048
      %v3054 = vmul.f32 %v2795, %v3053
      %v3055 = vrcp.pop %v2829
      %v3056 = vmul.f32 %v2829, %v3055
      %v3057 = vsub.f32 1.0, %v3056
      %v3058 = vmul.f32 %v3055, %v3057
      %v3059 = vadd.f32 %v3055, %v3058
      %vm3060 = vweird.f32 %v2829
      %vm3061 = vweird.f32 %v3055
      %vm3062 = vmor %vm3060, %vm3061
      %v3063 = vsel %vm3062, %v3055, %v3059
      %v3064 = vand.u32 2147483647, %v2829
      %vm3065 = vcmp.eq.f32.partialorder %v3064, 8.507059e+37
      %v3066 = vand.u32 %v2829, 2147483648
      %v3067 = vor.u32 1.1754944e-38, %v3066
      %v3068 = vsel %vm3065, %v3067, %v3063
      %v3069 = vmul.f32 %v2797, %v3068
      %3070 = vrot.lane.b32.xlu0 %v1081, 48
      %v3071 = vpop.permute.xlu0 %3070
      %3072 = vrot.lane.b32.xlu0 %v1084, 48
      %v3073 = vpop.permute.xlu0 %3072
      %3074 = vrot.lane.b32.xlu0 %v1087, 48
      %v3075 = vpop.permute.xlu0 %3074
      %3076 = vrot.lane.b32.xlu0 %v1090, 48
      %v3077 = vpop.permute.xlu0 %3076
      %3078 = vrot.lane.b32.xlu0 %v1093, 48
      %v3079 = vpop.permute.xlu0 %3078
      %3080 = vrot.lane.b32.xlu0 %v1096, 48
      %v3081 = vpop.permute.xlu0 %3080
      %3082 = vrot.lane.b32.xlu0 %v1099, 48
      %v3083 = vpop.permute.xlu0 %3082
      %3084 = vrot.lane.b32.xlu0 %v1102, 48
      %v3085 = vpop.permute.xlu0 %3084
      %3086 = vrot.lane.b32.xlu0 %v1105, 48
      %v3087 = vpop.permute.xlu0 %3086
      %3088 = vrot.lane.b32.xlu0 %v1108, 48
      %v3089 = vpop.permute.xlu0 %3088
      %3090 = vrot.lane.b32.xlu0 %v1111, 48
      %v3091 = vpop.permute.xlu0 %3090
      %3092 = vrot.lane.b32.xlu0 %v1114, 48
      %v3093 = vpop.permute.xlu0 %3092
      %3094 = vrot.lane.b32.xlu0 %v1117, 48
      %v3095 = vpop.permute.xlu0 %3094
      %3096 = vrot.lane.b32.xlu0 %v1120, 48
      %v3097 = vpop.permute.xlu0 %3096
      %3098 = vrot.lane.b32.xlu0 %v1123, 48
      %v3099 = vpop.permute.xlu0 %3098
      %3100 = vrot.lane.b32.xlu0 %v1126, 48
      %v3101 = vpop.permute.xlu0 %3100
      %3118 = vmatpush.msra.mxu0 %v3101
      %3119 = vmatpush.msra.mxu0 %v3099
      %3120 = vmatpush.msra.mxu0 %v3097
      %3121 = vmatpush.msra.mxu0 %v3095
      %3122 = vmatpush.msra.mxu0 %v3093
      %3123 = vmatpush.msra.mxu0 %v3091
      %3124 = vmatpush.msra.mxu0 %v3089
      %3125 = vmatpush.msra.mxu0 %v3087
      %3126 = vmatpush.msra.mxu0 %v3085
      %3127 = vmatpush.msra.mxu0 %v3083
      %3128 = vmatpush.msra.mxu0 %v3081
      %3129 = vmatpush.msra.mxu0 %v3079
      %3130 = vmatpush.msra.mxu0 %v3077
      %3131 = vmatpush.msra.mxu0 %v3075
      %3132 = vmatpush.msra.mxu0 %v3073
      %3133 = vmatpush.msra.mxu0 %v3071
      %3134 = vmatmul.f32.gmra.mxu0 %v2844
      %v3135 = vpop.f32.mrf.mxu0
      %v3136 = vadd.f32 0.0, %v3135
      %3137 = vmatmul.f32.gmra.mxu0 %v2859
      %v3138 = vpop.f32.mrf.mxu0
      %v3139 = vadd.f32 0.0, %v3138
      %3140 = vmatmul.f32.gmra.mxu0 %v2874
      %v3141 = vpop.f32.mrf.mxu0
      %v3142 = vadd.f32 0.0, %v3141
      %3143 = vmatmul.f32.gmra.mxu0 %v2889
      %v3144 = vpop.f32.mrf.mxu0
      %v3145 = vadd.f32 0.0, %v3144
      %3146 = vmatmul.f32.gmra.mxu0 %v2904
      %v3147 = vpop.f32.mrf.mxu0
      %v3148 = vadd.f32 0.0, %v3147
      %3149 = vmatmul.f32.gmra.mxu0 %v2919
      %v3150 = vpop.f32.mrf.mxu0
      %v3151 = vadd.f32 0.0, %v3150
      %3152 = vmatmul.f32.gmra.mxu0 %v2934
      %v3153 = vpop.f32.mrf.mxu0
      %v3154 = vadd.f32 0.0, %v3153
      %3155 = vmatmul.f32.gmra.mxu0 %v2949
      %v3156 = vpop.f32.mrf.mxu0
      %v3157 = vadd.f32 0.0, %v3156
      %3158 = vmatmul.f32.gmra.mxu0 %v2964
      %v3159 = vpop.f32.mrf.mxu0
      %v3160 = vadd.f32 0.0, %v3159
      %3161 = vmatmul.f32.gmra.mxu0 %v2979
      %v3162 = vpop.f32.mrf.mxu0
      %v3163 = vadd.f32 0.0, %v3162
      %3164 = vmatmul.f32.gmra.mxu0 %v2994
      %v3165 = vpop.f32.mrf.mxu0
      %v3166 = vadd.f32 0.0, %v3165
      %3167 = vmatmul.f32.gmra.mxu0 %v3009
      %v3168 = vpop.f32.mrf.mxu0
      %v3169 = vadd.f32 0.0, %v3168
      %3170 = vmatmul.f32.gmra.mxu0 %v3024
      %v3171 = vpop.f32.mrf.mxu0
      %v3172 = vadd.f32 0.0, %v3171
      %3173 = vmatmul.f32.gmra.mxu0 %v3039
      %v3174 = vpop.f32.mrf.mxu0
      %v3175 = vadd.f32 0.0, %v3174
      %3176 = vmatmul.f32.gmra.mxu0 %v3054
      %v3177 = vpop.f32.mrf.mxu0
      %v3178 = vadd.f32 0.0, %v3177
      %3179 = vmatmul.f32.gmra.mxu0 %v3069
      %v3180 = vpop.f32.mrf.mxu0
      %v3181 = vadd.f32 0.0, %v3180
      %3182 = vdwg.mxu0
      %3183 = vrot.lane.b32.xlu0 %v1081, 104
      %v3184 = vpop.permute.xlu0 %3183
      %3185 = vrot.lane.b32.xlu0 %v1084, 104
      %v3186 = vpop.permute.xlu0 %3185
      %3187 = vrot.lane.b32.xlu0 %v1087, 104
      %v3188 = vpop.permute.xlu0 %3187
      %3189 = vrot.lane.b32.xlu0 %v1090, 104
      %v3190 = vpop.permute.xlu0 %3189
      %3191 = vrot.lane.b32.xlu0 %v1093, 104
      %v3192 = vpop.permute.xlu0 %3191
      %3193 = vrot.lane.b32.xlu0 %v1096, 104
      %v3194 = vpop.permute.xlu0 %3193
      %3195 = vrot.lane.b32.xlu0 %v1099, 104
      %v3196 = vpop.permute.xlu0 %3195
      %3197 = vrot.lane.b32.xlu0 %v1102, 104
      %v3198 = vpop.permute.xlu0 %3197
      %3199 = vrot.lane.b32.xlu0 %v1105, 104
      %v3200 = vpop.permute.xlu0 %3199
      %3201 = vrot.lane.b32.xlu0 %v1108, 104
      %v3202 = vpop.permute.xlu0 %3201
      %3203 = vrot.lane.b32.xlu0 %v1111, 104
      %v3204 = vpop.permute.xlu0 %3203
      %3205 = vrot.lane.b32.xlu0 %v1114, 104
      %v3206 = vpop.permute.xlu0 %3205
      %3207 = vrot.lane.b32.xlu0 %v1117, 104
      %v3208 = vpop.permute.xlu0 %3207
      %3209 = vrot.lane.b32.xlu0 %v1120, 104
      %v3210 = vpop.permute.xlu0 %3209
      %3211 = vrot.lane.b32.xlu0 %v1123, 104
      %v3212 = vpop.permute.xlu0 %3211
      %3213 = vrot.lane.b32.xlu0 %v1126, 104
      %v3214 = vpop.permute.xlu0 %3213
      %3215 = vrot.lane.b32.xlu0 %v1081, 72
      %v3216 = vpop.permute.xlu0 %3215
      %3217 = vrot.lane.b32.xlu0 %v1084, 72
      %v3218 = vpop.permute.xlu0 %3217
      %3219 = vrot.lane.b32.xlu0 %v1087, 72
      %v3220 = vpop.permute.xlu0 %3219
      %3221 = vrot.lane.b32.xlu0 %v1090, 72
      %v3222 = vpop.permute.xlu0 %3221
      %3223 = vrot.lane.b32.xlu0 %v1093, 72
      %v3224 = vpop.permute.xlu0 %3223
      %3225 = vrot.lane.b32.xlu0 %v1096, 72
      %v3226 = vpop.permute.xlu0 %3225
      %3227 = vrot.lane.b32.xlu0 %v1099, 72
      %v3228 = vpop.permute.xlu0 %3227
      %3229 = vrot.lane.b32.xlu0 %v1102, 72
      %v3230 = vpop.permute.xlu0 %3229
      %3231 = vrot.lane.b32.xlu0 %v1105, 72
      %v3232 = vpop.permute.xlu0 %3231
      %3233 = vrot.lane.b32.xlu0 %v1108, 72
      %v3234 = vpop.permute.xlu0 %3233
      %3235 = vrot.lane.b32.xlu0 %v1111, 72
      %v3236 = vpop.permute.xlu0 %3235
      %3237 = vrot.lane.b32.xlu0 %v1114, 72
      %v3238 = vpop.permute.xlu0 %3237
      %3239 = vrot.lane.b32.xlu0 %v1117, 72
      %v3240 = vpop.permute.xlu0 %3239
      %3241 = vrot.lane.b32.xlu0 %v1120, 72
      %v3242 = vpop.permute.xlu0 %3241
      %3243 = vrot.lane.b32.xlu0 %v1123, 72
      %v3244 = vpop.permute.xlu0 %3243
      %3245 = vrot.lane.b32.xlu0 %v1126, 72
      %v3246 = vpop.permute.xlu0 %3245
      %v3247 = vsel %vm1176, %v3184, 0
      %v3249 = vsel %vm1176, %v3186, 0
      %v3251 = vsel %vm1176, %v3188, 0
      %v3253 = vsel %vm1176, %v3190, 0
      %v3255 = vsel %vm1176, %v3192, 0
      %v3257 = vsel %vm1176, %v3194, 0
      %v3259 = vsel %vm1176, %v3196, 0
      %v3261 = vsel %vm1176, %v3198, 0
      %v3263 = vsel %vm1176, %v3200, 0
      %v3265 = vsel %vm1176, %v3202, 0
      %v3267 = vsel %vm1176, %v3204, 0
      %v3269 = vsel %vm1176, %v3206, 0
      %v3271 = vsel %vm1176, %v3208, 0
      %v3273 = vsel %vm1176, %v3210, 0
      %v3275 = vsel %vm1176, %v3212, 0
      %v3277 = vsel %vm1176, %v3214, 0
      %v3279 = vsel %vm1176, %v3216, 0
      %v3281 = vsel %vm1176, %v3218, 0
      %v3283 = vsel %vm1176, %v3220, 0
      %v3285 = vsel %vm1176, %v3222, 0
      %v3287 = vsel %vm1176, %v3224, 0
      %v3289 = vsel %vm1176, %v3226, 0
      %v3291 = vsel %vm1176, %v3228, 0
      %v3293 = vsel %vm1176, %v3230, 0
      %v3295 = vsel %vm1176, %v3232, 0
      %v3297 = vsel %vm1176, %v3234, 0
      %v3299 = vsel %vm1176, %v3236, 0
      %v3301 = vsel %vm1176, %v3238, 0
      %v3303 = vsel %vm1176, %v3240, 0
      %v3305 = vsel %vm1176, %v3242, 0
      %v3307 = vsel %vm1176, %v3244, 0
      %v3309 = vsel %vm1176, %v3246, 0
      %3311 = vmatpush.xpose.msra.mxu0 %v3309
      %3312 = vmatpush.xpose.msra.mxu0 %v3307
      %3313 = vmatpush.xpose.msra.mxu0 %v3305
      %3314 = vmatpush.xpose.msra.mxu0 %v3303
      %3315 = vmatpush.xpose.msra.mxu0 %v3301
      %3316 = vmatpush.xpose.msra.mxu0 %v3299
      %3317 = vmatpush.xpose.msra.mxu0 %v3297
      %3318 = vmatpush.xpose.msra.mxu0 %v3295
      %3319 = vmatpush.xpose.msra.mxu0 %v3293
      %3320 = vmatpush.xpose.msra.mxu0 %v3291
      %3321 = vmatpush.xpose.msra.mxu0 %v3289
      %3322 = vmatpush.xpose.msra.mxu0 %v3287
      %3323 = vmatpush.xpose.msra.mxu0 %v3285
      %3324 = vmatpush.xpose.msra.mxu0 %v3283
      %3325 = vmatpush.xpose.msra.mxu0 %v3281
      %3326 = vmatpush.xpose.msra.mxu0 %v3279
      %3327 = vmatmul.f32.gmra.mxu0 %v3247
      %v3328 = vpop.f32.mrf.mxu0
      %v3329 = vadd.f32 0.0, %v3328
      %3330 = vmatmul.f32.gmra.mxu0 %v3249
      %v3331 = vpop.f32.mrf.mxu0
      %v3332 = vadd.f32 0.0, %v3331
      %3333 = vmatmul.f32.gmra.mxu0 %v3251
      %v3334 = vpop.f32.mrf.mxu0
      %v3335 = vadd.f32 0.0, %v3334
      %3336 = vmatmul.f32.gmra.mxu0 %v3253
      %v3337 = vpop.f32.mrf.mxu0
      %v3338 = vadd.f32 0.0, %v3337
      %3339 = vmatmul.f32.gmra.mxu0 %v3255
      %v3340 = vpop.f32.mrf.mxu0
      %v3341 = vadd.f32 0.0, %v3340
      %3342 = vmatmul.f32.gmra.mxu0 %v3257
      %v3343 = vpop.f32.mrf.mxu0
      %v3344 = vadd.f32 0.0, %v3343
      %3345 = vmatmul.f32.gmra.mxu0 %v3259
      %v3346 = vpop.f32.mrf.mxu0
      %v3347 = vadd.f32 0.0, %v3346
      %3348 = vmatmul.f32.gmra.mxu0 %v3261
      %v3349 = vpop.f32.mrf.mxu0
      %v3350 = vadd.f32 0.0, %v3349
      %3351 = vmatmul.f32.gmra.mxu0 %v3263
      %v3352 = vpop.f32.mrf.mxu0
      %v3353 = vadd.f32 0.0, %v3352
      %3354 = vmatmul.f32.gmra.mxu0 %v3265
      %v3355 = vpop.f32.mrf.mxu0
      %v3356 = vadd.f32 0.0, %v3355
      %3357 = vmatmul.f32.gmra.mxu0 %v3267
      %v3358 = vpop.f32.mrf.mxu0
      %v3359 = vadd.f32 0.0, %v3358
      %3360 = vmatmul.f32.gmra.mxu0 %v3269
      %v3361 = vpop.f32.mrf.mxu0
      %v3362 = vadd.f32 0.0, %v3361
      %3363 = vmatmul.f32.gmra.mxu0 %v3271
      %v3364 = vpop.f32.mrf.mxu0
      %v3365 = vadd.f32 0.0, %v3364
      %3366 = vmatmul.f32.gmra.mxu0 %v3273
      %v3367 = vpop.f32.mrf.mxu0
      %v3368 = vadd.f32 0.0, %v3367
      %3369 = vmatmul.f32.gmra.mxu0 %v3275
      %v3370 = vpop.f32.mrf.mxu0
      %v3371 = vadd.f32 0.0, %v3370
      %3372 = vmatmul.f32.gmra.mxu0 %v3277
      %v3373 = vpop.f32.mrf.mxu0
      %v3374 = vadd.f32 0.0, %v3373
      %3375 = vdwg.mxu0
      %v3376 = vmul.f32 %v3329, 0.35355338
      %v3377 = vmul.f32 %v3332, 0.35355338
      %v3378 = vmul.f32 %v3335, 0.35355338
      %v3379 = vmul.f32 %v3338, 0.35355338
      %v3380 = vmul.f32 %v3341, 0.35355338
      %v3381 = vmul.f32 %v3344, 0.35355338
      %v3382 = vmul.f32 %v3347, 0.35355338
      %v3383 = vmul.f32 %v3350, 0.35355338
      %v3384 = vmul.f32 %v3353, 0.35355338
      %v3385 = vmul.f32 %v3356, 0.35355338
      %v3386 = vmul.f32 %v3359, 0.35355338
      %v3387 = vmul.f32 %v3362, 0.35355338
      %v3388 = vmul.f32 %v3365, 0.35355338
      %v3389 = vmul.f32 %v3368, 0.35355338
      %v3390 = vmul.f32 %v3371, 0.35355338
      %v3391 = vmul.f32 %v3374, 0.35355338
      %v3392 = vadd.f32 %v3376, %v991
      %v3393 = vadd.f32 %v3377, %v992
      %v3394 = vadd.f32 %v3378, %v993
      %v3395 = vadd.f32 %v3379, %v994
      %v3396 = vadd.f32 %v3380, %v995
      %v3397 = vadd.f32 %v3381, %v996
      %v3398 = vadd.f32 %v3382, %v997
      %v3399 = vadd.f32 %v3383, %v998
      %v3400 = vadd.f32 %v3384, %v999
      %v3401 = vadd.f32 %v3385, %v1000
      %v3402 = vadd.f32 %v3386, %v1001
      %v3403 = vadd.f32 %v3387, %v1002
      %v3404 = vadd.f32 %v3388, %v1003
      %v3405 = vadd.f32 %v3389, %v1004
      %v3406 = vadd.f32 %v3390, %v1005
      %v3407 = vadd.f32 %v3391, %v1006
      %3408 = vmax.xlane.f32.xlu0 %v3392
      %v3409 = vpop.xlane.xlu0 %3408
      %3410 = vmax.xlane.f32.xlu0 %v3393
      %v3411 = vpop.xlane.xlu0 %3410
      %3412 = vmax.xlane.f32.xlu0 %v3394
      %v3413 = vpop.xlane.xlu0 %3412
      %3414 = vmax.xlane.f32.xlu0 %v3395
      %v3415 = vpop.xlane.xlu0 %3414
      %3416 = vmax.xlane.f32.xlu0 %v3396
      %v3417 = vpop.xlane.xlu0 %3416
      %3418 = vmax.xlane.f32.xlu0 %v3397
      %v3419 = vpop.xlane.xlu0 %3418
      %3420 = vmax.xlane.f32.xlu0 %v3398
      %v3421 = vpop.xlane.xlu0 %3420
      %3422 = vmax.xlane.f32.xlu0 %v3399
      %v3423 = vpop.xlane.xlu0 %3422
      %3424 = vmax.xlane.f32.xlu0 %v3400
      %v3425 = vpop.xlane.xlu0 %3424
      %3426 = vmax.xlane.f32.xlu0 %v3401
      %v3427 = vpop.xlane.xlu0 %3426
      %3428 = vmax.xlane.f32.xlu0 %v3402
      %v3429 = vpop.xlane.xlu0 %3428
      %3430 = vmax.xlane.f32.xlu0 %v3403
      %v3431 = vpop.xlane.xlu0 %3430
      %3432 = vmax.xlane.f32.xlu0 %v3404
      %v3433 = vpop.xlane.xlu0 %3432
      %3434 = vmax.xlane.f32.xlu0 %v3405
      %v3435 = vpop.xlane.xlu0 %3434
      %3436 = vmax.xlane.f32.xlu0 %v3406
      %v3437 = vpop.xlane.xlu0 %3436
      %3438 = vmax.xlane.f32.xlu0 %v3407
      %v3439 = vpop.xlane.xlu0 %3438
      %v3440 = vsub.f32 %v3392, %v3409
      %v3441 = vsub.f32 %v3393, %v3411
      %v3442 = vsub.f32 %v3394, %v3413
      %v3443 = vsub.f32 %v3395, %v3415
      %v3444 = vsub.f32 %v3396, %v3417
      %v3445 = vsub.f32 %v3397, %v3419
      %v3446 = vsub.f32 %v3398, %v3421
      %v3447 = vsub.f32 %v3399, %v3423
      %v3448 = vsub.f32 %v3400, %v3425
      %v3449 = vsub.f32 %v3401, %v3427
      %v3450 = vsub.f32 %v3402, %v3429
      %v3451 = vsub.f32 %v3403, %v3431
      %v3452 = vsub.f32 %v3404, %v3433
      %v3453 = vsub.f32 %v3405, %v3435
      %v3454 = vsub.f32 %v3406, %v3437
      %v3455 = vsub.f32 %v3407, %v3439
      %v3456 = vmul.f32 %v3440, 1.442695
      %v3457 = vpow.pop %v3456
      %v3458 = vmul.f32 %v3441, 1.442695
      %v3459 = vpow.pop %v3458
      %v3460 = vmul.f32 %v3442, 1.442695
      %v3461 = vpow.pop %v3460
      %v3462 = vmul.f32 %v3443, 1.442695
      %v3463 = vpow.pop %v3462
      %v3464 = vmul.f32 %v3444, 1.442695
      %v3465 = vpow.pop %v3464
      %v3466 = vmul.f32 %v3445, 1.442695
      %v3467 = vpow.pop %v3466
      %v3468 = vmul.f32 %v3446, 1.442695
      %v3469 = vpow.pop %v3468
      %v3470 = vmul.f32 %v3447, 1.442695
      %v3471 = vpow.pop %v3470
      %v3472 = vmul.f32 %v3448, 1.442695
      %v3473 = vpow.pop %v3472
      %v3474 = vmul.f32 %v3449, 1.442695
      %v3475 = vpow.pop %v3474
      %v3476 = vmul.f32 %v3450, 1.442695
      %v3477 = vpow.pop %v3476
      %v3478 = vmul.f32 %v3451, 1.442695
      %v3479 = vpow.pop %v3478
      %v3480 = vmul.f32 %v3452, 1.442695
      %v3481 = vpow.pop %v3480
      %v3482 = vmul.f32 %v3453, 1.442695
      %v3483 = vpow.pop %v3482
      %v3484 = vmul.f32 %v3454, 1.442695
      %v3485 = vpow.pop %v3484
      %v3486 = vmul.f32 %v3455, 1.442695
      %v3487 = vpow.pop %v3486
      %3488 = vadd.xlane.f32.xlu0 %v3457
      %v3489 = vpop.xlane.xlu0 %3488
      %3490 = vadd.xlane.f32.xlu0 %v3459
      %v3491 = vpop.xlane.xlu0 %3490
      %3492 = vadd.xlane.f32.xlu0 %v3461
      %v3493 = vpop.xlane.xlu0 %3492
      %3494 = vadd.xlane.f32.xlu0 %v3463
      %v3495 = vpop.xlane.xlu0 %3494
      %3496 = vadd.xlane.f32.xlu0 %v3465
      %v3497 = vpop.xlane.xlu0 %3496
      %3498 = vadd.xlane.f32.xlu0 %v3467
      %v3499 = vpop.xlane.xlu0 %3498
      %3500 = vadd.xlane.f32.xlu0 %v3469
      %v3501 = vpop.xlane.xlu0 %3500
      %3502 = vadd.xlane.f32.xlu0 %v3471
      %v3503 = vpop.xlane.xlu0 %3502
      %3504 = vadd.xlane.f32.xlu0 %v3473
      %v3505 = vpop.xlane.xlu0 %3504
      %3506 = vadd.xlane.f32.xlu0 %v3475
      %v3507 = vpop.xlane.xlu0 %3506
      %3508 = vadd.xlane.f32.xlu0 %v3477
      %v3509 = vpop.xlane.xlu0 %3508
      %3510 = vadd.xlane.f32.xlu0 %v3479
      %v3511 = vpop.xlane.xlu0 %3510
      %3512 = vadd.xlane.f32.xlu0 %v3481
      %v3513 = vpop.xlane.xlu0 %3512
      %3514 = vadd.xlane.f32.xlu0 %v3483
      %v3515 = vpop.xlane.xlu0 %3514
      %3516 = vadd.xlane.f32.xlu0 %v3485
      %v3517 = vpop.xlane.xlu0 %3516
      %3518 = vadd.xlane.f32.xlu0 %v3487
      %v3519 = vpop.xlane.xlu0 %3518
      %v3520 = vrcp.pop %v3489
      %v3521 = vmul.f32 %v3489, %v3520
      %v3522 = vsub.f32 1.0, %v3521
      %v3523 = vmul.f32 %v3520, %v3522
      %v3524 = vadd.f32 %v3520, %v3523
      %vm3525 = vweird.f32 %v3489
      %vm3526 = vweird.f32 %v3520
      %vm3527 = vmor %vm3525, %vm3526
      %v3528 = vsel %vm3527, %v3520, %v3524
      %v3529 = vand.u32 2147483647, %v3489
      %vm3530 = vcmp.eq.f32.partialorder %v3529, 8.507059e+37
      %v3531 = vand.u32 %v3489, 2147483648
      %v3532 = vor.u32 1.1754944e-38, %v3531
      %v3533 = vsel %vm3530, %v3532, %v3528
      %v3534 = vmul.f32 %v3457, %v3533
      %v3535 = vrcp.pop %v3491
      %v3536 = vmul.f32 %v3491, %v3535
      %v3537 = vsub.f32 1.0, %v3536
      %v3538 = vmul.f32 %v3535, %v3537
      %v3539 = vadd.f32 %v3535, %v3538
      %vm3540 = vweird.f32 %v3491
      %vm3541 = vweird.f32 %v3535
      %vm3542 = vmor %vm3540, %vm3541
      %v3543 = vsel %vm3542, %v3535, %v3539
      %v3544 = vand.u32 2147483647, %v3491
      %vm3545 = vcmp.eq.f32.partialorder %v3544, 8.507059e+37
      %v3546 = vand.u32 %v3491, 2147483648
      %v3547 = vor.u32 1.1754944e-38, %v3546
      %v3548 = vsel %vm3545, %v3547, %v3543
      %v3549 = vmul.f32 %v3459, %v3548
      %v3550 = vrcp.pop %v3493
      %v3551 = vmul.f32 %v3493, %v3550
      %v3552 = vsub.f32 1.0, %v3551
      %v3553 = vmul.f32 %v3550, %v3552
      %v3554 = vadd.f32 %v3550, %v3553
      %vm3555 = vweird.f32 %v3493
      %vm3556 = vweird.f32 %v3550
      %vm3557 = vmor %vm3555, %vm3556
      %v3558 = vsel %vm3557, %v3550, %v3554
      %v3559 = vand.u32 2147483647, %v3493
      %vm3560 = vcmp.eq.f32.partialorder %v3559, 8.507059e+37
      %v3561 = vand.u32 %v3493, 2147483648
      %v3562 = vor.u32 1.1754944e-38, %v3561
      %v3563 = vsel %vm3560, %v3562, %v3558
      %v3564 = vmul.f32 %v3461, %v3563
      %v3565 = vrcp.pop %v3495
      %v3566 = vmul.f32 %v3495, %v3565
      %v3567 = vsub.f32 1.0, %v3566
      %v3568 = vmul.f32 %v3565, %v3567
      %v3569 = vadd.f32 %v3565, %v3568
      %vm3570 = vweird.f32 %v3495
      %vm3571 = vweird.f32 %v3565
      %vm3572 = vmor %vm3570, %vm3571
      %v3573 = vsel %vm3572, %v3565, %v3569
      %v3574 = vand.u32 2147483647, %v3495
      %vm3575 = vcmp.eq.f32.partialorder %v3574, 8.507059e+37
      %v3576 = vand.u32 %v3495, 2147483648
      %v3577 = vor.u32 1.1754944e-38, %v3576
      %v3578 = vsel %vm3575, %v3577, %v3573
      %v3579 = vmul.f32 %v3463, %v3578
      %v3580 = vrcp.pop %v3497
      %v3581 = vmul.f32 %v3497, %v3580
      %v3582 = vsub.f32 1.0, %v3581
      %v3583 = vmul.f32 %v3580, %v3582
      %v3584 = vadd.f32 %v3580, %v3583
      %vm3585 = vweird.f32 %v3497
      %vm3586 = vweird.f32 %v3580
      %vm3587 = vmor %vm3585, %vm3586
      %v3588 = vsel %vm3587, %v3580, %v3584
      %v3589 = vand.u32 2147483647, %v3497
      %vm3590 = vcmp.eq.f32.partialorder %v3589, 8.507059e+37
      %v3591 = vand.u32 %v3497, 2147483648
      %v3592 = vor.u32 1.1754944e-38, %v3591
      %v3593 = vsel %vm3590, %v3592, %v3588
      %v3594 = vmul.f32 %v3465, %v3593
      %v3595 = vrcp.pop %v3499
      %v3596 = vmul.f32 %v3499, %v3595
      %v3597 = vsub.f32 1.0, %v3596
      %v3598 = vmul.f32 %v3595, %v3597
      %v3599 = vadd.f32 %v3595, %v3598
      %vm3600 = vweird.f32 %v3499
      %vm3601 = vweird.f32 %v3595
      %vm3602 = vmor %vm3600, %vm3601
      %v3603 = vsel %vm3602, %v3595, %v3599
      %v3604 = vand.u32 2147483647, %v3499
      %vm3605 = vcmp.eq.f32.partialorder %v3604, 8.507059e+37
      %v3606 = vand.u32 %v3499, 2147483648
      %v3607 = vor.u32 1.1754944e-38, %v3606
      %v3608 = vsel %vm3605, %v3607, %v3603
      %v3609 = vmul.f32 %v3467, %v3608
      %v3610 = vrcp.pop %v3501
      %v3611 = vmul.f32 %v3501, %v3610
      %v3612 = vsub.f32 1.0, %v3611
      %v3613 = vmul.f32 %v3610, %v3612
      %v3614 = vadd.f32 %v3610, %v3613
      %vm3615 = vweird.f32 %v3501
      %vm3616 = vweird.f32 %v3610
      %vm3617 = vmor %vm3615, %vm3616
      %v3618 = vsel %vm3617, %v3610, %v3614
      %v3619 = vand.u32 2147483647, %v3501
      %vm3620 = vcmp.eq.f32.partialorder %v3619, 8.507059e+37
      %v3621 = vand.u32 %v3501, 2147483648
      %v3622 = vor.u32 1.1754944e-38, %v3621
      %v3623 = vsel %vm3620, %v3622, %v3618
      %v3624 = vmul.f32 %v3469, %v3623
      %v3625 = vrcp.pop %v3503
      %v3626 = vmul.f32 %v3503, %v3625
      %v3627 = vsub.f32 1.0, %v3626
      %v3628 = vmul.f32 %v3625, %v3627
      %v3629 = vadd.f32 %v3625, %v3628
      %vm3630 = vweird.f32 %v3503
      %vm3631 = vweird.f32 %v3625
      %vm3632 = vmor %vm3630, %vm3631
      %v3633 = vsel %vm3632, %v3625, %v3629
      %v3634 = vand.u32 2147483647, %v3503
      %vm3635 = vcmp.eq.f32.partialorder %v3634, 8.507059e+37
      %v3636 = vand.u32 %v3503, 2147483648
      %v3637 = vor.u32 1.1754944e-38, %v3636
      %v3638 = vsel %vm3635, %v3637, %v3633
      %v3639 = vmul.f32 %v3471, %v3638
      %v3640 = vrcp.pop %v3505
      %v3641 = vmul.f32 %v3505, %v3640
      %v3642 = vsub.f32 1.0, %v3641
      %v3643 = vmul.f32 %v3640, %v3642
      %v3644 = vadd.f32 %v3640, %v3643
      %vm3645 = vweird.f32 %v3505
      %vm3646 = vweird.f32 %v3640
      %vm3647 = vmor %vm3645, %vm3646
      %v3648 = vsel %vm3647, %v3640, %v3644
      %v3649 = vand.u32 2147483647, %v3505
      %vm3650 = vcmp.eq.f32.partialorder %v3649, 8.507059e+37
      %v3651 = vand.u32 %v3505, 2147483648
      %v3652 = vor.u32 1.1754944e-38, %v3651
      %v3653 = vsel %vm3650, %v3652, %v3648
      %v3654 = vmul.f32 %v3473, %v3653
      %v3655 = vrcp.pop %v3507
      %v3656 = vmul.f32 %v3507, %v3655
      %v3657 = vsub.f32 1.0, %v3656
      %v3658 = vmul.f32 %v3655, %v3657
      %v3659 = vadd.f32 %v3655, %v3658
      %vm3660 = vweird.f32 %v3507
      %vm3661 = vweird.f32 %v3655
      %vm3662 = vmor %vm3660, %vm3661
      %v3663 = vsel %vm3662, %v3655, %v3659
      %v3664 = vand.u32 2147483647, %v3507
      %vm3665 = vcmp.eq.f32.partialorder %v3664, 8.507059e+37
      %v3666 = vand.u32 %v3507, 2147483648
      %v3667 = vor.u32 1.1754944e-38, %v3666
      %v3668 = vsel %vm3665, %v3667, %v3663
      %v3669 = vmul.f32 %v3475, %v3668
      %v3670 = vrcp.pop %v3509
      %v3671 = vmul.f32 %v3509, %v3670
      %v3672 = vsub.f32 1.0, %v3671
      %v3673 = vmul.f32 %v3670, %v3672
      %v3674 = vadd.f32 %v3670, %v3673
      %vm3675 = vweird.f32 %v3509
      %vm3676 = vweird.f32 %v3670
      %vm3677 = vmor %vm3675, %vm3676
      %v3678 = vsel %vm3677, %v3670, %v3674
      %v3679 = vand.u32 2147483647, %v3509
      %vm3680 = vcmp.eq.f32.partialorder %v3679, 8.507059e+37
      %v3681 = vand.u32 %v3509, 2147483648
      %v3682 = vor.u32 1.1754944e-38, %v3681
      %v3683 = vsel %vm3680, %v3682, %v3678
      %v3684 = vmul.f32 %v3477, %v3683
      %v3685 = vrcp.pop %v3511
      %v3686 = vmul.f32 %v3511, %v3685
      %v3687 = vsub.f32 1.0, %v3686
      %v3688 = vmul.f32 %v3685, %v3687
      %v3689 = vadd.f32 %v3685, %v3688
      %vm3690 = vweird.f32 %v3511
      %vm3691 = vweird.f32 %v3685
      %vm3692 = vmor %vm3690, %vm3691
      %v3693 = vsel %vm3692, %v3685, %v3689
      %v3694 = vand.u32 2147483647, %v3511
      %vm3695 = vcmp.eq.f32.partialorder %v3694, 8.507059e+37
      %v3696 = vand.u32 %v3511, 2147483648
      %v3697 = vor.u32 1.1754944e-38, %v3696
      %v3698 = vsel %vm3695, %v3697, %v3693
      %v3699 = vmul.f32 %v3479, %v3698
      %v3700 = vrcp.pop %v3513
      %v3701 = vmul.f32 %v3513, %v3700
      %v3702 = vsub.f32 1.0, %v3701
      %v3703 = vmul.f32 %v3700, %v3702
      %v3704 = vadd.f32 %v3700, %v3703
      %vm3705 = vweird.f32 %v3513
      %vm3706 = vweird.f32 %v3700
      %vm3707 = vmor %vm3705, %vm3706
      %v3708 = vsel %vm3707, %v3700, %v3704
      %v3709 = vand.u32 2147483647, %v3513
      %vm3710 = vcmp.eq.f32.partialorder %v3709, 8.507059e+37
      %v3711 = vand.u32 %v3513, 2147483648
      %v3712 = vor.u32 1.1754944e-38, %v3711
      %v3713 = vsel %vm3710, %v3712, %v3708
      %v3714 = vmul.f32 %v3481, %v3713
      %v3715 = vrcp.pop %v3515
      %v3716 = vmul.f32 %v3515, %v3715
      %v3717 = vsub.f32 1.0, %v3716
      %v3718 = vmul.f32 %v3715, %v3717
      %v3719 = vadd.f32 %v3715, %v3718
      %vm3720 = vweird.f32 %v3515
      %vm3721 = vweird.f32 %v3715
      %vm3722 = vmor %vm3720, %vm3721
      %v3723 = vsel %vm3722, %v3715, %v3719
      %v3724 = vand.u32 2147483647, %v3515
      %vm3725 = vcmp.eq.f32.partialorder %v3724, 8.507059e+37
      %v3726 = vand.u32 %v3515, 2147483648
      %v3727 = vor.u32 1.1754944e-38, %v3726
      %v3728 = vsel %vm3725, %v3727, %v3723
      %v3729 = vmul.f32 %v3483, %v3728
      %v3730 = vrcp.pop %v3517
      %v3731 = vmul.f32 %v3517, %v3730
      %v3732 = vsub.f32 1.0, %v3731
      %v3733 = vmul.f32 %v3730, %v3732
      %v3734 = vadd.f32 %v3730, %v3733
      %vm3735 = vweird.f32 %v3517
      %vm3736 = vweird.f32 %v3730
      %vm3737 = vmor %vm3735, %vm3736
      %v3738 = vsel %vm3737, %v3730, %v3734
      %v3739 = vand.u32 2147483647, %v3517
      %vm3740 = vcmp.eq.f32.partialorder %v3739, 8.507059e+37
      %v3741 = vand.u32 %v3517, 2147483648
      %v3742 = vor.u32 1.1754944e-38, %v3741
      %v3743 = vsel %vm3740, %v3742, %v3738
      %v3744 = vmul.f32 %v3485, %v3743
      %v3745 = vrcp.pop %v3519
      %v3746 = vmul.f32 %v3519, %v3745
      %v3747 = vsub.f32 1.0, %v3746
      %v3748 = vmul.f32 %v3745, %v3747
      %v3749 = vadd.f32 %v3745, %v3748
      %vm3750 = vweird.f32 %v3519
      %vm3751 = vweird.f32 %v3745
      %vm3752 = vmor %vm3750, %vm3751
      %v3753 = vsel %vm3752, %v3745, %v3749
      %v3754 = vand.u32 2147483647, %v3519
      %vm3755 = vcmp.eq.f32.partialorder %v3754, 8.507059e+37
      %v3756 = vand.u32 %v3519, 2147483648
      %v3757 = vor.u32 1.1754944e-38, %v3756
      %v3758 = vsel %vm3755, %v3757, %v3753
      %v3759 = vmul.f32 %v3487, %v3758
      %3760 = vrot.lane.b32.xlu0 %v1081, 40
      %v3761 = vpop.permute.xlu0 %3760
      %3762 = vrot.lane.b32.xlu0 %v1084, 40
      %v3763 = vpop.permute.xlu0 %3762
      %3764 = vrot.lane.b32.xlu0 %v1087, 40
      %v3765 = vpop.permute.xlu0 %3764
      %3766 = vrot.lane.b32.xlu0 %v1090, 40
      %v3767 = vpop.permute.xlu0 %3766
      %3768 = vrot.lane.b32.xlu0 %v1093, 40
      %v3769 = vpop.permute.xlu0 %3768
      %3770 = vrot.lane.b32.xlu0 %v1096, 40
      %v3771 = vpop.permute.xlu0 %3770
      %3772 = vrot.lane.b32.xlu0 %v1099, 40
      %v3773 = vpop.permute.xlu0 %3772
      %3774 = vrot.lane.b32.xlu0 %v1102, 40
      %v3775 = vpop.permute.xlu0 %3774
      %3776 = vrot.lane.b32.xlu0 %v1105, 40
      %v3777 = vpop.permute.xlu0 %3776
      %3778 = vrot.lane.b32.xlu0 %v1108, 40
      %v3779 = vpop.permute.xlu0 %3778
      %3780 = vrot.lane.b32.xlu0 %v1111, 40
      %v3781 = vpop.permute.xlu0 %3780
      %3782 = vrot.lane.b32.xlu0 %v1114, 40
      %v3783 = vpop.permute.xlu0 %3782
      %3784 = vrot.lane.b32.xlu0 %v1117, 40
      %v3785 = vpop.permute.xlu0 %3784
      %3786 = vrot.lane.b32.xlu0 %v1120, 40
      %v3787 = vpop.permute.xlu0 %3786
      %3788 = vrot.lane.b32.xlu0 %v1123, 40
      %v3789 = vpop.permute.xlu0 %3788
      %3790 = vrot.lane.b32.xlu0 %v1126, 40
      %v3791 = vpop.permute.xlu0 %3790
      %3808 = vmatpush.msra.mxu0 %v3791
      %3809 = vmatpush.msra.mxu0 %v3789
      %3810 = vmatpush.msra.mxu0 %v3787
      %3811 = vmatpush.msra.mxu0 %v3785
      %3812 = vmatpush.msra.mxu0 %v3783
      %3813 = vmatpush.msra.mxu0 %v3781
      %3814 = vmatpush.msra.mxu0 %v3779
      %3815 = vmatpush.msra.mxu0 %v3777
      %3816 = vmatpush.msra.mxu0 %v3775
      %3817 = vmatpush.msra.mxu0 %v3773
      %3818 = vmatpush.msra.mxu0 %v3771
      %3819 = vmatpush.msra.mxu0 %v3769
      %3820 = vmatpush.msra.mxu0 %v3767
      %3821 = vmatpush.msra.mxu0 %v3765
      %3822 = vmatpush.msra.mxu0 %v3763
      %3823 = vmatpush.msra.mxu0 %v3761
      %3824 = vmatmul.f32.gmra.mxu0 %v3534
      %v3825 = vpop.f32.mrf.mxu0
      %v3826 = vadd.f32 0.0, %v3825
      %3827 = vmatmul.f32.gmra.mxu0 %v3549
      %v3828 = vpop.f32.mrf.mxu0
      %v3829 = vadd.f32 0.0, %v3828
      %3830 = vmatmul.f32.gmra.mxu0 %v3564
      %v3831 = vpop.f32.mrf.mxu0
      %v3832 = vadd.f32 0.0, %v3831
      %3833 = vmatmul.f32.gmra.mxu0 %v3579
      %v3834 = vpop.f32.mrf.mxu0
      %v3835 = vadd.f32 0.0, %v3834
      %3836 = vmatmul.f32.gmra.mxu0 %v3594
      %v3837 = vpop.f32.mrf.mxu0
      %v3838 = vadd.f32 0.0, %v3837
      %3839 = vmatmul.f32.gmra.mxu0 %v3609
      %v3840 = vpop.f32.mrf.mxu0
      %v3841 = vadd.f32 0.0, %v3840
      %3842 = vmatmul.f32.gmra.mxu0 %v3624
      %v3843 = vpop.f32.mrf.mxu0
      %v3844 = vadd.f32 0.0, %v3843
      %3845 = vmatmul.f32.gmra.mxu0 %v3639
      %v3846 = vpop.f32.mrf.mxu0
      %v3847 = vadd.f32 0.0, %v3846
      %3848 = vmatmul.f32.gmra.mxu0 %v3654
      %v3849 = vpop.f32.mrf.mxu0
      %v3850 = vadd.f32 0.0, %v3849
      %3851 = vmatmul.f32.gmra.mxu0 %v3669
      %v3852 = vpop.f32.mrf.mxu0
      %v3853 = vadd.f32 0.0, %v3852
      %3854 = vmatmul.f32.gmra.mxu0 %v3684
      %v3855 = vpop.f32.mrf.mxu0
      %v3856 = vadd.f32 0.0, %v3855
      %3857 = vmatmul.f32.gmra.mxu0 %v3699
      %v3858 = vpop.f32.mrf.mxu0
      %v3859 = vadd.f32 0.0, %v3858
      %3860 = vmatmul.f32.gmra.mxu0 %v3714
      %v3861 = vpop.f32.mrf.mxu0
      %v3862 = vadd.f32 0.0, %v3861
      %3863 = vmatmul.f32.gmra.mxu0 %v3729
      %v3864 = vpop.f32.mrf.mxu0
      %v3865 = vadd.f32 0.0, %v3864
      %3866 = vmatmul.f32.gmra.mxu0 %v3744
      %v3867 = vpop.f32.mrf.mxu0
      %v3868 = vadd.f32 0.0, %v3867
      %3869 = vmatmul.f32.gmra.mxu0 %v3759
      %v3870 = vpop.f32.mrf.mxu0
      %v3871 = vadd.f32 0.0, %v3870
      %3872 = vdwg.mxu0
      %3889 = vrot.lane.b32.xlu0 %v2446, 8
      %v3890 = vpop.permute.xlu0 %3889
      %3891 = vrot.lane.b32.xlu0 %v2449, 8
      %v3892 = vpop.permute.xlu0 %3891
      %3893 = vrot.lane.b32.xlu0 %v2452, 8
      %v3894 = vpop.permute.xlu0 %3893
      %3895 = vrot.lane.b32.xlu0 %v2455, 8
      %v3896 = vpop.permute.xlu0 %3895
      %3897 = vrot.lane.b32.xlu0 %v2458, 8
      %v3898 = vpop.permute.xlu0 %3897
      %3899 = vrot.lane.b32.xlu0 %v2461, 8
      %v3900 = vpop.permute.xlu0 %3899
      %3901 = vrot.lane.b32.xlu0 %v2464, 8
      %v3902 = vpop.permute.xlu0 %3901
      %3903 = vrot.lane.b32.xlu0 %v2467, 8
      %v3904 = vpop.permute.xlu0 %3903
      %3905 = vrot.lane.b32.xlu0 %v2470, 8
      %v3906 = vpop.permute.xlu0 %3905
      %3907 = vrot.lane.b32.xlu0 %v2473, 8
      %v3908 = vpop.permute.xlu0 %3907
      %3909 = vrot.lane.b32.xlu0 %v2476, 8
      %v3910 = vpop.permute.xlu0 %3909
      %3911 = vrot.lane.b32.xlu0 %v2479, 8
      %v3912 = vpop.permute.xlu0 %3911
      %3913 = vrot.lane.b32.xlu0 %v2482, 8
      %v3914 = vpop.permute.xlu0 %3913
      %3915 = vrot.lane.b32.xlu0 %v2485, 8
      %v3916 = vpop.permute.xlu0 %3915
      %3917 = vrot.lane.b32.xlu0 %v2488, 8
      %v3918 = vpop.permute.xlu0 %3917
      %3919 = vrot.lane.b32.xlu0 %v2491, 8
      %v3920 = vpop.permute.xlu0 %3919
      %3953 = vrot.lane.b32.xlu0 %v3136, 16
      %v3954 = vpop.permute.xlu0 %3953
      %3955 = vrot.lane.b32.xlu0 %v3139, 16
      %v3956 = vpop.permute.xlu0 %3955
      %3957 = vrot.lane.b32.xlu0 %v3142, 16
      %v3958 = vpop.permute.xlu0 %3957
      %3959 = vrot.lane.b32.xlu0 %v3145, 16
      %v3960 = vpop.permute.xlu0 %3959
      %3961 = vrot.lane.b32.xlu0 %v3148, 16
      %v3962 = vpop.permute.xlu0 %3961
      %3963 = vrot.lane.b32.xlu0 %v3151, 16
      %v3964 = vpop.permute.xlu0 %3963
      %3965 = vrot.lane.b32.xlu0 %v3154, 16
      %v3966 = vpop.permute.xlu0 %3965
      %3967 = vrot.lane.b32.xlu0 %v3157, 16
      %v3968 = vpop.permute.xlu0 %3967
      %3969 = vrot.lane.b32.xlu0 %v3160, 16
      %v3970 = vpop.permute.xlu0 %3969
      %3971 = vrot.lane.b32.xlu0 %v3163, 16
      %v3972 = vpop.permute.xlu0 %3971
      %3973 = vrot.lane.b32.xlu0 %v3166, 16
      %v3974 = vpop.permute.xlu0 %3973
      %3975 = vrot.lane.b32.xlu0 %v3169, 16
      %v3976 = vpop.permute.xlu0 %3975
      %3977 = vrot.lane.b32.xlu0 %v3172, 16
      %v3978 = vpop.permute.xlu0 %3977
      %3979 = vrot.lane.b32.xlu0 %v3175, 16
      %v3980 = vpop.permute.xlu0 %3979
      %3981 = vrot.lane.b32.xlu0 %v3178, 16
      %v3982 = vpop.permute.xlu0 %3981
      %3983 = vrot.lane.b32.xlu0 %v3181, 16
      %v3984 = vpop.permute.xlu0 %3983
      %4017 = vrot.lane.b32.xlu0 %v3826, 24
      %v4018 = vpop.permute.xlu0 %4017
      %4019 = vrot.lane.b32.xlu0 %v3829, 24
      %v4020 = vpop.permute.xlu0 %4019
      %4021 = vrot.lane.b32.xlu0 %v3832, 24
      %v4022 = vpop.permute.xlu0 %4021
      %4023 = vrot.lane.b32.xlu0 %v3835, 24
      %v4024 = vpop.permute.xlu0 %4023
      %4025 = vrot.lane.b32.xlu0 %v3838, 24
      %v4026 = vpop.permute.xlu0 %4025
      %4027 = vrot.lane.b32.xlu0 %v3841, 24
      %v4028 = vpop.permute.xlu0 %4027
      %4029 = vrot.lane.b32.xlu0 %v3844, 24
      %v4030 = vpop.permute.xlu0 %4029
      %4031 = vrot.lane.b32.xlu0 %v3847, 24
      %v4032 = vpop.permute.xlu0 %4031
      %4033 = vrot.lane.b32.xlu0 %v3850, 24
      %v4034 = vpop.permute.xlu0 %4033
      %4035 = vrot.lane.b32.xlu0 %v3853, 24
      %v4036 = vpop.permute.xlu0 %4035
      %4037 = vrot.lane.b32.xlu0 %v3856, 24
      %v4038 = vpop.permute.xlu0 %4037
      %4039 = vrot.lane.b32.xlu0 %v3859, 24
      %v4040 = vpop.permute.xlu0 %4039
      %4041 = vrot.lane.b32.xlu0 %v3862, 24
      %v4042 = vpop.permute.xlu0 %4041
      %4043 = vrot.lane.b32.xlu0 %v3865, 24
      %v4044 = vpop.permute.xlu0 %4043
      %4045 = vrot.lane.b32.xlu0 %v3868, 24
      %v4046 = vpop.permute.xlu0 %4045
      %4047 = vrot.lane.b32.xlu0 %v3871, 24
      %v4048 = vpop.permute.xlu0 %4047
      %v4065 = vsel %vm1176, %v1756, %v3890
      %v4066 = vsel %vm1176, %v1759, %v3892
      %v4067 = vsel %vm1176, %v1762, %v3894
      %v4068 = vsel %vm1176, %v1765, %v3896
      %v4069 = vsel %vm1176, %v1768, %v3898
      %v4070 = vsel %vm1176, %v1771, %v3900
      %v4071 = vsel %vm1176, %v1774, %v3902
      %v4072 = vsel %vm1176, %v1777, %v3904
      %v4073 = vsel %vm1176, %v1780, %v3906
      %v4074 = vsel %vm1176, %v1783, %v3908
      %v4075 = vsel %vm1176, %v1786, %v3910
      %v4076 = vsel %vm1176, %v1789, %v3912
      %v4077 = vsel %vm1176, %v1792, %v3914
      %v4078 = vsel %vm1176, %v1795, %v3916
      %v4079 = vsel %vm1176, %v1798, %v3918
      %v4080 = vsel %vm1176, %v1801, %v3920
      %vm4081 = vcmask 130048
      %v4082 = vsel %vm4081, %v4065, %v3954
      %v4083 = vsel %vm4081, %v4066, %v3956
      %v4084 = vsel %vm4081, %v4067, %v3958
      %v4085 = vsel %vm4081, %v4068, %v3960
      %v4086 = vsel %vm4081, %v4069, %v3962
      %v4087 = vsel %vm4081, %v4070, %v3964
      %v4088 = vsel %vm4081, %v4071, %v3966
      %v4089 = vsel %vm4081, %v4072, %v3968
      %v4090 = vsel %vm4081, %v4073, %v3970
      %v4091 = vsel %vm4081, %v4074, %v3972
      %v4092 = vsel %vm4081, %v4075, %v3974
      %v4093 = vsel %vm4081, %v4076, %v3976
      %v4094 = vsel %vm4081, %v4077, %v3978
      %v4095 = vsel %vm4081, %v4078, %v3980
      %v4096 = vsel %vm4081, %v4079, %v3982
      %v4097 = vsel %vm4081, %v4080, %v3984
      %vm4098 = vcmask 195584
      %v4099 = vsel %vm4098, %v4082, %v4018
      %v4100 = vsel %vm4098, %v4083, %v4020
      %v4101 = vsel %vm4098, %v4084, %v4022
      %v4102 = vsel %vm4098, %v4085, %v4024
      %v4103 = vsel %vm4098, %v4086, %v4026
      %v4104 = vsel %vm4098, %v4087, %v4028
      %v4105 = vsel %vm4098, %v4088, %v4030
      %v4106 = vsel %vm4098, %v4089, %v4032
      %v4107 = vsel %vm4098, %v4090, %v4034
      %v4108 = vsel %vm4098, %v4091, %v4036
      %v4109 = vsel %vm4098, %v4092, %v4038
      %v4110 = vsel %vm4098, %v4093, %v4040
      %v4111 = vsel %vm4098, %v4094, %v4042
      %v4112 = vsel %vm4098, %v4095, %v4044
      %v4113 = vsel %vm4098, %v4096, %v4046
      %v4114 = vsel %vm4098, %v4097, %v4048
      %v4115 = vperm.slane %v1007, 1
      %4120 = vrot.lane.b32.xlu0 %v1009, 32
      %v4121 = vpop.permute.xlu0 %4120
      %4122 = vrot.lane.b32.xlu0 %v1010, 32
      %v4123 = vpop.permute.xlu0 %4122
      %4124 = vrot.lane.b32.xlu0 %v1011, 32
      %v4125 = vpop.permute.xlu0 %4124
      %4126 = vrot.lane.b32.xlu0 %v1012, 32
      %v4127 = vpop.permute.xlu0 %4126
      %v4133 = vsel %vm1014, %v4099, 0
      %v4136 = vsel %vm1014, %v4100, 0
      %v4139 = vsel %vm1014, %v4101, 0
      %v4142 = vsel %vm1014, %v4102, 0
      %v4145 = vsel %vm1014, %v4103, 0
      %v4148 = vsel %vm1014, %v4104, 0
      %v4151 = vsel %vm1014, %v4105, 0
      %v4154 = vsel %vm1014, %v4106, 0
      %v4157 = vsel %vm1014, %v4107, 0
      %v4160 = vsel %vm1014, %v4108, 0
      %v4163 = vsel %vm1014, %v4109, 0
      %v4166 = vsel %vm1014, %v4110, 0
      %v4169 = vsel %vm1014, %v4111, 0
      %v4172 = vsel %vm1014, %v4112, 0
      %v4175 = vsel %vm1014, %v4113, 0
      %v4178 = vsel %vm1014, %v4114, 0
      %4180 = vmatpush.msra.mxu0 0.0
      %4181 = vmatpush.msra.mxu0 0.0
      %4182 = vmatpush.msra.mxu0 0.0
      %4183 = vmatpush.msra.mxu0 0.0
      %4184 = vmatpush.msra.mxu0 0.0
      %4185 = vmatpush.msra.mxu0 0.0
      %4186 = vmatpush.msra.mxu0 0.0
      %4187 = vmatpush.msra.mxu0 0.0
      %4188 = vmatpush.msra.mxu0 0.0
      %4189 = vmatpush.msra.mxu0 0.0
      %4190 = vmatpush.msra.mxu0 0.0
      %4191 = vmatpush.msra.mxu0 0.0
      %4192 = vmatpush.msra.mxu0 %v4127
      %4193 = vmatpush.msra.mxu0 %v4125
      %4194 = vmatpush.msra.mxu0 %v4123
      %4195 = vmatpush.msra.mxu0 %v4121
      %4196 = vmatmul.f32.gmra.mxu0 %v4133
      %v4197 = vpop.f32.mrf.mxu0
      %v4198 = vadd.f32 %v4115, %v4197
      %4199 = vmatmul.f32.gmra.mxu0 %v4136
      %v4200 = vpop.f32.mrf.mxu0
      %v4201 = vadd.f32 %v4115, %v4200
      %4202 = vmatmul.f32.gmra.mxu0 %v4139
      %v4203 = vpop.f32.mrf.mxu0
      %v4204 = vadd.f32 %v4115, %v4203
      %4205 = vmatmul.f32.gmra.mxu0 %v4142
      %v4206 = vpop.f32.mrf.mxu0
      %v4207 = vadd.f32 %v4115, %v4206
      %4208 = vmatmul.f32.gmra.mxu0 %v4145
      %v4209 = vpop.f32.mrf.mxu0
      %v4210 = vadd.f32 %v4115, %v4209
      %4211 = vmatmul.f32.gmra.mxu0 %v4148
      %v4212 = vpop.f32.mrf.mxu0
      %v4213 = vadd.f32 %v4115, %v4212
      %4214 = vmatmul.f32.gmra.mxu0 %v4151
      %v4215 = vpop.f32.mrf.mxu0
      %v4216 = vadd.f32 %v4115, %v4215
      %4217 = vmatmul.f32.gmra.mxu0 %v4154
      %v4218 = vpop.f32.mrf.mxu0
      %v4219 = vadd.f32 %v4115, %v4218
      %4220 = vmatmul.f32.gmra.mxu0 %v4157
      %v4221 = vpop.f32.mrf.mxu0
      %v4222 = vadd.f32 %v4115, %v4221
      %4223 = vmatmul.f32.gmra.mxu0 %v4160
      %v4224 = vpop.f32.mrf.mxu0
      %v4225 = vadd.f32 %v4115, %v4224
      %4226 = vmatmul.f32.gmra.mxu0 %v4163
      %v4227 = vpop.f32.mrf.mxu0
      %v4228 = vadd.f32 %v4115, %v4227
      %4229 = vmatmul.f32.gmra.mxu0 %v4166
      %v4230 = vpop.f32.mrf.mxu0
      %v4231 = vadd.f32 %v4115, %v4230
      %4232 = vmatmul.f32.gmra.mxu0 %v4169
      %v4233 = vpop.f32.mrf.mxu0
      %v4234 = vadd.f32 %v4115, %v4233
      %4235 = vmatmul.f32.gmra.mxu0 %v4172
      %v4236 = vpop.f32.mrf.mxu0
      %v4237 = vadd.f32 %v4115, %v4236
      %4238 = vmatmul.f32.gmra.mxu0 %v4175
      %v4239 = vpop.f32.mrf.mxu0
      %v4240 = vadd.f32 %v4115, %v4239
      %4241 = vmatmul.f32.gmra.mxu0 %v4178
      %v4242 = vpop.f32.mrf.mxu0
      %v4243 = vadd.f32 %v4115, %v4242
      %4244 = vdwg.mxu0
      %v4245 = vadd.f32 %v284, %v4198
      %v4246 = vadd.f32 %v285, %v4201
      %v4247 = vadd.f32 %v286, %v4204
      %v4248 = vadd.f32 %v287, %v4207
      %v4249 = vadd.f32 %v288, %v4210
      %v4250 = vadd.f32 %v289, %v4213
      %v4251 = vadd.f32 %v290, %v4216
      %v4252 = vadd.f32 %v291, %v4219
      %v4253 = vadd.f32 %v292, %v4222
      %v4254 = vadd.f32 %v293, %v4225
      %v4255 = vadd.f32 %v294, %v4228
      %v4256 = vadd.f32 %v295, %v4231
      %v4257 = vadd.f32 %v296, %v4234
      %v4258 = vadd.f32 %v297, %v4237
      %v4259 = vadd.f32 %v298, %v4240
      %v4260 = vadd.f32 %v299, %v4243
      %v4261 = vsel %vm1014, %v4245, 0.0
      %4262 = vadd.xlane.f32.xlu0 %v4261
      %v4263 = vpop.xlane.xlu0 %4262
      %v4264 = vsel %vm1014, %v4246, 0.0
      %4265 = vadd.xlane.f32.xlu0 %v4264
      %v4266 = vpop.xlane.xlu0 %4265
      %v4267 = vsel %vm1014, %v4247, 0.0
      %4268 = vadd.xlane.f32.xlu0 %v4267
      %v4269 = vpop.xlane.xlu0 %4268
      %v4270 = vsel %vm1014, %v4248, 0.0
      %4271 = vadd.xlane.f32.xlu0 %v4270
      %v4272 = vpop.xlane.xlu0 %4271
      %v4273 = vsel %vm1014, %v4249, 0.0
      %4274 = vadd.xlane.f32.xlu0 %v4273
      %v4275 = vpop.xlane.xlu0 %4274
      %v4276 = vsel %vm1014, %v4250, 0.0
      %4277 = vadd.xlane.f32.xlu0 %v4276
      %v4278 = vpop.xlane.xlu0 %4277
      %v4279 = vsel %vm1014, %v4251, 0.0
      %4280 = vadd.xlane.f32.xlu0 %v4279
      %v4281 = vpop.xlane.xlu0 %4280
      %v4282 = vsel %vm1014, %v4252, 0.0
      %4283 = vadd.xlane.f32.xlu0 %v4282
      %v4284 = vpop.xlane.xlu0 %4283
      %v4285 = vsel %vm1014, %v4253, 0.0
      %4286 = vadd.xlane.f32.xlu0 %v4285
      %v4287 = vpop.xlane.xlu0 %4286
      %v4288 = vsel %vm1014, %v4254, 0.0
      %4289 = vadd.xlane.f32.xlu0 %v4288
      %v4290 = vpop.xlane.xlu0 %4289
      %v4291 = vsel %vm1014, %v4255, 0.0
      %4292 = vadd.xlane.f32.xlu0 %v4291
      %v4293 = vpop.xlane.xlu0 %4292
      %v4294 = vsel %vm1014, %v4256, 0.0
      %4295 = vadd.xlane.f32.xlu0 %v4294
      %v4296 = vpop.xlane.xlu0 %4295
      %v4297 = vsel %vm1014, %v4257, 0.0
      %4298 = vadd.xlane.f32.xlu0 %v4297
      %v4299 = vpop.xlane.xlu0 %4298
      %v4300 = vsel %vm1014, %v4258, 0.0
      %4301 = vadd.xlane.f32.xlu0 %v4300
      %v4302 = vpop.xlane.xlu0 %4301
      %v4303 = vsel %vm1014, %v4259, 0.0
      %4304 = vadd.xlane.f32.xlu0 %v4303
      %v4305 = vpop.xlane.xlu0 %4304
      %v4306 = vsel %vm1014, %v4260, 0.0
      %4307 = vadd.xlane.f32.xlu0 %v4306
      %v4308 = vpop.xlane.xlu0 %4307
      %v4309 = vrcp.pop 32.0
      %v4310 = vmul.f32 32.0, %v4309
      %v4311 = vsub.f32 1.0, %v4310
      %v4312 = vmul.f32 %v4309, %v4311
      %v4313 = vadd.f32 %v4309, %v4312
      %vm4314 = vweird.f32 %v4309
      %v4315 = vsel %vm4314, %v4309, %v4313
      %v4316 = vmul.f32 %v4263, %v4315
      %v4317 = vmul.f32 %v4266, %v4315
      %v4318 = vmul.f32 %v4269, %v4315
      %v4319 = vmul.f32 %v4272, %v4315
      %v4320 = vmul.f32 %v4275, %v4315
      %v4321 = vmul.f32 %v4278, %v4315
      %v4322 = vmul.f32 %v4281, %v4315
      %v4323 = vmul.f32 %v4284, %v4315
      %v4324 = vmul.f32 %v4287, %v4315
      %v4325 = vmul.f32 %v4290, %v4315
      %v4326 = vmul.f32 %v4293, %v4315
      %v4327 = vmul.f32 %v4296, %v4315
      %v4328 = vmul.f32 %v4299, %v4315
      %v4329 = vmul.f32 %v4302, %v4315
      %v4330 = vmul.f32 %v4305, %v4315
      %v4331 = vmul.f32 %v4308, %v4315
      %v4332 = vsub.f32 %v4245, %v4316
      %v4333 = vsub.f32 %v4246, %v4317
      %v4334 = vsub.f32 %v4247, %v4318
      %v4335 = vsub.f32 %v4248, %v4319
      %v4336 = vsub.f32 %v4249, %v4320
      %v4337 = vsub.f32 %v4250, %v4321
      %v4338 = vsub.f32 %v4251, %v4322
      %v4339 = vsub.f32 %v4252, %v4323
      %v4340 = vsub.f32 %v4253, %v4324
      %v4341 = vsub.f32 %v4254, %v4325
      %v4342 = vsub.f32 %v4255, %v4326
      %v4343 = vsub.f32 %v4256, %v4327
      %v4344 = vsub.f32 %v4257, %v4328
      %v4345 = vsub.f32 %v4258, %v4329
      %v4346 = vsub.f32 %v4259, %v4330
      %v4347 = vsub.f32 %v4260, %v4331
      %v4348 = vmul.f32 %v4332, %v4332
      %v4349 = vmul.f32 %v4333, %v4333
      %v4350 = vmul.f32 %v4334, %v4334
      %v4351 = vmul.f32 %v4335, %v4335
      %v4352 = vmul.f32 %v4336, %v4336
      %v4353 = vmul.f32 %v4337, %v4337
      %v4354 = vmul.f32 %v4338, %v4338
      %v4355 = vmul.f32 %v4339, %v4339
      %v4356 = vmul.f32 %v4340, %v4340
      %v4357 = vmul.f32 %v4341, %v4341
      %v4358 = vmul.f32 %v4342, %v4342
      %v4359 = vmul.f32 %v4343, %v4343
      %v4360 = vmul.f32 %v4344, %v4344
      %v4361 = vmul.f32 %v4345, %v4345
      %v4362 = vmul.f32 %v4346, %v4346
      %v4363 = vmul.f32 %v4347, %v4347
      %v4364 = vsel %vm1014, %v4348, 0.0
      %4365 = vadd.xlane.f32.xlu0 %v4364
      %v4366 = vpop.xlane.xlu0 %4365
      %v4367 = vsel %vm1014, %v4349, 0.0
      %4368 = vadd.xlane.f32.xlu0 %v4367
      %v4369 = vpop.xlane.xlu0 %4368
      %v4370 = vsel %vm1014, %v4350, 0.0
      %4371 = vadd.xlane.f32.xlu0 %v4370
      %v4372 = vpop.xlane.xlu0 %4371
      %v4373 = vsel %vm1014, %v4351, 0.0
      %4374 = vadd.xlane.f32.xlu0 %v4373
      %v4375 = vpop.xlane.xlu0 %4374
      %v4376 = vsel %vm1014, %v4352, 0.0
      %4377 = vadd.xlane.f32.xlu0 %v4376
      %v4378 = vpop.xlane.xlu0 %4377
      %v4379 = vsel %vm1014, %v4353, 0.0
      %4380 = vadd.xlane.f32.xlu0 %v4379
      %v4381 = vpop.xlane.xlu0 %4380
      %v4382 = vsel %vm1014, %v4354, 0.0
      %4383 = vadd.xlane.f32.xlu0 %v4382
      %v4384 = vpop.xlane.xlu0 %4383
      %v4385 = vsel %vm1014, %v4355, 0.0
      %4386 = vadd.xlane.f32.xlu0 %v4385
      %v4387 = vpop.xlane.xlu0 %4386
      %v4388 = vsel %vm1014, %v4356, 0.0
      %4389 = vadd.xlane.f32.xlu0 %v4388
      %v4390 = vpop.xlane.xlu0 %4389
      %v4391 = vsel %vm1014, %v4357, 0.0
      %4392 = vadd.xlane.f32.xlu0 %v4391
      %v4393 = vpop.xlane.xlu0 %4392
      %v4394 = vsel %vm1014, %v4358, 0.0
      %4395 = vadd.xlane.f32.xlu0 %v4394
      %v4396 = vpop.xlane.xlu0 %4395
      %v4397 = vsel %vm1014, %v4359, 0.0
      %4398 = vadd.xlane.f32.xlu0 %v4397
      %v4399 = vpop.xlane.xlu0 %4398
      %v4400 = vsel %vm1014, %v4360, 0.0
      %4401 = vadd.xlane.f32.xlu0 %v4400
      %v4402 = vpop.xlane.xlu0 %4401
      %v4403 = vsel %vm1014, %v4361, 0.0
      %4404 = vadd.xlane.f32.xlu0 %v4403
      %v4405 = vpop.xlane.xlu0 %4404
      %v4406 = vsel %vm1014, %v4362, 0.0
      %4407 = vadd.xlane.f32.xlu0 %v4406
      %v4408 = vpop.xlane.xlu0 %4407
      %v4409 = vsel %vm1014, %v4363, 0.0
      %4410 = vadd.xlane.f32.xlu0 %v4409
      %v4411 = vpop.xlane.xlu0 %4410
      %v4412 = vmul.f32 %v4366, %v4315
      %v4413 = vmul.f32 %v4369, %v4315
      %v4414 = vmul.f32 %v4372, %v4315
      %v4415 = vmul.f32 %v4375, %v4315
      %v4416 = vmul.f32 %v4378, %v4315
      %v4417 = vmul.f32 %v4381, %v4315
      %v4418 = vmul.f32 %v4384, %v4315
      %v4419 = vmul.f32 %v4387, %v4315
      %v4420 = vmul.f32 %v4390, %v4315
      %v4421 = vmul.f32 %v4393, %v4315
      %v4422 = vmul.f32 %v4396, %v4315
      %v4423 = vmul.f32 %v4399, %v4315
      %v4424 = vmul.f32 %v4402, %v4315
      %v4425 = vmul.f32 %v4405, %v4315
      %v4426 = vmul.f32 %v4408, %v4315
      %v4427 = vmul.f32 %v4411, %v4315
      %v4428 = vadd.f32 %v4412, 1e-05
      %v4429 = vadd.f32 %v4413, 1e-05
      %v4430 = vadd.f32 %v4414, 1e-05
      %v4431 = vadd.f32 %v4415, 1e-05
      %v4432 = vadd.f32 %v4416, 1e-05
      %v4433 = vadd.f32 %v4417, 1e-05
      %v4434 = vadd.f32 %v4418, 1e-05
      %v4435 = vadd.f32 %v4419, 1e-05
      %v4436 = vadd.f32 %v4420, 1e-05
      %v4437 = vadd.f32 %v4421, 1e-05
      %v4438 = vadd.f32 %v4422, 1e-05
      %v4439 = vadd.f32 %v4423, 1e-05
      %v4440 = vadd.f32 %v4424, 1e-05
      %v4441 = vadd.f32 %v4425, 1e-05
      %v4442 = vadd.f32 %v4426, 1e-05
      %v4443 = vadd.f32 %v4427, 1e-05
      %v4444 = vrsqrt.pop %v4428
      %v4445 = vmul.f32 %v4444, %v4428
      %v4446 = vmul.f32 %v4445, %v4444
      %v4447 = vmul.f32 0.5, %v4446
      %v4448 = vsub.f32 1.5, %v4447
      %v4449 = vmul.f32 %v4444, %v4448
      %vm4450 = vweird.f32 %v4428
      %vm4451 = vweird.f32 %v4444
      %vm4452 = vmor %vm4450, %vm4451
      %v4453 = vsel %vm4452, %v4444, %v4449
      %v4454 = vrsqrt.pop %v4429
      %v4455 = vmul.f32 %v4454, %v4429
      %v4456 = vmul.f32 %v4455, %v4454
      %v4457 = vmul.f32 0.5, %v4456
      %v4458 = vsub.f32 1.5, %v4457
      %v4459 = vmul.f32 %v4454, %v4458
      %vm4460 = vweird.f32 %v4429
      %vm4461 = vweird.f32 %v4454
      %vm4462 = vmor %vm4460, %vm4461
      %v4463 = vsel %vm4462, %v4454, %v4459
      %v4464 = vrsqrt.pop %v4430
      %v4465 = vmul.f32 %v4464, %v4430
      %v4466 = vmul.f32 %v4465, %v4464
      %v4467 = vmul.f32 0.5, %v4466
      %v4468 = vsub.f32 1.5, %v4467
      %v4469 = vmul.f32 %v4464, %v4468
      %vm4470 = vweird.f32 %v4430
      %vm4471 = vweird.f32 %v4464
      %vm4472 = vmor %vm4470, %vm4471
      %v4473 = vsel %vm4472, %v4464, %v4469
      %v4474 = vrsqrt.pop %v4431
      %v4475 = vmul.f32 %v4474, %v4431
      %v4476 = vmul.f32 %v4475, %v4474
      %v4477 = vmul.f32 0.5, %v4476
      %v4478 = vsub.f32 1.5, %v4477
      %v4479 = vmul.f32 %v4474, %v4478
      %vm4480 = vweird.f32 %v4431
      %vm4481 = vweird.f32 %v4474
      %vm4482 = vmor %vm4480, %vm4481
      %v4483 = vsel %vm4482, %v4474, %v4479
      %v4484 = vrsqrt.pop %v4432
      %v4485 = vmul.f32 %v4484, %v4432
      %v4486 = vmul.f32 %v4485, %v4484
      %v4487 = vmul.f32 0.5, %v4486
      %v4488 = vsub.f32 1.5, %v4487
      %v4489 = vmul.f32 %v4484, %v4488
      %vm4490 = vweird.f32 %v4432
      %vm4491 = vweird.f32 %v4484
      %vm4492 = vmor %vm4490, %vm4491
      %v4493 = vsel %vm4492, %v4484, %v4489
      %v4494 = vrsqrt.pop %v4433
      %v4495 = vmul.f32 %v4494, %v4433
      %v4496 = vmul.f32 %v4495, %v4494
      %v4497 = vmul.f32 0.5, %v4496
      %v4498 = vsub.f32 1.5, %v4497
      %v4499 = vmul.f32 %v4494, %v4498
      %vm4500 = vweird.f32 %v4433
      %vm4501 = vweird.f32 %v4494
      %vm4502 = vmor %vm4500, %vm4501
      %v4503 = vsel %vm4502, %v4494, %v4499
      %v4504 = vrsqrt.pop %v4434
      %v4505 = vmul.f32 %v4504, %v4434
      %v4506 = vmul.f32 %v4505, %v4504
      %v4507 = vmul.f32 0.5, %v4506
      %v4508 = vsub.f32 1.5, %v4507
      %v4509 = vmul.f32 %v4504, %v4508
      %vm4510 = vweird.f32 %v4434
      %vm4511 = vweird.f32 %v4504
      %vm4512 = vmor %vm4510, %vm4511
      %v4513 = vsel %vm4512, %v4504, %v4509
      %v4514 = vrsqrt.pop %v4435
      %v4515 = vmul.f32 %v4514, %v4435
      %v4516 = vmul.f32 %v4515, %v4514
      %v4517 = vmul.f32 0.5, %v4516
      %v4518 = vsub.f32 1.5, %v4517
      %v4519 = vmul.f32 %v4514, %v4518
      %vm4520 = vweird.f32 %v4435
      %vm4521 = vweird.f32 %v4514
      %vm4522 = vmor %vm4520, %vm4521
      %v4523 = vsel %vm4522, %v4514, %v4519
      %v4524 = vrsqrt.pop %v4436
      %v4525 = vmul.f32 %v4524, %v4436
      %v4526 = vmul.f32 %v4525, %v4524
      %v4527 = vmul.f32 0.5, %v4526
      %v4528 = vsub.f32 1.5, %v4527
      %v4529 = vmul.f32 %v4524, %v4528
      %vm4530 = vweird.f32 %v4436
      %vm4531 = vweird.f32 %v4524
      %vm4532 = vmor %vm4530, %vm4531
      %v4533 = vsel %vm4532, %v4524, %v4529
      %v4534 = vrsqrt.pop %v4437
      %v4535 = vmul.f32 %v4534, %v4437
      %v4536 = vmul.f32 %v4535, %v4534
      %v4537 = vmul.f32 0.5, %v4536
      %v4538 = vsub.f32 1.5, %v4537
      %v4539 = vmul.f32 %v4534, %v4538
      %vm4540 = vweird.f32 %v4437
      %vm4541 = vweird.f32 %v4534
      %vm4542 = vmor %vm4540, %vm4541
      %v4543 = vsel %vm4542, %v4534, %v4539
      %v4544 = vrsqrt.pop %v4438
      %v4545 = vmul.f32 %v4544, %v4438
      %v4546 = vmul.f32 %v4545, %v4544
      %v4547 = vmul.f32 0.5, %v4546
      %v4548 = vsub.f32 1.5, %v4547
      %v4549 = vmul.f32 %v4544, %v4548
      %vm4550 = vweird.f32 %v4438
      %vm4551 = vweird.f32 %v4544
      %vm4552 = vmor %vm4550, %vm4551
      %v4553 = vsel %vm4552, %v4544, %v4549
      %v4554 = vrsqrt.pop %v4439
      %v4555 = vmul.f32 %v4554, %v4439
      %v4556 = vmul.f32 %v4555, %v4554
      %v4557 = vmul.f32 0.5, %v4556
      %v4558 = vsub.f32 1.5, %v4557
      %v4559 = vmul.f32 %v4554, %v4558
      %vm4560 = vweird.f32 %v4439
      %vm4561 = vweird.f32 %v4554
      %vm4562 = vmor %vm4560, %vm4561
      %v4563 = vsel %vm4562, %v4554, %v4559
      %v4564 = vrsqrt.pop %v4440
      %v4565 = vmul.f32 %v4564, %v4440
      %v4566 = vmul.f32 %v4565, %v4564
      %v4567 = vmul.f32 0.5, %v4566
      %v4568 = vsub.f32 1.5, %v4567
      %v4569 = vmul.f32 %v4564, %v4568
      %vm4570 = vweird.f32 %v4440
      %vm4571 = vweird.f32 %v4564
      %vm4572 = vmor %vm4570, %vm4571
      %v4573 = vsel %vm4572, %v4564, %v4569
      %v4574 = vrsqrt.pop %v4441
      %v4575 = vmul.f32 %v4574, %v4441
      %v4576 = vmul.f32 %v4575, %v4574
      %v4577 = vmul.f32 0.5, %v4576
      %v4578 = vsub.f32 1.5, %v4577
      %v4579 = vmul.f32 %v4574, %v4578
      %vm4580 = vweird.f32 %v4441
      %vm4581 = vweird.f32 %v4574
      %vm4582 = vmor %vm4580, %vm4581
      %v4583 = vsel %vm4582, %v4574, %v4579
      %v4584 = vrsqrt.pop %v4442
      %v4585 = vmul.f32 %v4584, %v4442
      %v4586 = vmul.f32 %v4585, %v4584
      %v4587 = vmul.f32 0.5, %v4586
      %v4588 = vsub.f32 1.5, %v4587
      %v4589 = vmul.f32 %v4584, %v4588
      %vm4590 = vweird.f32 %v4442
      %vm4591 = vweird.f32 %v4584
      %vm4592 = vmor %vm4590, %vm4591
      %v4593 = vsel %vm4592, %v4584, %v4589
      %v4594 = vrsqrt.pop %v4443
      %v4595 = vmul.f32 %v4594, %v4443
      %v4596 = vmul.f32 %v4595, %v4594
      %v4597 = vmul.f32 0.5, %v4596
      %v4598 = vsub.f32 1.5, %v4597
      %v4599 = vmul.f32 %v4594, %v4598
      %vm4600 = vweird.f32 %v4443
      %vm4601 = vweird.f32 %v4594
      %vm4602 = vmor %vm4600, %vm4601
      %v4603 = vsel %vm4602, %v4594, %v4599
      %v4604 = vmul.f32 %v4332, %v4453
      %v4605 = vmul.f32 %v4333, %v4463
      %v4606 = vmul.f32 %v4334, %v4473
      %v4607 = vmul.f32 %v4335, %v4483
      %v4608 = vmul.f32 %v4336, %v4493
      %v4609 = vmul.f32 %v4337, %v4503
      %v4610 = vmul.f32 %v4338, %v4513
      %v4611 = vmul.f32 %v4339, %v4523
      %v4612 = vmul.f32 %v4340, %v4533
      %v4613 = vmul.f32 %v4341, %v4543
      %v4614 = vmul.f32 %v4342, %v4553
      %v4615 = vmul.f32 %v4343, %v4563
      %v4616 = vmul.f32 %v4344, %v4573
      %v4617 = vmul.f32 %v4345, %v4583
      %v4618 = vmul.f32 %v4346, %v4593
      %v4619 = vmul.f32 %v4347, %v4603
      %v4620 = vperm.slane %v1007, 2
      %v4621 = vmul.f32 %v4604, %v4620
      %v4622 = vmul.f32 %v4605, %v4620
      %v4623 = vmul.f32 %v4606, %v4620
      %v4624 = vmul.f32 %v4607, %v4620
      %v4625 = vmul.f32 %v4608, %v4620
      %v4626 = vmul.f32 %v4609, %v4620
      %v4627 = vmul.f32 %v4610, %v4620
      %v4628 = vmul.f32 %v4611, %v4620
      %v4629 = vmul.f32 %v4612, %v4620
      %v4630 = vmul.f32 %v4613, %v4620
      %v4631 = vmul.f32 %v4614, %v4620
      %v4632 = vmul.f32 %v4615, %v4620
      %v4633 = vmul.f32 %v4616, %v4620
      %v4634 = vmul.f32 %v4617, %v4620
      %v4635 = vmul.f32 %v4618, %v4620
      %v4636 = vmul.f32 %v4619, %v4620
      %v4637 = vperm.slane %v1007, 3
      %v4638 = vadd.f32 %v4621, %v4637
      %v4639 = vadd.f32 %v4622, %v4637
      %v4640 = vadd.f32 %v4623, %v4637
      %v4641 = vadd.f32 %v4624, %v4637
      %v4642 = vadd.f32 %v4625, %v4637
      %v4643 = vadd.f32 %v4626, %v4637
      %v4644 = vadd.f32 %v4627, %v4637
      %v4645 = vadd.f32 %v4628, %v4637
      %v4646 = vadd.f32 %v4629, %v4637
      %v4647 = vadd.f32 %v4630, %v4637
      %v4648 = vadd.f32 %v4631, %v4637
      %v4649 = vadd.f32 %v4632, %v4637
      %v4650 = vadd.f32 %v4633, %v4637
      %v4651 = vadd.f32 %v4634, %v4637
      %v4652 = vadd.f32 %v4635, %v4637
      %v4653 = vadd.f32 %v4636, %v4637
      %v4654 = vld [vmem:[%s3 + $0x8] sm:$0xff]
      %v4655 = vld [vmem:[%s3 + $0x20] sm:$0xff]
      %v4656 = vld [vmem:[%s3 + $0x38] sm:$0xff]
      %v4657 = vld [vmem:[%s3 + $0x50] sm:$0xff]
      %v4658 = vperm.slane %v1007, 6
      %v4660 = vsel %vm1014, %v4638, 0
      %v4663 = vsel %vm1014, %v4639, 0
      %v4666 = vsel %vm1014, %v4640, 0
      %v4669 = vsel %vm1014, %v4641, 0
      %v4672 = vsel %vm1014, %v4642, 0
      %v4675 = vsel %vm1014, %v4643, 0
      %v4678 = vsel %vm1014, %v4644, 0
      %v4681 = vsel %vm1014, %v4645, 0
      %v4684 = vsel %vm1014, %v4646, 0
      %v4687 = vsel %vm1014, %v4647, 0
      %v4690 = vsel %vm1014, %v4648, 0
      %v4693 = vsel %vm1014, %v4649, 0
      %v4696 = vsel %vm1014, %v4650, 0
      %v4699 = vsel %vm1014, %v4651, 0
      %v4702 = vsel %vm1014, %v4652, 0
      %v4705 = vsel %vm1014, %v4653, 0
      %4707 = vmatpush.msra.mxu0 0.0
      %4708 = vmatpush.msra.mxu0 0.0
      %4709 = vmatpush.msra.mxu0 0.0
      %4710 = vmatpush.msra.mxu0 0.0
      %4711 = vmatpush.msra.mxu0 0.0
      %4712 = vmatpush.msra.mxu0 0.0
      %4713 = vmatpush.msra.mxu0 0.0
      %4714 = vmatpush.msra.mxu0 0.0
      %4715 = vmatpush.msra.mxu0 0.0
      %4716 = vmatpush.msra.mxu0 0.0
      %4717 = vmatpush.msra.mxu0 0.0
      %4718 = vmatpush.msra.mxu0 0.0
      %4719 = vmatpush.msra.mxu0 %v4657
      %4720 = vmatpush.msra.mxu0 %v4656
      %4721 = vmatpush.msra.mxu0 %v4655
      %4722 = vmatpush.msra.mxu0 %v4654
      %4723 = vmatmul.f32.gmra.mxu0 %v4660
      %v4724 = vpop.f32.mrf.mxu0
      %v4725 = vadd.f32 %v4658, %v4724
      %4726 = vmatmul.f32.gmra.mxu0 %v4663
      %v4727 = vpop.f32.mrf.mxu0
      %v4728 = vadd.f32 %v4658, %v4727
      %4729 = vmatmul.f32.gmra.mxu0 %v4666
      %v4730 = vpop.f32.mrf.mxu0
      %v4731 = vadd.f32 %v4658, %v4730
      %4732 = vmatmul.f32.gmra.mxu0 %v4669
      %v4733 = vpop.f32.mrf.mxu0
      %v4734 = vadd.f32 %v4658, %v4733
      %4735 = vmatmul.f32.gmra.mxu0 %v4672
      %v4736 = vpop.f32.mrf.mxu0
      %v4737 = vadd.f32 %v4658, %v4736
      %4738 = vmatmul.f32.gmra.mxu0 %v4675
      %v4739 = vpop.f32.mrf.mxu0
      %v4740 = vadd.f32 %v4658, %v4739
      %4741 = vmatmul.f32.gmra.mxu0 %v4678
      %v4742 = vpop.f32.mrf.mxu0
      %v4743 = vadd.f32 %v4658, %v4742
      %4744 = vmatmul.f32.gmra.mxu0 %v4681
      %v4745 = vpop.f32.mrf.mxu0
      %v4746 = vadd.f32 %v4658, %v4745
      %4747 = vmatmul.f32.gmra.mxu0 %v4684
      %v4748 = vpop.f32.mrf.mxu0
      %v4749 = vadd.f32 %v4658, %v4748
      %4750 = vmatmul.f32.gmra.mxu0 %v4687
      %v4751 = vpop.f32.mrf.mxu0
      %v4752 = vadd.f32 %v4658, %v4751
      %4753 = vmatmul.f32.gmra.mxu0 %v4690
      %v4754 = vpop.f32.mrf.mxu0
      %v4755 = vadd.f32 %v4658, %v4754
      %4756 = vmatmul.f32.gmra.mxu0 %v4693
      %v4757 = vpop.f32.mrf.mxu0
      %v4758 = vadd.f32 %v4658, %v4757
      %4759 = vmatmul.f32.gmra.mxu0 %v4696
      %v4760 = vpop.f32.mrf.mxu0
      %v4761 = vadd.f32 %v4658, %v4760
      %4762 = vmatmul.f32.gmra.mxu0 %v4699
      %v4763 = vpop.f32.mrf.mxu0
      %v4764 = vadd.f32 %v4658, %v4763
      %4765 = vmatmul.f32.gmra.mxu0 %v4702
      %v4766 = vpop.f32.mrf.mxu0
      %v4767 = vadd.f32 %v4658, %v4766
      %4768 = vmatmul.f32.gmra.mxu0 %v4705
      %v4769 = vpop.f32.mrf.mxu0
      %v4770 = vadd.f32 %v4658, %v4769
      %4771 = vdwg.mxu0
      %v4772 = vmax.f32 %v4725, 0.0
      %v4773 = vmax.f32 %v4728, 0.0
      %v4774 = vmax.f32 %v4731, 0.0
      %v4775 = vmax.f32 %v4734, 0.0
      %v4776 = vmax.f32 %v4737, 0.0
      %v4777 = vmax.f32 %v4740, 0.0
      %v4778 = vmax.f32 %v4743, 0.0
      %v4779 = vmax.f32 %v4746, 0.0
      %v4780 = vmax.f32 %v4749, 0.0
      %v4781 = vmax.f32 %v4752, 0.0
      %v4782 = vmax.f32 %v4755, 0.0
      %v4783 = vmax.f32 %v4758, 0.0
      %v4784 = vmax.f32 %v4761, 0.0
      %v4785 = vmax.f32 %v4764, 0.0
      %v4786 = vmax.f32 %v4767, 0.0
      %v4787 = vmax.f32 %v4770, 0.0
      %v4788 = vld [vmem:[%s4] sm:$0xff]
      %v4789 = vld [vmem:[%s4 + $0x8] sm:$0xff]
      %v4790 = vld [vmem:[%s4 + $0x10] sm:$0xff]
      %v4791 = vld [vmem:[%s4 + $0x18] sm:$0xff]
      %v4792 = vld [vmem:[%s4 + $0x20] sm:$0xff]
      %v4793 = vld [vmem:[%s4 + $0x28] sm:$0xff]
      %v4794 = vld [vmem:[%s4 + $0x30] sm:$0xff]
      %v4795 = vld [vmem:[%s4 + $0x38] sm:$0xff]
      %v4796 = vld [vmem:[%s4 + $0x40] sm:$0xff]
      %v4797 = vld [vmem:[%s4 + $0x48] sm:$0xff]
      %v4798 = vperm.slane %v1007, 7
      %vm4799 = vcmask 654336
      %v4801 = vsel %vm4799, %v4772, 0
      %v4804 = vsel %vm4799, %v4773, 0
      %v4807 = vsel %vm4799, %v4774, 0
      %v4810 = vsel %vm4799, %v4775, 0
      %v4813 = vsel %vm4799, %v4776, 0
      %v4816 = vsel %vm4799, %v4777, 0
      %v4819 = vsel %vm4799, %v4778, 0
      %v4822 = vsel %vm4799, %v4779, 0
      %v4825 = vsel %vm4799, %v4780, 0
      %v4828 = vsel %vm4799, %v4781, 0
      %v4831 = vsel %vm4799, %v4782, 0
      %v4834 = vsel %vm4799, %v4783, 0
      %v4837 = vsel %vm4799, %v4784, 0
      %v4840 = vsel %vm4799, %v4785, 0
      %v4843 = vsel %vm4799, %v4786, 0
      %v4846 = vsel %vm4799, %v4787, 0
      %4848 = vmatpush.msra.mxu0 0.0
      %4849 = vmatpush.msra.mxu0 0.0
      %4850 = vmatpush.msra.mxu0 0.0
      %4851 = vmatpush.msra.mxu0 0.0
      %4852 = vmatpush.msra.mxu0 0.0
      %4853 = vmatpush.msra.mxu0 0.0
      %4854 = vmatpush.msra.mxu0 %v4797
      %4855 = vmatpush.msra.mxu0 %v4796
      %4856 = vmatpush.msra.mxu0 %v4795
      %4857 = vmatpush.msra.mxu0 %v4794
      %4858 = vmatpush.msra.mxu0 %v4793
      %4859 = vmatpush.msra.mxu0 %v4792
      %4860 = vmatpush.msra.mxu0 %v4791
      %4861 = vmatpush.msra.mxu0 %v4790
      %4862 = vmatpush.msra.mxu0 %v4789
      %4863 = vmatpush.msra.mxu0 %v4788
      %4864 = vmatmul.f32.gmra.mxu0 %v4801
      %v4865 = vpop.f32.mrf.mxu0
      %v4866 = vadd.f32 %v4798, %v4865
      %4867 = vmatmul.f32.gmra.mxu0 %v4804
      %v4868 = vpop.f32.mrf.mxu0
      %v4869 = vadd.f32 %v4798, %v4868
      %4870 = vmatmul.f32.gmra.mxu0 %v4807
      %v4871 = vpop.f32.mrf.mxu0
      %v4872 = vadd.f32 %v4798, %v4871
      %4873 = vmatmul.f32.gmra.mxu0 %v4810
      %v4874 = vpop.f32.mrf.mxu0
      %v4875 = vadd.f32 %v4798, %v4874
      %4876 = vmatmul.f32.gmra.mxu0 %v4813
      %v4877 = vpop.f32.mrf.mxu0
      %v4878 = vadd.f32 %v4798, %v4877
      %4879 = vmatmul.f32.gmra.mxu0 %v4816
      %v4880 = vpop.f32.mrf.mxu0
      %v4881 = vadd.f32 %v4798, %v4880
      %4882 = vmatmul.f32.gmra.mxu0 %v4819
      %v4883 = vpop.f32.mrf.mxu0
      %v4884 = vadd.f32 %v4798, %v4883
      %4885 = vmatmul.f32.gmra.mxu0 %v4822
      %v4886 = vpop.f32.mrf.mxu0
      %v4887 = vadd.f32 %v4798, %v4886
      %4888 = vmatmul.f32.gmra.mxu0 %v4825
      %v4889 = vpop.f32.mrf.mxu0
      %v4890 = vadd.f32 %v4798, %v4889
      %4891 = vmatmul.f32.gmra.mxu0 %v4828
      %v4892 = vpop.f32.mrf.mxu0
      %v4893 = vadd.f32 %v4798, %v4892
      %4894 = vmatmul.f32.gmra.mxu0 %v4831
      %v4895 = vpop.f32.mrf.mxu0
      %v4896 = vadd.f32 %v4798, %v4895
      %4897 = vmatmul.f32.gmra.mxu0 %v4834
      %v4898 = vpop.f32.mrf.mxu0
      %v4899 = vadd.f32 %v4798, %v4898
      %4900 = vmatmul.f32.gmra.mxu0 %v4837
      %v4901 = vpop.f32.mrf.mxu0
      %v4902 = vadd.f32 %v4798, %v4901
      %4903 = vmatmul.f32.gmra.mxu0 %v4840
      %v4904 = vpop.f32.mrf.mxu0
      %v4905 = vadd.f32 %v4798, %v4904
      %4906 = vmatmul.f32.gmra.mxu0 %v4843
      %v4907 = vpop.f32.mrf.mxu0
      %v4908 = vadd.f32 %v4798, %v4907
      %4909 = vmatmul.f32.gmra.mxu0 %v4846
      %v4910 = vpop.f32.mrf.mxu0
      %v4911 = vadd.f32 %v4798, %v4910
      %4912 = vdwg.mxu0
      %v4913 = vadd.f32 %v4638, %v4866
      %v4914 = vadd.f32 %v4639, %v4869
      %v4915 = vadd.f32 %v4640, %v4872
      %v4916 = vadd.f32 %v4641, %v4875
      %v4917 = vadd.f32 %v4642, %v4878
      %v4918 = vadd.f32 %v4643, %v4881
      %v4919 = vadd.f32 %v4644, %v4884
      %v4920 = vadd.f32 %v4645, %v4887
      %v4921 = vadd.f32 %v4646, %v4890
      %v4922 = vadd.f32 %v4647, %v4893
      %v4923 = vadd.f32 %v4648, %v4896
      %v4924 = vadd.f32 %v4649, %v4899
      %v4925 = vadd.f32 %v4650, %v4902
      %v4926 = vadd.f32 %v4651, %v4905
      %v4927 = vadd.f32 %v4652, %v4908
      %v4928 = vadd.f32 %v4653, %v4911
      %v4929 = vsel %vm1014, %v4913, 0.0
      %4930 = vadd.xlane.f32.xlu0 %v4929
      %v4931 = vpop.xlane.xlu0 %4930
      %v4932 = vsel %vm1014, %v4914, 0.0
      %4933 = vadd.xlane.f32.xlu0 %v4932
      %v4934 = vpop.xlane.xlu0 %4933
      %v4935 = vsel %vm1014, %v4915, 0.0
      %4936 = vadd.xlane.f32.xlu0 %v4935
      %v4937 = vpop.xlane.xlu0 %4936
      %v4938 = vsel %vm1014, %v4916, 0.0
      %4939 = vadd.xlane.f32.xlu0 %v4938
      %v4940 = vpop.xlane.xlu0 %4939
      %v4941 = vsel %vm1014, %v4917, 0.0
      %4942 = vadd.xlane.f32.xlu0 %v4941
      %v4943 = vpop.xlane.xlu0 %4942
      %v4944 = vsel %vm1014, %v4918, 0.0
      %4945 = vadd.xlane.f32.xlu0 %v4944
      %v4946 = vpop.xlane.xlu0 %4945
      %v4947 = vsel %vm1014, %v4919, 0.0
      %4948 = vadd.xlane.f32.xlu0 %v4947
      %v4949 = vpop.xlane.xlu0 %4948
      %v4950 = vsel %vm1014, %v4920, 0.0
      %4951 = vadd.xlane.f32.xlu0 %v4950
      %v4952 = vpop.xlane.xlu0 %4951
      %v4953 = vsel %vm1014, %v4921, 0.0
      %4954 = vadd.xlane.f32.xlu0 %v4953
      %v4955 = vpop.xlane.xlu0 %4954
      %v4956 = vsel %vm1014, %v4922, 0.0
      %4957 = vadd.xlane.f32.xlu0 %v4956
      %v4958 = vpop.xlane.xlu0 %4957
      %v4959 = vsel %vm1014, %v4923, 0.0
      %4960 = vadd.xlane.f32.xlu0 %v4959
      %v4961 = vpop.xlane.xlu0 %4960
      %v4962 = vsel %vm1014, %v4924, 0.0
      %4963 = vadd.xlane.f32.xlu0 %v4962
      %v4964 = vpop.xlane.xlu0 %4963
      %v4965 = vsel %vm1014, %v4925, 0.0
      %4966 = vadd.xlane.f32.xlu0 %v4965
      %v4967 = vpop.xlane.xlu0 %4966
      %v4968 = vsel %vm1014, %v4926, 0.0
      %4969 = vadd.xlane.f32.xlu0 %v4968
      %v4970 = vpop.xlane.xlu0 %4969
      %v4971 = vsel %vm1014, %v4927, 0.0
      %4972 = vadd.xlane.f32.xlu0 %v4971
      %v4973 = vpop.xlane.xlu0 %4972
      %v4974 = vsel %vm1014, %v4928, 0.0
      %4975 = vadd.xlane.f32.xlu0 %v4974
      %v4976 = vpop.xlane.xlu0 %4975
      %v4977 = vmul.f32 %v4931, %v4315
      %v4978 = vmul.f32 %v4934, %v4315
      %v4979 = vmul.f32 %v4937, %v4315
      %v4980 = vmul.f32 %v4940, %v4315
      %v4981 = vmul.f32 %v4943, %v4315
      %v4982 = vmul.f32 %v4946, %v4315
      %v4983 = vmul.f32 %v4949, %v4315
      %v4984 = vmul.f32 %v4952, %v4315
      %v4985 = vmul.f32 %v4955, %v4315
      %v4986 = vmul.f32 %v4958, %v4315
      %v4987 = vmul.f32 %v4961, %v4315
      %v4988 = vmul.f32 %v4964, %v4315
      %v4989 = vmul.f32 %v4967, %v4315
      %v4990 = vmul.f32 %v4970, %v4315
      %v4991 = vmul.f32 %v4973, %v4315
      %v4992 = vmul.f32 %v4976, %v4315
      %v4993 = vsub.f32 %v4913, %v4977
      %v4994 = vsub.f32 %v4914, %v4978
      %v4995 = vsub.f32 %v4915, %v4979
      %v4996 = vsub.f32 %v4916, %v4980
      %v4997 = vsub.f32 %v4917, %v4981
      %v4998 = vsub.f32 %v4918, %v4982
      %v4999 = vsub.f32 %v4919, %v4983
      %v5000 = vsub.f32 %v4920, %v4984
      %v5001 = vsub.f32 %v4921, %v4985
      %v5002 = vsub.f32 %v4922, %v4986
      %v5003 = vsub.f32 %v4923, %v4987
      %v5004 = vsub.f32 %v4924, %v4988
      %v5005 = vsub.f32 %v4925, %v4989
      %v5006 = vsub.f32 %v4926, %v4990
      %v5007 = vsub.f32 %v4927, %v4991
      %v5008 = vsub.f32 %v4928, %v4992
      %v5009 = vmul.f32 %v4993, %v4993
      %v5010 = vmul.f32 %v4994, %v4994
      %v5011 = vmul.f32 %v4995, %v4995
      %v5012 = vmul.f32 %v4996, %v4996
      %v5013 = vmul.f32 %v4997, %v4997
      %v5014 = vmul.f32 %v4998, %v4998
      %v5015 = vmul.f32 %v4999, %v4999
      %v5016 = vmul.f32 %v5000, %v5000
      %v5017 = vmul.f32 %v5001, %v5001
      %v5018 = vmul.f32 %v5002, %v5002
      %v5019 = vmul.f32 %v5003, %v5003
      %v5020 = vmul.f32 %v5004, %v5004
      %v5021 = vmul.f32 %v5005, %v5005
      %v5022 = vmul.f32 %v5006, %v5006
      %v5023 = vmul.f32 %v5007, %v5007
      %v5024 = vmul.f32 %v5008, %v5008
      %v5025 = vsel %vm1014, %v5009, 0.0
      %5026 = vadd.xlane.f32.xlu0 %v5025
      %v5027 = vpop.xlane.xlu0 %5026
      %v5028 = vsel %vm1014, %v5010, 0.0
      %5029 = vadd.xlane.f32.xlu0 %v5028
      %v5030 = vpop.xlane.xlu0 %5029
      %v5031 = vsel %vm1014, %v5011, 0.0
      %5032 = vadd.xlane.f32.xlu0 %v5031
      %v5033 = vpop.xlane.xlu0 %5032
      %v5034 = vsel %vm1014, %v5012, 0.0
      %5035 = vadd.xlane.f32.xlu0 %v5034
      %v5036 = vpop.xlane.xlu0 %5035
      %v5037 = vsel %vm1014, %v5013, 0.0
      %5038 = vadd.xlane.f32.xlu0 %v5037
      %v5039 = vpop.xlane.xlu0 %5038
      %v5040 = vsel %vm1014, %v5014, 0.0
      %5041 = vadd.xlane.f32.xlu0 %v5040
      %v5042 = vpop.xlane.xlu0 %5041
      %v5043 = vsel %vm1014, %v5015, 0.0
      %5044 = vadd.xlane.f32.xlu0 %v5043
      %v5045 = vpop.xlane.xlu0 %5044
      %v5046 = vsel %vm1014, %v5016, 0.0
      %5047 = vadd.xlane.f32.xlu0 %v5046
      %v5048 = vpop.xlane.xlu0 %5047
      %v5049 = vsel %vm1014, %v5017, 0.0
      %5050 = vadd.xlane.f32.xlu0 %v5049
      %v5051 = vpop.xlane.xlu0 %5050
      %v5052 = vsel %vm1014, %v5018, 0.0
      %5053 = vadd.xlane.f32.xlu0 %v5052
      %v5054 = vpop.xlane.xlu0 %5053
      %v5055 = vsel %vm1014, %v5019, 0.0
      %5056 = vadd.xlane.f32.xlu0 %v5055
      %v5057 = vpop.xlane.xlu0 %5056
      %v5058 = vsel %vm1014, %v5020, 0.0
      %5059 = vadd.xlane.f32.xlu0 %v5058
      %v5060 = vpop.xlane.xlu0 %5059
      %v5061 = vsel %vm1014, %v5021, 0.0
      %5062 = vadd.xlane.f32.xlu0 %v5061
      %v5063 = vpop.xlane.xlu0 %5062
      %v5064 = vsel %vm1014, %v5022, 0.0
      %5065 = vadd.xlane.f32.xlu0 %v5064
      %v5066 = vpop.xlane.xlu0 %5065
      %v5067 = vsel %vm1014, %v5023, 0.0
      %5068 = vadd.xlane.f32.xlu0 %v5067
      %v5069 = vpop.xlane.xlu0 %5068
      %v5070 = vsel %vm1014, %v5024, 0.0
      %5071 = vadd.xlane.f32.xlu0 %v5070
      %v5072 = vpop.xlane.xlu0 %5071
      %v5073 = vmul.f32 %v5027, %v4315
      %v5074 = vmul.f32 %v5030, %v4315
      %v5075 = vmul.f32 %v5033, %v4315
      %v5076 = vmul.f32 %v5036, %v4315
      %v5077 = vmul.f32 %v5039, %v4315
      %v5078 = vmul.f32 %v5042, %v4315
      %v5079 = vmul.f32 %v5045, %v4315
      %v5080 = vmul.f32 %v5048, %v4315
      %v5081 = vmul.f32 %v5051, %v4315
      %v5082 = vmul.f32 %v5054, %v4315
      %v5083 = vmul.f32 %v5057, %v4315
      %v5084 = vmul.f32 %v5060, %v4315
      %v5085 = vmul.f32 %v5063, %v4315
      %v5086 = vmul.f32 %v5066, %v4315
      %v5087 = vmul.f32 %v5069, %v4315
      %v5088 = vmul.f32 %v5072, %v4315
      %v5089 = vadd.f32 %v5073, 1e-05
      %v5090 = vadd.f32 %v5074, 1e-05
      %v5091 = vadd.f32 %v5075, 1e-05
      %v5092 = vadd.f32 %v5076, 1e-05
      %v5093 = vadd.f32 %v5077, 1e-05
      %v5094 = vadd.f32 %v5078, 1e-05
      %v5095 = vadd.f32 %v5079, 1e-05
      %v5096 = vadd.f32 %v5080, 1e-05
      %v5097 = vadd.f32 %v5081, 1e-05
      %v5098 = vadd.f32 %v5082, 1e-05
      %v5099 = vadd.f32 %v5083, 1e-05
      %v5100 = vadd.f32 %v5084, 1e-05
      %v5101 = vadd.f32 %v5085, 1e-05
      %v5102 = vadd.f32 %v5086, 1e-05
      %v5103 = vadd.f32 %v5087, 1e-05
      %v5104 = vadd.f32 %v5088, 1e-05
      %v5105 = vrsqrt.pop %v5089
      %v5106 = vmul.f32 %v5105, %v5089
      %v5107 = vmul.f32 %v5106, %v5105
      %v5108 = vmul.f32 0.5, %v5107
      %v5109 = vsub.f32 1.5, %v5108
      %v5110 = vmul.f32 %v5105, %v5109
      %vm5111 = vweird.f32 %v5089
      %vm5112 = vweird.f32 %v5105
      %vm5113 = vmor %vm5111, %vm5112
      %v5114 = vsel %vm5113, %v5105, %v5110
      %v5115 = vrsqrt.pop %v5090
      %v5116 = vmul.f32 %v5115, %v5090
      %v5117 = vmul.f32 %v5116, %v5115
      %v5118 = vmul.f32 0.5, %v5117
      %v5119 = vsub.f32 1.5, %v5118
      %v5120 = vmul.f32 %v5115, %v5119
      %vm5121 = vweird.f32 %v5090
      %vm5122 = vweird.f32 %v5115
      %vm5123 = vmor %vm5121, %vm5122
      %v5124 = vsel %vm5123, %v5115, %v5120
      %v5125 = vrsqrt.pop %v5091
      %v5126 = vmul.f32 %v5125, %v5091
      %v5127 = vmul.f32 %v5126, %v5125
      %v5128 = vmul.f32 0.5, %v5127
      %v5129 = vsub.f32 1.5, %v5128
      %v5130 = vmul.f32 %v5125, %v5129
      %vm5131 = vweird.f32 %v5091
      %vm5132 = vweird.f32 %v5125
      %vm5133 = vmor %vm5131, %vm5132
      %v5134 = vsel %vm5133, %v5125, %v5130
      %v5135 = vrsqrt.pop %v5092
      %v5136 = vmul.f32 %v5135, %v5092
      %v5137 = vmul.f32 %v5136, %v5135
      %v5138 = vmul.f32 0.5, %v5137
      %v5139 = vsub.f32 1.5, %v5138
      %v5140 = vmul.f32 %v5135, %v5139
      %vm5141 = vweird.f32 %v5092
      %vm5142 = vweird.f32 %v5135
      %vm5143 = vmor %vm5141, %vm5142
      %v5144 = vsel %vm5143, %v5135, %v5140
      %v5145 = vrsqrt.pop %v5093
      %v5146 = vmul.f32 %v5145, %v5093
      %v5147 = vmul.f32 %v5146, %v5145
      %v5148 = vmul.f32 0.5, %v5147
      %v5149 = vsub.f32 1.5, %v5148
      %v5150 = vmul.f32 %v5145, %v5149
      %vm5151 = vweird.f32 %v5093
      %vm5152 = vweird.f32 %v5145
      %vm5153 = vmor %vm5151, %vm5152
      %v5154 = vsel %vm5153, %v5145, %v5150
      %v5155 = vrsqrt.pop %v5094
      %v5156 = vmul.f32 %v5155, %v5094
      %v5157 = vmul.f32 %v5156, %v5155
      %v5158 = vmul.f32 0.5, %v5157
      %v5159 = vsub.f32 1.5, %v5158
      %v5160 = vmul.f32 %v5155, %v5159
      %vm5161 = vweird.f32 %v5094
      %vm5162 = vweird.f32 %v5155
      %vm5163 = vmor %vm5161, %vm5162
      %v5164 = vsel %vm5163, %v5155, %v5160
      %v5165 = vrsqrt.pop %v5095
      %v5166 = vmul.f32 %v5165, %v5095
      %v5167 = vmul.f32 %v5166, %v5165
      %v5168 = vmul.f32 0.5, %v5167
      %v5169 = vsub.f32 1.5, %v5168
      %v5170 = vmul.f32 %v5165, %v5169
      %vm5171 = vweird.f32 %v5095
      %vm5172 = vweird.f32 %v5165
      %vm5173 = vmor %vm5171, %vm5172
      %v5174 = vsel %vm5173, %v5165, %v5170
      %v5175 = vrsqrt.pop %v5096
      %v5176 = vmul.f32 %v5175, %v5096
      %v5177 = vmul.f32 %v5176, %v5175
      %v5178 = vmul.f32 0.5, %v5177
      %v5179 = vsub.f32 1.5, %v5178
      %v5180 = vmul.f32 %v5175, %v5179
      %vm5181 = vweird.f32 %v5096
      %vm5182 = vweird.f32 %v5175
      %vm5183 = vmor %vm5181, %vm5182
      %v5184 = vsel %vm5183, %v5175, %v5180
      %v5185 = vrsqrt.pop %v5097
      %v5186 = vmul.f32 %v5185, %v5097
      %v5187 = vmul.f32 %v5186, %v5185
      %v5188 = vmul.f32 0.5, %v5187
      %v5189 = vsub.f32 1.5, %v5188
      %v5190 = vmul.f32 %v5185, %v5189
      %vm5191 = vweird.f32 %v5097
      %vm5192 = vweird.f32 %v5185
      %vm5193 = vmor %vm5191, %vm5192
      %v5194 = vsel %vm5193, %v5185, %v5190
      %v5195 = vrsqrt.pop %v5098
      %v5196 = vmul.f32 %v5195, %v5098
      %v5197 = vmul.f32 %v5196, %v5195
      %v5198 = vmul.f32 0.5, %v5197
      %v5199 = vsub.f32 1.5, %v5198
      %v5200 = vmul.f32 %v5195, %v5199
      %vm5201 = vweird.f32 %v5098
      %vm5202 = vweird.f32 %v5195
      %vm5203 = vmor %vm5201, %vm5202
      %v5204 = vsel %vm5203, %v5195, %v5200
      %v5205 = vrsqrt.pop %v5099
      %v5206 = vmul.f32 %v5205, %v5099
      %v5207 = vmul.f32 %v5206, %v5205
      %v5208 = vmul.f32 0.5, %v5207
      %v5209 = vsub.f32 1.5, %v5208
      %v5210 = vmul.f32 %v5205, %v5209
      %vm5211 = vweird.f32 %v5099
      %vm5212 = vweird.f32 %v5205
      %vm5213 = vmor %vm5211, %vm5212
      %v5214 = vsel %vm5213, %v5205, %v5210
      %v5215 = vrsqrt.pop %v5100
      %v5216 = vmul.f32 %v5215, %v5100
      %v5217 = vmul.f32 %v5216, %v5215
      %v5218 = vmul.f32 0.5, %v5217
      %v5219 = vsub.f32 1.5, %v5218
      %v5220 = vmul.f32 %v5215, %v5219
      %vm5221 = vweird.f32 %v5100
      %vm5222 = vweird.f32 %v5215
      %vm5223 = vmor %vm5221, %vm5222
      %v5224 = vsel %vm5223, %v5215, %v5220
      %v5225 = vrsqrt.pop %v5101
      %v5226 = vmul.f32 %v5225, %v5101
      %v5227 = vmul.f32 %v5226, %v5225
      %v5228 = vmul.f32 0.5, %v5227
      %v5229 = vsub.f32 1.5, %v5228
      %v5230 = vmul.f32 %v5225, %v5229
      %vm5231 = vweird.f32 %v5101
      %vm5232 = vweird.f32 %v5225
      %vm5233 = vmor %vm5231, %vm5232
      %v5234 = vsel %vm5233, %v5225, %v5230
      %v5235 = vrsqrt.pop %v5102
      %v5236 = vmul.f32 %v5235, %v5102
      %v5237 = vmul.f32 %v5236, %v5235
      %v5238 = vmul.f32 0.5, %v5237
      %v5239 = vsub.f32 1.5, %v5238
      %v5240 = vmul.f32 %v5235, %v5239
      %vm5241 = vweird.f32 %v5102
      %vm5242 = vweird.f32 %v5235
      %vm5243 = vmor %vm5241, %vm5242
      %v5244 = vsel %vm5243, %v5235, %v5240
      %v5245 = vrsqrt.pop %v5103
      %v5246 = vmul.f32 %v5245, %v5103
      %v5247 = vmul.f32 %v5246, %v5245
      %v5248 = vmul.f32 0.5, %v5247
      %v5249 = vsub.f32 1.5, %v5248
      %v5250 = vmul.f32 %v5245, %v5249
      %vm5251 = vweird.f32 %v5103
      %vm5252 = vweird.f32 %v5245
      %vm5253 = vmor %vm5251, %vm5252
      %v5254 = vsel %vm5253, %v5245, %v5250
      %v5255 = vrsqrt.pop %v5104
      %v5256 = vmul.f32 %v5255, %v5104
      %v5257 = vmul.f32 %v5256, %v5255
      %v5258 = vmul.f32 0.5, %v5257
      %v5259 = vsub.f32 1.5, %v5258
      %v5260 = vmul.f32 %v5255, %v5259
      %vm5261 = vweird.f32 %v5104
      %vm5262 = vweird.f32 %v5255
      %vm5263 = vmor %vm5261, %vm5262
      %v5264 = vsel %vm5263, %v5255, %v5260
      %v5265 = vmul.f32 %v4993, %v5114
      %v5266 = vmul.f32 %v4994, %v5124
      %v5267 = vmul.f32 %v4995, %v5134
      %v5268 = vmul.f32 %v4996, %v5144
      %v5269 = vmul.f32 %v4997, %v5154
      %v5270 = vmul.f32 %v4998, %v5164
      %v5271 = vmul.f32 %v4999, %v5174
      %v5272 = vmul.f32 %v5000, %v5184
      %v5273 = vmul.f32 %v5001, %v5194
      %v5274 = vmul.f32 %v5002, %v5204
      %v5275 = vmul.f32 %v5003, %v5214
      %v5276 = vmul.f32 %v5004, %v5224
      %v5277 = vmul.f32 %v5005, %v5234
      %v5278 = vmul.f32 %v5006, %v5244
      %v5279 = vmul.f32 %v5007, %v5254
      %v5280 = vmul.f32 %v5008, %v5264
      %v5281 = vperm.slane %v1007, 4
      %v5282 = vmul.f32 %v5265, %v5281
      %v5283 = vmul.f32 %v5266, %v5281
      %v5284 = vmul.f32 %v5267, %v5281
      %v5285 = vmul.f32 %v5268, %v5281
      %v5286 = vmul.f32 %v5269, %v5281
      %v5287 = vmul.f32 %v5270, %v5281
      %v5288 = vmul.f32 %v5271, %v5281
      %v5289 = vmul.f32 %v5272, %v5281
      %v5290 = vmul.f32 %v5273, %v5281
      %v5291 = vmul.f32 %v5274, %v5281
      %v5292 = vmul.f32 %v5275, %v5281
      %v5293 = vmul.f32 %v5276, %v5281
      %v5294 = vmul.f32 %v5277, %v5281
      %v5295 = vmul.f32 %v5278, %v5281
      %v5296 = vmul.f32 %v5279, %v5281
      %v5297 = vmul.f32 %v5280, %v5281
      %v5298 = vperm.slane %v1007, 5
      %v5299 = vadd.f32 %v5282, %v5298
      %v5300 = vadd.f32 %v5283, %v5298
      %v5301 = vadd.f32 %v5284, %v5298
      %v5302 = vadd.f32 %v5285, %v5298
      %v5303 = vadd.f32 %v5286, %v5298
      %v5304 = vadd.f32 %v5287, %v5298
      %v5305 = vadd.f32 %v5288, %v5298
      %v5306 = vadd.f32 %v5289, %v5298
      %v5307 = vadd.f32 %v5290, %v5298
      %v5308 = vadd.f32 %v5291, %v5298
      %v5309 = vadd.f32 %v5292, %v5298
      %v5310 = vadd.f32 %v5293, %v5298
      %v5311 = vadd.f32 %v5294, %v5298
      %v5312 = vadd.f32 %v5295, %v5298
      %v5313 = vadd.f32 %v5296, %v5298
      %v5314 = vadd.f32 %v5297, %v5298
      %v5315 = vld [vmem:[%s279] sm:$0x1]
      %v5316 = vperm.slane %v5315, 0
      %vm5317 = vcmp.eq.s32.totalorder %v5316, %v301
      %v5318 = vsel %vm5317, 1, 0
      %v5319 = vcvt.s32.f32 %v5318
      %5320 = vadd.xlane.f32.xlu0 %v5319
      %v5321 = vpop.xlane.xlu0 %5320
      %v5322 = vmax.f32 %v5321, 1.0
      %5323 = vmatpush.msra.mxu0 %v5314
      %5324 = vmatpush.msra.mxu0 %v5313
      %5325 = vmatpush.msra.mxu0 %v5312
      %5326 = vmatpush.msra.mxu0 %v5311
      %5327 = vmatpush.msra.mxu0 %v5310
      %5328 = vmatpush.msra.mxu0 %v5309
      %5329 = vmatpush.msra.mxu0 %v5308
      %5330 = vmatpush.msra.mxu0 %v5307
      %5331 = vmatpush.msra.mxu0 %v5306
      %5332 = vmatpush.msra.mxu0 %v5305
      %5333 = vmatpush.msra.mxu0 %v5304
      %5334 = vmatpush.msra.mxu0 %v5303
      %5335 = vmatpush.msra.mxu0 %v5302
      %5336 = vmatpush.msra.mxu0 %v5301
      %5337 = vmatpush.msra.mxu0 %v5300
      %5338 = vmatpush.msra.mxu0 %v5299
      %5339 = vmatmul.f32.gmra.mxu0 %v5319
      %v5340 = vpop.f32.mrf.mxu0
      %v5341 = vadd.f32 0.0, %v5340
      %5342 = vdwg.mxu0
      %v5343 = vrcp.pop %v5322
      %v5344 = vmul.f32 %v5322, %v5343
      %v5345 = vsub.f32 1.0, %v5344
      %v5346 = vmul.f32 %v5343, %v5345
      %v5347 = vadd.f32 %v5343, %v5346
      %vm5348 = vweird.f32 %v5322
      %vm5349 = vweird.f32 %v5343
      %vm5350 = vmor %vm5348, %vm5349
      %v5351 = vsel %vm5350, %v5343, %v5347
      %v5352 = vand.u32 2147483647, %v5322
      %vm5353 = vcmp.eq.f32.partialorder %v5352, 8.507059e+37
      %v5354 = vand.u32 %v5322, 2147483648
      %v5355 = vor.u32 1.1754944e-38, %v5354
      %v5356 = vsel %vm5353, %v5355, %v5351
      %v5357 = vmul.f32 %v5341, %v5356
      %v5358 = vperm.slane %v1008, 0
      %5363 = vrot.lane.b32.xlu0 %v4654, 48
      %v5364 = vpop.permute.xlu0 %5363
      %5365 = vrot.lane.b32.xlu0 %v4655, 48
      %v5366 = vpop.permute.xlu0 %5365
      %5367 = vrot.lane.b32.xlu0 %v4656, 48
      %v5368 = vpop.permute.xlu0 %5367
      %5369 = vrot.lane.b32.xlu0 %v4657, 48
      %v5370 = vpop.permute.xlu0 %5369
      %v5376 = vsel %vm1014, %v5357, 0
      %5378 = vmatpush.msra.mxu0 0.0
      %5379 = vmatpush.msra.mxu0 0.0
      %5380 = vmatpush.msra.mxu0 0.0
      %5381 = vmatpush.msra.mxu0 0.0
      %5382 = vmatpush.msra.mxu0 0.0
      %5383 = vmatpush.msra.mxu0 0.0
      %5384 = vmatpush.msra.mxu0 0.0
      %5385 = vmatpush.msra.mxu0 0.0
      %5386 = vmatpush.msra.mxu0 0.0
      %5387 = vmatpush.msra.mxu0 0.0
      %5388 = vmatpush.msra.mxu0 0.0
      %5389 = vmatpush.msra.mxu0 0.0
      %5390 = vmatpush.msra.mxu0 %v5370
      %5391 = vmatpush.msra.mxu0 %v5368
      %5392 = vmatpush.msra.mxu0 %v5366
      %5393 = vmatpush.msra.mxu0 %v5364
      %5394 = vmatmul.f32.gmra.mxu0 %v5376
      %v5395 = vpop.f32.mrf.mxu0
      %v5396 = vadd.f32 %v5358, %v5395
      %5397 = vdwg.mxu0
      %v5398 = vmax.f32 %v5396, 0.0
      %v5399 = vld [vmem:[%s3 + $0x8] sm:$0xff]
      %v5400 = vld [vmem:[%s3 + $0x10] sm:$0xff]
      %v5401 = vld [vmem:[%s3 + $0x20] sm:$0xff]
      %v5402 = vld [vmem:[%s3 + $0x28] sm:$0xff]
      %v5403 = vld [vmem:[%s3 + $0x38] sm:$0xff]
      %v5404 = vld [vmem:[%s3 + $0x40] sm:$0xff]
      %v5405 = vld [vmem:[%s3 + $0x50] sm:$0xff]
      %v5406 = vld [vmem:[%s3 + $0x58] sm:$0xff]
      %v5407 = vperm.slane %v1008, 1
      %5416 = vrot.lane.b32.xlu0 %v5399, 16
      %v5417 = vpop.permute.xlu0 %5416
      %5418 = vrot.lane.b32.xlu0 %v5400, 16
      %v5419 = vpop.permute.xlu0 %5418
      %5420 = vrot.lane.b32.xlu0 %v5401, 16
      %v5421 = vpop.permute.xlu0 %5420
      %5422 = vrot.lane.b32.xlu0 %v5402, 16
      %v5423 = vpop.permute.xlu0 %5422
      %5424 = vrot.lane.b32.xlu0 %v5403, 16
      %v5425 = vpop.permute.xlu0 %5424
      %5426 = vrot.lane.b32.xlu0 %v5404, 16
      %v5427 = vpop.permute.xlu0 %5426
      %5428 = vrot.lane.b32.xlu0 %v5405, 16
      %v5429 = vpop.permute.xlu0 %5428
      %5430 = vrot.lane.b32.xlu0 %v5406, 16
      %v5431 = vpop.permute.xlu0 %5430
      %v5432 = vsel %vm4081, %v5417, %v5419
      %v5433 = vsel %vm4081, %v5421, %v5423
      %v5434 = vsel %vm4081, %v5425, %v5427
      %v5435 = vsel %vm4081, %v5429, %v5431
      %v5441 = vsel %vm1014, %v5398, 0
      %5443 = vmatpush.msra.mxu0 0.0
      %5444 = vmatpush.msra.mxu0 0.0
      %5445 = vmatpush.msra.mxu0 0.0
      %5446 = vmatpush.msra.mxu0 0.0
      %5447 = vmatpush.msra.mxu0 0.0
      %5448 = vmatpush.msra.mxu0 0.0
      %5449 = vmatpush.msra.mxu0 0.0
      %5450 = vmatpush.msra.mxu0 0.0
      %5451 = vmatpush.msra.mxu0 0.0
      %5452 = vmatpush.msra.mxu0 0.0
      %5453 = vmatpush.msra.mxu0 0.0
      %5454 = vmatpush.msra.mxu0 0.0
      %5455 = vmatpush.msra.mxu0 %v5435
      %5456 = vmatpush.msra.mxu0 %v5434
      %5457 = vmatpush.msra.mxu0 %v5433
      %5458 = vmatpush.msra.mxu0 %v5432
      %5459 = vmatmul.f32.gmra.mxu0 %v5441
      %v5460 = vpop.f32.mrf.mxu0
      %v5461 = vadd.f32 %v5407, %v5460
      %5462 = vdwg.mxu0
      %5463 = vst [vmem:[%s283] sm:$0xff] %v5461
      %p5464 = scmp.lt.s32.totalorder %s17, 1
      %s5465 = scalar_select %p5464, %s17, 1
      %s5466 = smul.addr %s5465, 8
      %s5467 = scalar_lea.vmem %s6, %s5466
      // Predicated region
      $region45: #{san_graph_head_forward.1} parent=43 // pred_check
        %p5468 = pneg %p176
      $region46: #{san_graph_head_forward.1} parent=43 // pred_check_branch
        %5470 = sbr.rel (%p5468) target = $region48
      $region47: #{san_graph_head_forward.1} parent=43 // pred_region
        _
      $region48: #{san_graph_head_forward.1} parent=43 // pred_fallthru
        _
    $region44: #{san_graph_head_forward.1} parent=5 // pred_fallthru
      _
    %p5471 = scmp.le.s32.totalorder 2, %s12
    // Predicated region
    $region49: #{san_graph_head_forward.1} parent=5 // pred_check
      %p5472 = pneg %p5471
    $region50: #{san_graph_head_forward.1} parent=5 // pred_check_branch
      %5474 = sbr.rel (%p5472) target = $region52
    $region51: #{san_graph_head_forward.1} parent=5 // pred_region
      %s5475 = ssub.s32 %s12, 2
      // Predicated region
      $region53: #{san_graph_head_forward.1} parent=51 // pred_check
        %p5476 = pneg %p182
      $region54: #{san_graph_head_forward.1} parent=51 // pred_check_branch
        %5478 = sbr.rel (%p5476) target = $region56
      $region55: #{san_graph_head_forward.1} parent=51 // pred_region
        %p5479 = scmp.lt.s32.totalorder %s18, 1
        %s5480 = scalar_select %p5479, %s18, 1
        %s5481 = smul.addr %s5480, 8
        %s5482 = scalar_lea.vmem %s6, %s5481
      $region56: #{san_graph_head_forward.1} parent=51 // pred_fallthru
        _
    $region52: #{san_graph_head_forward.1} parent=5 // pred_fallthru
      _
  $region6: #{san_graph_head_forward.1} parent=0 // loop_footer
    %s16 = sadd.s32 1, %s12
  $region7: #{san_graph_head_forward.1} parent=0 // loop_footer_branch
    %11 = sbr.rel target = $region3
  $region8: #{san_graph_head_forward.1} parent=0 // loop_exit
    _

</llo_original>
